<compile_context>
chip_gen: v7x
topology: tpu7x:2x2x1
jax: 0.10.0
libtpu: 0.0.40
codegen_flags: <defaults>
</compile_context>

<pallas_src>
import functools

import jax
import jax.numpy as jnp
from jax import lax
from jax.experimental import pallas as pl
from jax.experimental.pallas import tpu as pltpu

LN_EPS = 1e-5


def _round_up(x, m):
    return ((x + m - 1) // m) * m


def _vmem_limit_bytes():
    """Per-generation VMEM limit: ~3/4 of physical, capped at 112 MiB."""
    cap = 64 * 1024 * 1024
    try:
        info = pltpu.get_tpu_info()
        cap = int(getattr(info, "vmem_capacity_bytes", cap))
    except Exception:
        pass
    return max(32 * 1024 * 1024, min((cap * 3) // 4, 112 * 1024 * 1024))


def _pick_batch_tile(batch, seq_len, target_m=256):
    """Batch-tile so the flattened projection M fills the MXU, but keep >=2
    grid steps (v7x megacore) whenever the batch allows it."""
    divisors = [d for d in range(1, batch + 1) if batch % d == 0]
    candidates = [d for d in divisors if d * seq_len >= target_m]
    tile = candidates[0] if candidates else divisors[-1]
    if batch >= 2 and batch // tile < 2:
        for d in reversed(divisors):
            if batch // d >= 2:
                tile = d
                break
    return tile


# ---------------------------------------------------------------------------
# Fused DoubleAttention kernel (one grid step == B_TILE batch elements)
# ---------------------------------------------------------------------------
def _double_attention_kernel(
    c_ref, x_ref,
    wqkv1_ref, wqkv2_ref,
    gq1_ref, bq1_ref, gk1_ref, bk1_ref,
    gq2_ref, bq2_ref, gk2_ref, bk2_ref,
    wo1_ref, wo2_ref,
    c_out_ref, x_out_ref,
    *, num_heads, head_dim, b_tile, s1, s2,
):
    f32 = jnp.float32
    bf16 = jnp.bfloat16
    H, hd = num_heads, head_dim
    inner = H * hd
    s_tot = s1 + s2

    # ---- fused QKV projection: bf16 MXU operands, f32 accumulation, M filled
    # with all B_TILE batch elements -----------------------------------------
    c_tok = c_ref[...].reshape(b_tile * s1, c_ref.shape[-1])     # bf16
    x_tok = x_ref[...].reshape(b_tile * s2, x_ref.shape[-1])     # bf16
    qkv_c = jnp.dot(c_tok, wqkv1_ref[...], preferred_element_type=f32)
    qkv_x = jnp.dot(x_tok, wqkv2_ref[...], preferred_element_type=f32)

    # ---- query / key LayerNorm (f32 statistics, affine already holds scale) -
    def layer_norm(y, g, b):
        mean = jnp.mean(y, axis=-1, keepdims=True)
        var = jnp.mean(jnp.square(y - mean), axis=-1, keepdims=True)
        return (y - mean) * lax.rsqrt(var + LN_EPS) * g + b

    q_c = layer_norm(qkv_c[:, 0 * inner:1 * inner], gq1_ref[...], bq1_ref[...]).astype(bf16)
    k_c = layer_norm(qkv_c[:, 1 * inner:2 * inner], gk1_ref[...], bk1_ref[...]).astype(bf16)
    v_c = qkv_c[:, 2 * inner:].astype(bf16)
    q_x = layer_norm(qkv_x[:, 0 * inner:1 * inner], gq2_ref[...], bq2_ref[...]).astype(bf16)
    k_x = layer_norm(qkv_x[:, 1 * inner:2 * inner], gk2_ref[...], bk2_ref[...]).astype(bf16)
    v_x = qkv_x[:, 2 * inner:].astype(bf16)

    # ---- one up-front repack to heads-major (Z = H * B_TILE, S_total, hd) ---
    # Uses only static slices / reshapes / stacks / concats (robustly lowered),
    # amortized over all heads; the stream concat happens here too.
    def split_heads(t_c, t_x):
        parts = []
        for h in range(H):
            lo = h * hd
            hc = t_c[:, lo:lo + hd].reshape(b_tile, s1, hd)
            hx = t_x[:, lo:lo + hd].reshape(b_tile, s2, hd)
            parts.append(jnp.concatenate([hc, hx], axis=1))       # (Bt, S_tot, hd)
        return jnp.stack(parts, axis=0).reshape(H * b_tile, s_tot, hd)

    q = split_heads(q_c, q_x)
    k = split_heads(k_c, k_x)
    v = split_heads(v_c, v_x)

    # ---- attention, batched over (head, batch-tile) --------------------------
    # TODO(synk): flash-style online softmax with a KV tile loop for large S.
    scores = lax.dot_general(q, k, (((2,), (2,)), ((0,), (0,))),
                             preferred_element_type=f32)           # (Z, S, S)
    m = jnp.max(scores, axis=-1, keepdims=True)
    p = jnp.exp(scores - m)
    denom = jnp.sum(p, axis=-1, keepdims=True)
    o = lax.dot_general(p.astype(bf16), v, (((2,), (1,)), ((0,), (0,))),
                        preferred_element_type=f32)                # (Z, S, hd)
    o = (o * pl.reciprocal(denom, approx=True)).astype(bf16)

    # ---- back to token-major and a single full-K output matmul per stream ---
    o = o.reshape(H, b_tile, s_tot, hd)
    o_c = jnp.concatenate(
        [o[h, :, :s1, :].reshape(b_tile * s1, hd) for h in range(H)], axis=-1)
    o_x = jnp.concatenate(
        [o[h, :, s1:, :].reshape(b_tile * s2, hd) for h in range(H)], axis=-1)

    out_c = jnp.dot(o_c, wo1_ref[...], preferred_element_type=f32)  # (Bt*S1, dim_pad)
    out_x = jnp.dot(o_x, wo2_ref[...], preferred_element_type=f32)  # (Bt*S2, dim_pad)

    c_out_ref[...] = out_c.reshape(b_tile, s1, -1).astype(c_out_ref.dtype)
    x_out_ref[...] = out_x.reshape(b_tile, s2, -1).astype(x_out_ref.dtype)


# ---------------------------------------------------------------------------
# Parameters
# ---------------------------------------------------------------------------
def init_double_attention_params(key, dim, num_heads):
    head_dim = dim // num_heads
    inner_dim = head_dim * num_heads
    keys = jax.random.split(key, 8)

    def lin_w(k, fan_in, fan_out):
        # mimic nn.Linear default init; stored as (in, out) so y = x @ W
        bound = 1.0 / (fan_in ** 0.5)
        return jax.random.uniform(
            k, (fan_in, fan_out), jnp.float32, minval=-bound, maxval=bound)

    return {
        "num_heads": num_heads,
        "head_dim": head_dim,
        # first stream
        "wq": lin_w(keys[0], dim, inner_dim),
        "wk": lin_w(keys[1], dim, inner_dim),
        "wv": lin_w(keys[2], dim, inner_dim),
        "wo": lin_w(keys[3], inner_dim, dim),
        "gq": jnp.ones((1, inner_dim), jnp.float32),
        "bq": jnp.zeros((1, inner_dim), jnp.float32),
        "gk": jnp.ones((1, inner_dim), jnp.float32),
        "bk": jnp.zeros((1, inner_dim), jnp.float32),
        # second stream
        "wq2": lin_w(keys[4], dim, inner_dim),
        "wk2": lin_w(keys[5], dim, inner_dim),
        "wv2": lin_w(keys[6], dim, inner_dim),
        "wo2": lin_w(keys[7], inner_dim, dim),
        "gq2": jnp.ones((1, inner_dim), jnp.float32),
        "bq2": jnp.zeros((1, inner_dim), jnp.float32),
        "gk2": jnp.ones((1, inner_dim), jnp.float32),
        "bk2": jnp.zeros((1, inner_dim), jnp.float32),
    }


# ---------------------------------------------------------------------------
# Forward (single fused pallas_call)
# ---------------------------------------------------------------------------
def double_attention_forward(params, c, x, scale_by_num_heads=False):
    b, s1, dim = c.shape
    s2 = x.shape[1]
    H = params["num_heads"]
    hd = params["head_dim"]
    inner = H * hd
    out_dtype = c.dtype
    bf16 = jnp.bfloat16
    f32 = jnp.float32

    # --- one-time input / weight repack (negligible) -------------------------
    c_bf = c.astype(bf16)
    x_bf = x.astype(bf16)
    wqkv1 = jnp.concatenate(
        [params["wq"], params["wk"], params["wv"]], axis=1).astype(bf16)
    wqkv2 = jnp.concatenate(
        [params["wq2"], params["wk2"], params["wv2"]], axis=1).astype(bf16)

    # lane-dense output stores: pad the output feature dim to a multiple of 128
    dim_pad = _round_up(dim, 128)
    wo1 = params["wo"].astype(bf16)
    wo2 = params["wo2"].astype(bf16)
    if dim_pad != dim:
        pad = ((0, 0), (0, dim_pad - dim))
        wo1 = jnp.pad(wo1, pad)
        wo2 = jnp.pad(wo2, pad)

    # fold the attention scale into the query LayerNorm affine (free)
    scale = (1.0 / (hd ** 0.5)) if scale_by_num_heads else 1.0
    gq1, bq1 = params["gq"].astype(f32), params["bq"].astype(f32)
    gq2, bq2 = params["gq2"].astype(f32), params["bq2"].astype(f32)
    if scale != 1.0:
        gq1, bq1 = gq1 * scale, bq1 * scale
        gq2, bq2 = gq2 * scale, bq2 * scale
    gk1, bk1 = params["gk"].astype(f32), params["bk"].astype(f32)
    gk2, bk2 = params["gk2"].astype(f32), params["bk2"].astype(f32)

    b_tile = _pick_batch_tile(b, max(s1, s2))
    grid = (b // b_tile,)

    kernel = functools.partial(
        _double_attention_kernel,
        num_heads=H, head_dim=hd, b_tile=b_tile, s1=s1, s2=s2)

    def build(single_buffer_weights):
        def wspec(shape):
            idx = lambda i, _n=len(shape): (0,) * _n
            if single_buffer_weights:
                # constant-index inputs: no point double-buffering them
                return pl.BlockSpec(shape, idx, pipeline_mode=pl.Buffered(1))
            return pl.BlockSpec(shape, idx)

        in_specs = [
            pl.BlockSpec((b_tile, s1, dim), lambda i: (i, 0, 0)),
            pl.BlockSpec((b_tile, s2, dim), lambda i: (i, 0, 0)),
            wspec((dim, 3 * inner)), wspec((dim, 3 * inner)),
            wspec((1, inner)), wspec((1, inner)), wspec((1, inner)), wspec((1, inner)),
            wspec((1, inner)), wspec((1, inner)), wspec((1, inner)), wspec((1, inner)),
            wspec((inner, dim_pad)), wspec((inner, dim_pad)),
        ]
        out_specs = [
            pl.BlockSpec((b_tile, s1, dim_pad), lambda i: (i, 0, 0)),
            pl.BlockSpec((b_tile, s2, dim_pad), lambda i: (i, 0, 0)),
        ]
        return pl.pallas_call(
            kernel,
            grid=grid,
            in_specs=in_specs,
            out_specs=out_specs,
            out_shape=[
                jax.ShapeDtypeStruct((b, s1, dim_pad), out_dtype),
                jax.ShapeDtypeStruct((b, s2, dim_pad), out_dtype),
            ],
            compiler_params=pltpu.CompilerParams(
                dimension_semantics=("parallel",),
                vmem_limit_bytes=_vmem_limit_bytes(),
            ),
        )

    args = (c_bf, x_bf, wqkv1, wqkv2,
            gq1, bq1, gk1, bk1, gq2, bq2, gk2, bk2, wo1, wo2)
    try:
        c_out, x_out = build(True)(*args)
    except Exception:
        # Fallback for jax versions that reject pipeline_mode / Buffered(1).
        c_out, x_out = build(False)(*args)

    if dim_pad != dim:
        c_out = c_out[:, :, :dim]
        x_out = x_out[:, :, :dim]
    return c_out, x_out


# ---------------------------------------------------------------------------
# Pure-JAX f32 reference (mirrors the PyTorch module, f=None path)
# ---------------------------------------------------------------------------
def double_attention_reference(params, c, x, scale_by_num_heads=False):
    b, s1, dim = c.shape
    s2 = x.shape[1]
    H = params["num_heads"]
    hd = params["head_dim"]
    inner = H * hd

    def ln(y, g, b_):
        mean = jnp.mean(y, axis=-1, keepdims=True)
        var = jnp.mean(jnp.square(y - mean), axis=-1, keepdims=True)
        return (y - mean) / jnp.sqrt(var + LN_EPS) * g + b_

    c_q = ln(c @ params["wq"], params["gq"], params["bq"])
    c_k = ln(c @ params["wk"], params["gk"], params["bk"])
    c_v = c @ params["wv"]
    x_q = ln(x @ params["wq2"], params["gq2"], params["bq2"])
    x_k = ln(x @ params["wk2"], params["gk2"], params["bk2"])
    x_v = x @ params["wv2"]

    def heads(t, s):
        return t.reshape(b, s, H, hd).transpose(0, 2, 1, 3)

    q = jnp.concatenate([heads(c_q, s1), heads(x_q, s2)], axis=2)
    k = jnp.concatenate([heads(c_k, s1), heads(x_k, s2)], axis=2)
    v = jnp.concatenate([heads(c_v, s1), heads(x_v, s2)], axis=2)

    scale = (1.0 / (hd ** 0.5)) if scale_by_num_heads else 1.0
    s_ = jnp.einsum("bhqd,bhkd->bhqk", q, k) * scale
    p = jax.nn.softmax(s_, axis=-1)
    o = jnp.einsum("bhqk,bhkd->bhqd", p, v)
    o = o.transpose(0, 2, 1, 3).reshape(b, s1 + s2, inner)
    return o[:, :s1] @ params["wo"], o[:, s1:] @ params["wo2"]


# ---------------------------------------------------------------------------
if __name__ == "__main__":
    key = jax.random.PRNGKey(0)
    k_par, k_c, k_x = jax.random.split(key, 3)

    dim = 32
    num_heads = 4
    batch = 2
    s1 = 8
    s2 = 8

    params = init_double_attention_params(k_par, dim, num_heads)
    c_in = jax.random.normal(k_c, (batch, s1, dim), jnp.float32)
    x_in = jax.random.normal(k_x, (batch, s2, dim), jnp.float32)

    c_out, x_out = double_attention_forward(params, c_in, x_in)
    jax.block_until_ready((c_out, x_out))

    assert c_out.shape == (batch, s1, dim)
    assert x_out.shape == (batch, s2, dim)
    assert jnp.all(jnp.isfinite(c_out)) and jnp.all(jnp.isfinite(x_out))

    # Reference is pure f32; the kernel feeds the MXU bf16 operands (f32
    # accumulation), so use a tolerance consistent with bf16 rounding.
    c_ref, x_ref = double_attention_reference(params, c_in, x_in)
    assert jnp.allclose(c_out, c_ref, atol=1e-1, rtol=1e-1), "c stream mismatch"
    assert jnp.allclose(x_out, x_ref, atol=1e-1, rtol=1e-1), "x stream mismatch"

    print("KERNEL_OK")
</pallas_src>

<mosaic_0001>
module attributes {stable_mosaic.version = 11 : i64} {
  func.func @_double_attention_kernel(%arg0: i32, %arg1: memref<1x8x32xbf16, #tpu.memory_space<vmem>>, %arg2: memref<1x8x32xbf16, #tpu.memory_space<vmem>>, %arg3: memref<32x96xbf16, #tpu.memory_space<vmem>>, %arg4: memref<32x96xbf16, #tpu.memory_space<vmem>>, %arg5: memref<1x32xf32, #tpu.memory_space<vmem>>, %arg6: memref<1x32xf32, #tpu.memory_space<vmem>>, %arg7: memref<1x32xf32, #tpu.memory_space<vmem>>, %arg8: memref<1x32xf32, #tpu.memory_space<vmem>>, %arg9: memref<1x32xf32, #tpu.memory_space<vmem>>, %arg10: memref<1x32xf32, #tpu.memory_space<vmem>>, %arg11: memref<1x32xf32, #tpu.memory_space<vmem>>, %arg12: memref<1x32xf32, #tpu.memory_space<vmem>>, %arg13: memref<32x128xbf16, #tpu.memory_space<vmem>>, %arg14: memref<32x128xbf16, #tpu.memory_space<vmem>>, %arg15: memref<1x8x128xf32, #tpu.memory_space<vmem>>, %arg16: memref<1x8x128xf32, #tpu.memory_space<vmem>>) attributes {dimension_semantics = [#tpu.dimension_semantics<parallel>], iteration_bounds = array<i64: 2>, scalar_prefetch = 0 : i64, scratch_operands = 0 : i64, tpu.core_type = #tpu.core_type<tc>, window_params = [{transform_indices = @transform_0, window_bounds = array<i64: 1, 8, 32>}, {transform_indices = @transform_1, window_bounds = array<i64: 1, 8, 32>}, {pipeline_mode = #tpu.pipeline_mode<synchronous>, transform_indices = @transform_2, window_bounds = array<i64: 32, 96>}, {pipeline_mode = #tpu.pipeline_mode<synchronous>, transform_indices = @transform_3, window_bounds = array<i64: 32, 96>}, {pipeline_mode = #tpu.pipeline_mode<synchronous>, transform_indices = @transform_4, window_bounds = array<i64: 1, 32>}, {pipeline_mode = #tpu.pipeline_mode<synchronous>, transform_indices = @transform_5, window_bounds = array<i64: 1, 32>}, {pipeline_mode = #tpu.pipeline_mode<synchronous>, transform_indices = @transform_6, window_bounds = array<i64: 1, 32>}, {pipeline_mode = #tpu.pipeline_mode<synchronous>, transform_indices = @transform_7, window_bounds = array<i64: 1, 32>}, {pipeline_mode = #tpu.pipeline_mode<synchronous>, transform_indices = @transform_8, window_bounds = array<i64: 1, 32>}, {pipeline_mode = #tpu.pipeline_mode<synchronous>, transform_indices = @transform_9, window_bounds = array<i64: 1, 32>}, {pipeline_mode = #tpu.pipeline_mode<synchronous>, transform_indices = @transform_10, window_bounds = array<i64: 1, 32>}, {pipeline_mode = #tpu.pipeline_mode<synchronous>, transform_indices = @transform_11, window_bounds = array<i64: 1, 32>}, {pipeline_mode = #tpu.pipeline_mode<synchronous>, transform_indices = @transform_12, window_bounds = array<i64: 32, 128>}, {pipeline_mode = #tpu.pipeline_mode<synchronous>, transform_indices = @transform_13, window_bounds = array<i64: 32, 128>}, {transform_indices = @transform_14, window_bounds = array<i64: 1, 8, 128>}, {transform_indices = @transform_15, window_bounds = array<i64: 1, 8, 128>}]} {
    %c0 = arith.constant 0 : index
    %c0_0 = arith.constant 0 : index
    %c0_1 = arith.constant 0 : index
    %0 = vector.load %arg1[%c0, %c0_0, %c0_1] : memref<1x8x32xbf16, #tpu.memory_space<vmem>>, vector<1x8x32xbf16>
    %1 = vector.shape_cast %0 : vector<1x8x32xbf16> to vector<8x32xbf16>
    %c0_2 = arith.constant 0 : index
    %c0_3 = arith.constant 0 : index
    %c0_4 = arith.constant 0 : index
    %2 = vector.load %arg2[%c0_2, %c0_3, %c0_4] : memref<1x8x32xbf16, #tpu.memory_space<vmem>>, vector<1x8x32xbf16>
    %3 = vector.shape_cast %2 : vector<1x8x32xbf16> to vector<8x32xbf16>
    %c0_5 = arith.constant 0 : index
    %c0_6 = arith.constant 0 : index
    %4 = vector.load %arg3[%c0_5, %c0_6] : memref<32x96xbf16, #tpu.memory_space<vmem>>, vector<32x96xbf16>
    %cst = arith.constant dense<0.000000e+00> : vector<8x96xf32>
    %5 = tpu.matmul %1, %4, %cst {dimension_numbers = #tpu.dot_dimension_numbers<[1], [0], [0], [1], [0, 0, 1, 1], [], []>} : vector<8x32xbf16>, vector<32x96xbf16>, vector<8x96xf32> -> vector<8x96xf32>
    %c0_7 = arith.constant 0 : index
    %c0_8 = arith.constant 0 : index
    %6 = vector.load %arg4[%c0_7, %c0_8] : memref<32x96xbf16, #tpu.memory_space<vmem>>, vector<32x96xbf16>
    %cst_9 = arith.constant dense<0.000000e+00> : vector<8x96xf32>
    %7 = tpu.matmul %3, %6, %cst_9 {dimension_numbers = #tpu.dot_dimension_numbers<[1], [0], [0], [1], [0, 0, 1, 1], [], []>} : vector<8x32xbf16>, vector<32x96xbf16>, vector<8x96xf32> -> vector<8x96xf32>
    %8 = vector.extract_strided_slice %5 {offsets = [0, 0], sizes = [8, 32], strides = [1, 1]} : vector<8x96xf32> to vector<8x32xf32>
    %c0_10 = arith.constant 0 : index
    %c0_11 = arith.constant 0 : index
    %9 = vector.load %arg5[%c0_10, %c0_11] : memref<1x32xf32, #tpu.memory_space<vmem>>, vector<1x32xf32>
    %c0_12 = arith.constant 0 : index
    %c0_13 = arith.constant 0 : index
    %10 = vector.load %arg6[%c0_12, %c0_13] : memref<1x32xf32, #tpu.memory_space<vmem>>, vector<1x32xf32>
    %cst_14 = arith.constant dense<0.000000e+00> : vector<8xf32>
    %11 = vector.multi_reduction <add>, %8, %cst_14 [1] : vector<8x32xf32> to vector<8xf32>
    %12 = vector.shape_cast %11 : vector<8xf32> to vector<8x1xf32>
    %cst_15 = arith.constant 3.200000e+01 : f32
    %13 = vector.broadcast %cst_15 : f32 to vector<8x1xf32>
    %14 = arith.divf %12, %13 : vector<8x1xf32>
    %15 = vector.broadcast %14 : vector<8x1xf32> to vector<8x32xf32>
    %16 = arith.subf %8, %15 : vector<8x32xf32>
    %17 = arith.mulf %16, %16 : vector<8x32xf32>
    %cst_16 = arith.constant dense<0.000000e+00> : vector<8xf32>
    %18 = vector.multi_reduction <add>, %17, %cst_16 [1] : vector<8x32xf32> to vector<8xf32>
    %19 = vector.shape_cast %18 : vector<8xf32> to vector<8x1xf32>
    %cst_17 = arith.constant 3.200000e+01 : f32
    %20 = vector.broadcast %cst_17 : f32 to vector<8x1xf32>
    %21 = arith.divf %19, %20 : vector<8x1xf32>
    %22 = vector.broadcast %14 : vector<8x1xf32> to vector<8x32xf32>
    %23 = arith.subf %8, %22 : vector<8x32xf32>
    %cst_18 = arith.constant 9.99999974E-6 : f32
    %24 = vector.broadcast %cst_18 : f32 to vector<8x1xf32>
    %25 = arith.addf %21, %24 : vector<8x1xf32>
    %26 = math.rsqrt %25 : vector<8x1xf32>
    %27 = vector.broadcast %26 : vector<8x1xf32> to vector<8x32xf32>
    %28 = arith.mulf %23, %27 : vector<8x32xf32>
    %29 = vector.broadcast %9 : vector<1x32xf32> to vector<8x32xf32>
    %30 = arith.mulf %28, %29 : vector<8x32xf32>
    %31 = vector.broadcast %10 : vector<1x32xf32> to vector<8x32xf32>
    %32 = arith.addf %30, %31 : vector<8x32xf32>
    %33 = arith.truncf %32 : vector<8x32xf32> to vector<8x32xbf16>
    %34 = vector.extract_strided_slice %5 {offsets = [0, 32], sizes = [8, 32], strides = [1, 1]} : vector<8x96xf32> to vector<8x32xf32>
    %c0_19 = arith.constant 0 : index
    %c0_20 = arith.constant 0 : index
    %35 = vector.load %arg7[%c0_19, %c0_20] : memref<1x32xf32, #tpu.memory_space<vmem>>, vector<1x32xf32>
    %c0_21 = arith.constant 0 : index
    %c0_22 = arith.constant 0 : index
    %36 = vector.load %arg8[%c0_21, %c0_22] : memref<1x32xf32, #tpu.memory_space<vmem>>, vector<1x32xf32>
    %cst_23 = arith.constant dense<0.000000e+00> : vector<8xf32>
    %37 = vector.multi_reduction <add>, %34, %cst_23 [1] : vector<8x32xf32> to vector<8xf32>
    %38 = vector.shape_cast %37 : vector<8xf32> to vector<8x1xf32>
    %cst_24 = arith.constant 3.200000e+01 : f32
    %39 = vector.broadcast %cst_24 : f32 to vector<8x1xf32>
    %40 = arith.divf %38, %39 : vector<8x1xf32>
    %41 = vector.broadcast %40 : vector<8x1xf32> to vector<8x32xf32>
    %42 = arith.subf %34, %41 : vector<8x32xf32>
    %43 = arith.mulf %42, %42 : vector<8x32xf32>
    %cst_25 = arith.constant dense<0.000000e+00> : vector<8xf32>
    %44 = vector.multi_reduction <add>, %43, %cst_25 [1] : vector<8x32xf32> to vector<8xf32>
    %45 = vector.shape_cast %44 : vector<8xf32> to vector<8x1xf32>
    %cst_26 = arith.constant 3.200000e+01 : f32
    %46 = vector.broadcast %cst_26 : f32 to vector<8x1xf32>
    %47 = arith.divf %45, %46 : vector<8x1xf32>
    %48 = vector.broadcast %40 : vector<8x1xf32> to vector<8x32xf32>
    %49 = arith.subf %34, %48 : vector<8x32xf32>
    %cst_27 = arith.constant 9.99999974E-6 : f32
    %50 = vector.broadcast %cst_27 : f32 to vector<8x1xf32>
    %51 = arith.addf %47, %50 : vector<8x1xf32>
    %52 = math.rsqrt %51 : vector<8x1xf32>
    %53 = vector.broadcast %52 : vector<8x1xf32> to vector<8x32xf32>
    %54 = arith.mulf %49, %53 : vector<8x32xf32>
    %55 = vector.broadcast %35 : vector<1x32xf32> to vector<8x32xf32>
    %56 = arith.mulf %54, %55 : vector<8x32xf32>
    %57 = vector.broadcast %36 : vector<1x32xf32> to vector<8x32xf32>
    %58 = arith.addf %56, %57 : vector<8x32xf32>
    %59 = arith.truncf %58 : vector<8x32xf32> to vector<8x32xbf16>
    %60 = vector.extract_strided_slice %5 {offsets = [0, 64], sizes = [8, 32], strides = [1, 1]} : vector<8x96xf32> to vector<8x32xf32>
    %61 = arith.truncf %60 : vector<8x32xf32> to vector<8x32xbf16>
    %62 = vector.extract_strided_slice %7 {offsets = [0, 0], sizes = [8, 32], strides = [1, 1]} : vector<8x96xf32> to vector<8x32xf32>
    %c0_28 = arith.constant 0 : index
    %c0_29 = arith.constant 0 : index
    %63 = vector.load %arg9[%c0_28, %c0_29] : memref<1x32xf32, #tpu.memory_space<vmem>>, vector<1x32xf32>
    %c0_30 = arith.constant 0 : index
    %c0_31 = arith.constant 0 : index
    %64 = vector.load %arg10[%c0_30, %c0_31] : memref<1x32xf32, #tpu.memory_space<vmem>>, vector<1x32xf32>
    %cst_32 = arith.constant dense<0.000000e+00> : vector<8xf32>
    %65 = vector.multi_reduction <add>, %62, %cst_32 [1] : vector<8x32xf32> to vector<8xf32>
    %66 = vector.shape_cast %65 : vector<8xf32> to vector<8x1xf32>
    %cst_33 = arith.constant 3.200000e+01 : f32
    %67 = vector.broadcast %cst_33 : f32 to vector<8x1xf32>
    %68 = arith.divf %66, %67 : vector<8x1xf32>
    %69 = vector.broadcast %68 : vector<8x1xf32> to vector<8x32xf32>
    %70 = arith.subf %62, %69 : vector<8x32xf32>
    %71 = arith.mulf %70, %70 : vector<8x32xf32>
    %cst_34 = arith.constant dense<0.000000e+00> : vector<8xf32>
    %72 = vector.multi_reduction <add>, %71, %cst_34 [1] : vector<8x32xf32> to vector<8xf32>
    %73 = vector.shape_cast %72 : vector<8xf32> to vector<8x1xf32>
    %cst_35 = arith.constant 3.200000e+01 : f32
    %74 = vector.broadcast %cst_35 : f32 to vector<8x1xf32>
    %75 = arith.divf %73, %74 : vector<8x1xf32>
    %76 = vector.broadcast %68 : vector<8x1xf32> to vector<8x32xf32>
    %77 = arith.subf %62, %76 : vector<8x32xf32>
    %cst_36 = arith.constant 9.99999974E-6 : f32
    %78 = vector.broadcast %cst_36 : f32 to vector<8x1xf32>
    %79 = arith.addf %75, %78 : vector<8x1xf32>
    %80 = math.rsqrt %79 : vector<8x1xf32>
    %81 = vector.broadcast %80 : vector<8x1xf32> to vector<8x32xf32>
    %82 = arith.mulf %77, %81 : vector<8x32xf32>
    %83 = vector.broadcast %63 : vector<1x32xf32> to vector<8x32xf32>
    %84 = arith.mulf %82, %83 : vector<8x32xf32>
    %85 = vector.broadcast %64 : vector<1x32xf32> to vector<8x32xf32>
    %86 = arith.addf %84, %85 : vector<8x32xf32>
    %87 = arith.truncf %86 : vector<8x32xf32> to vector<8x32xbf16>
    %88 = vector.extract_strided_slice %7 {offsets = [0, 32], sizes = [8, 32], strides = [1, 1]} : vector<8x96xf32> to vector<8x32xf32>
    %c0_37 = arith.constant 0 : index
    %c0_38 = arith.constant 0 : index
    %89 = vector.load %arg11[%c0_37, %c0_38] : memref<1x32xf32, #tpu.memory_space<vmem>>, vector<1x32xf32>
    %c0_39 = arith.constant 0 : index
    %c0_40 = arith.constant 0 : index
    %90 = vector.load %arg12[%c0_39, %c0_40] : memref<1x32xf32, #tpu.memory_space<vmem>>, vector<1x32xf32>
    %cst_41 = arith.constant dense<0.000000e+00> : vector<8xf32>
    %91 = vector.multi_reduction <add>, %88, %cst_41 [1] : vector<8x32xf32> to vector<8xf32>
    %92 = vector.shape_cast %91 : vector<8xf32> to vector<8x1xf32>
    %cst_42 = arith.constant 3.200000e+01 : f32
    %93 = vector.broadcast %cst_42 : f32 to vector<8x1xf32>
    %94 = arith.divf %92, %93 : vector<8x1xf32>
    %95 = vector.broadcast %94 : vector<8x1xf32> to vector<8x32xf32>
    %96 = arith.subf %88, %95 : vector<8x32xf32>
    %97 = arith.mulf %96, %96 : vector<8x32xf32>
    %cst_43 = arith.constant dense<0.000000e+00> : vector<8xf32>
    %98 = vector.multi_reduction <add>, %97, %cst_43 [1] : vector<8x32xf32> to vector<8xf32>
    %99 = vector.shape_cast %98 : vector<8xf32> to vector<8x1xf32>
    %cst_44 = arith.constant 3.200000e+01 : f32
    %100 = vector.broadcast %cst_44 : f32 to vector<8x1xf32>
    %101 = arith.divf %99, %100 : vector<8x1xf32>
    %102 = vector.broadcast %94 : vector<8x1xf32> to vector<8x32xf32>
    %103 = arith.subf %88, %102 : vector<8x32xf32>
    %cst_45 = arith.constant 9.99999974E-6 : f32
    %104 = vector.broadcast %cst_45 : f32 to vector<8x1xf32>
    %105 = arith.addf %101, %104 : vector<8x1xf32>
    %106 = math.rsqrt %105 : vector<8x1xf32>
    %107 = vector.broadcast %106 : vector<8x1xf32> to vector<8x32xf32>
    %108 = arith.mulf %103, %107 : vector<8x32xf32>
    %109 = vector.broadcast %89 : vector<1x32xf32> to vector<8x32xf32>
    %110 = arith.mulf %108, %109 : vector<8x32xf32>
    %111 = vector.broadcast %90 : vector<1x32xf32> to vector<8x32xf32>
    %112 = arith.addf %110, %111 : vector<8x32xf32>
    %113 = arith.truncf %112 : vector<8x32xf32> to vector<8x32xbf16>
    %114 = vector.extract_strided_slice %7 {offsets = [0, 64], sizes = [8, 32], strides = [1, 1]} : vector<8x96xf32> to vector<8x32xf32>
    %115 = arith.truncf %114 : vector<8x32xf32> to vector<8x32xbf16>
    %116 = vector.extract_strided_slice %33 {offsets = [0, 0], sizes = [8, 8], strides = [1, 1]} : vector<8x32xbf16> to vector<8x8xbf16>
    %117 = vector.shape_cast %116 : vector<8x8xbf16> to vector<1x8x8xbf16>
    %118 = vector.extract_strided_slice %87 {offsets = [0, 0], sizes = [8, 8], strides = [1, 1]} : vector<8x32xbf16> to vector<8x8xbf16>
    %119 = vector.shape_cast %118 : vector<8x8xbf16> to vector<1x8x8xbf16>
    %120 = tpu.concatenate %117, %119 in 1 : vector<1x8x8xbf16>, vector<1x8x8xbf16> -> vector<1x16x8xbf16>
    %121 = vector.extract_strided_slice %33 {offsets = [0, 8], sizes = [8, 8], strides = [1, 1]} : vector<8x32xbf16> to vector<8x8xbf16>
    %122 = vector.shape_cast %121 : vector<8x8xbf16> to vector<1x8x8xbf16>
    %123 = vector.extract_strided_slice %87 {offsets = [0, 8], sizes = [8, 8], strides = [1, 1]} : vector<8x32xbf16> to vector<8x8xbf16>
    %124 = vector.shape_cast %123 : vector<8x8xbf16> to vector<1x8x8xbf16>
    %125 = tpu.concatenate %122, %124 in 1 : vector<1x8x8xbf16>, vector<1x8x8xbf16> -> vector<1x16x8xbf16>
    %126 = vector.extract_strided_slice %33 {offsets = [0, 16], sizes = [8, 8], strides = [1, 1]} : vector<8x32xbf16> to vector<8x8xbf16>
    %127 = vector.shape_cast %126 : vector<8x8xbf16> to vector<1x8x8xbf16>
    %128 = vector.extract_strided_slice %87 {offsets = [0, 16], sizes = [8, 8], strides = [1, 1]} : vector<8x32xbf16> to vector<8x8xbf16>
    %129 = vector.shape_cast %128 : vector<8x8xbf16> to vector<1x8x8xbf16>
    %130 = tpu.concatenate %127, %129 in 1 : vector<1x8x8xbf16>, vector<1x8x8xbf16> -> vector<1x16x8xbf16>
    %131 = vector.extract_strided_slice %33 {offsets = [0, 24], sizes = [8, 8], strides = [1, 1]} : vector<8x32xbf16> to vector<8x8xbf16>
    %132 = vector.shape_cast %131 : vector<8x8xbf16> to vector<1x8x8xbf16>
    %133 = vector.extract_strided_slice %87 {offsets = [0, 24], sizes = [8, 8], strides = [1, 1]} : vector<8x32xbf16> to vector<8x8xbf16>
    %134 = vector.shape_cast %133 : vector<8x8xbf16> to vector<1x8x8xbf16>
    %135 = tpu.concatenate %132, %134 in 1 : vector<1x8x8xbf16>, vector<1x8x8xbf16> -> vector<1x16x8xbf16>
    %136 = vector.shape_cast %120 : vector<1x16x8xbf16> to vector<1x1x16x8xbf16>
    %137 = vector.shape_cast %125 : vector<1x16x8xbf16> to vector<1x1x16x8xbf16>
    %138 = vector.shape_cast %130 : vector<1x16x8xbf16> to vector<1x1x16x8xbf16>
    %139 = vector.shape_cast %135 : vector<1x16x8xbf16> to vector<1x1x16x8xbf16>
    %140 = tpu.concatenate %136, %137, %138, %139 in 0 : vector<1x1x16x8xbf16>, vector<1x1x16x8xbf16>, vector<1x1x16x8xbf16>, vector<1x1x16x8xbf16> -> vector<4x1x16x8xbf16>
    %141 = vector.shape_cast %140 : vector<4x1x16x8xbf16> to vector<4x16x8xbf16>
    %142 = vector.extract_strided_slice %59 {offsets = [0, 0], sizes = [8, 8], strides = [1, 1]} : vector<8x32xbf16> to vector<8x8xbf16>
    %143 = vector.shape_cast %142 : vector<8x8xbf16> to vector<1x8x8xbf16>
    %144 = vector.extract_strided_slice %113 {offsets = [0, 0], sizes = [8, 8], strides = [1, 1]} : vector<8x32xbf16> to vector<8x8xbf16>
    %145 = vector.shape_cast %144 : vector<8x8xbf16> to vector<1x8x8xbf16>
    %146 = tpu.concatenate %143, %145 in 1 : vector<1x8x8xbf16>, vector<1x8x8xbf16> -> vector<1x16x8xbf16>
    %147 = vector.extract_strided_slice %59 {offsets = [0, 8], sizes = [8, 8], strides = [1, 1]} : vector<8x32xbf16> to vector<8x8xbf16>
    %148 = vector.shape_cast %147 : vector<8x8xbf16> to vector<1x8x8xbf16>
    %149 = vector.extract_strided_slice %113 {offsets = [0, 8], sizes = [8, 8], strides = [1, 1]} : vector<8x32xbf16> to vector<8x8xbf16>
    %150 = vector.shape_cast %149 : vector<8x8xbf16> to vector<1x8x8xbf16>
    %151 = tpu.concatenate %148, %150 in 1 : vector<1x8x8xbf16>, vector<1x8x8xbf16> -> vector<1x16x8xbf16>
    %152 = vector.extract_strided_slice %59 {offsets = [0, 16], sizes = [8, 8], strides = [1, 1]} : vector<8x32xbf16> to vector<8x8xbf16>
    %153 = vector.shape_cast %152 : vector<8x8xbf16> to vector<1x8x8xbf16>
    %154 = vector.extract_strided_slice %113 {offsets = [0, 16], sizes = [8, 8], strides = [1, 1]} : vector<8x32xbf16> to vector<8x8xbf16>
    %155 = vector.shape_cast %154 : vector<8x8xbf16> to vector<1x8x8xbf16>
    %156 = tpu.concatenate %153, %155 in 1 : vector<1x8x8xbf16>, vector<1x8x8xbf16> -> vector<1x16x8xbf16>
    %157 = vector.extract_strided_slice %59 {offsets = [0, 24], sizes = [8, 8], strides = [1, 1]} : vector<8x32xbf16> to vector<8x8xbf16>
    %158 = vector.shape_cast %157 : vector<8x8xbf16> to vector<1x8x8xbf16>
    %159 = vector.extract_strided_slice %113 {offsets = [0, 24], sizes = [8, 8], strides = [1, 1]} : vector<8x32xbf16> to vector<8x8xbf16>
    %160 = vector.shape_cast %159 : vector<8x8xbf16> to vector<1x8x8xbf16>
    %161 = tpu.concatenate %158, %160 in 1 : vector<1x8x8xbf16>, vector<1x8x8xbf16> -> vector<1x16x8xbf16>
    %162 = vector.shape_cast %146 : vector<1x16x8xbf16> to vector<1x1x16x8xbf16>
    %163 = vector.shape_cast %151 : vector<1x16x8xbf16> to vector<1x1x16x8xbf16>
    %164 = vector.shape_cast %156 : vector<1x16x8xbf16> to vector<1x1x16x8xbf16>
    %165 = vector.shape_cast %161 : vector<1x16x8xbf16> to vector<1x1x16x8xbf16>
    %166 = tpu.concatenate %162, %163, %164, %165 in 0 : vector<1x1x16x8xbf16>, vector<1x1x16x8xbf16>, vector<1x1x16x8xbf16>, vector<1x1x16x8xbf16> -> vector<4x1x16x8xbf16>
    %167 = vector.shape_cast %166 : vector<4x1x16x8xbf16> to vector<4x16x8xbf16>
    %168 = vector.extract_strided_slice %61 {offsets = [0, 0], sizes = [8, 8], strides = [1, 1]} : vector<8x32xbf16> to vector<8x8xbf16>
    %169 = vector.shape_cast %168 : vector<8x8xbf16> to vector<1x8x8xbf16>
    %170 = vector.extract_strided_slice %115 {offsets = [0, 0], sizes = [8, 8], strides = [1, 1]} : vector<8x32xbf16> to vector<8x8xbf16>
    %171 = vector.shape_cast %170 : vector<8x8xbf16> to vector<1x8x8xbf16>
    %172 = tpu.concatenate %169, %171 in 1 : vector<1x8x8xbf16>, vector<1x8x8xbf16> -> vector<1x16x8xbf16>
    %173 = vector.extract_strided_slice %61 {offsets = [0, 8], sizes = [8, 8], strides = [1, 1]} : vector<8x32xbf16> to vector<8x8xbf16>
    %174 = vector.shape_cast %173 : vector<8x8xbf16> to vector<1x8x8xbf16>
    %175 = vector.extract_strided_slice %115 {offsets = [0, 8], sizes = [8, 8], strides = [1, 1]} : vector<8x32xbf16> to vector<8x8xbf16>
    %176 = vector.shape_cast %175 : vector<8x8xbf16> to vector<1x8x8xbf16>
    %177 = tpu.concatenate %174, %176 in 1 : vector<1x8x8xbf16>, vector<1x8x8xbf16> -> vector<1x16x8xbf16>
    %178 = vector.extract_strided_slice %61 {offsets = [0, 16], sizes = [8, 8], strides = [1, 1]} : vector<8x32xbf16> to vector<8x8xbf16>
    %179 = vector.shape_cast %178 : vector<8x8xbf16> to vector<1x8x8xbf16>
    %180 = vector.extract_strided_slice %115 {offsets = [0, 16], sizes = [8, 8], strides = [1, 1]} : vector<8x32xbf16> to vector<8x8xbf16>
    %181 = vector.shape_cast %180 : vector<8x8xbf16> to vector<1x8x8xbf16>
    %182 = tpu.concatenate %179, %181 in 1 : vector<1x8x8xbf16>, vector<1x8x8xbf16> -> vector<1x16x8xbf16>
    %183 = vector.extract_strided_slice %61 {offsets = [0, 24], sizes = [8, 8], strides = [1, 1]} : vector<8x32xbf16> to vector<8x8xbf16>
    %184 = vector.shape_cast %183 : vector<8x8xbf16> to vector<1x8x8xbf16>
    %185 = vector.extract_strided_slice %115 {offsets = [0, 24], sizes = [8, 8], strides = [1, 1]} : vector<8x32xbf16> to vector<8x8xbf16>
    %186 = vector.shape_cast %185 : vector<8x8xbf16> to vector<1x8x8xbf16>
    %187 = tpu.concatenate %184, %186 in 1 : vector<1x8x8xbf16>, vector<1x8x8xbf16> -> vector<1x16x8xbf16>
    %188 = vector.shape_cast %172 : vector<1x16x8xbf16> to vector<1x1x16x8xbf16>
    %189 = vector.shape_cast %177 : vector<1x16x8xbf16> to vector<1x1x16x8xbf16>
    %190 = vector.shape_cast %182 : vector<1x16x8xbf16> to vector<1x1x16x8xbf16>
    %191 = vector.shape_cast %187 : vector<1x16x8xbf16> to vector<1x1x16x8xbf16>
    %192 = tpu.concatenate %188, %189, %190, %191 in 0 : vector<1x1x16x8xbf16>, vector<1x1x16x8xbf16>, vector<1x1x16x8xbf16>, vector<1x1x16x8xbf16> -> vector<4x1x16x8xbf16>
    %193 = vector.shape_cast %192 : vector<4x1x16x8xbf16> to vector<4x16x8xbf16>
    %cst_46 = arith.constant dense<0.000000e+00> : vector<4x16x16xf32>
    %194 = tpu.matmul %141, %167, %cst_46 {dimension_numbers = #tpu.dot_dimension_numbers<[2], [2], [1], [1], [0, 0, 0, 1, 1, 1], [0], [0]>} : vector<4x16x8xbf16>, vector<4x16x8xbf16>, vector<4x16x16xf32> -> vector<4x16x16xf32>
    %cst_47 = arith.constant dense<0xFF800000> : vector<4x16xf32>
    %195 = vector.multi_reduction <maximumf>, %194, %cst_47 [2] : vector<4x16x16xf32> to vector<4x16xf32>
    %196 = vector.shape_cast %195 : vector<4x16xf32> to vector<4x16x1xf32>
    %197 = vector.broadcast %196 : vector<4x16x1xf32> to vector<4x16x16xf32>
    %198 = arith.subf %194, %197 : vector<4x16x16xf32>
    %199 = math.exp %198 : vector<4x16x16xf32>
    %cst_48 = arith.constant dense<0.000000e+00> : vector<4x16xf32>
    %200 = vector.multi_reduction <add>, %199, %cst_48 [2] : vector<4x16x16xf32> to vector<4x16xf32>
    %201 = vector.shape_cast %200 : vector<4x16xf32> to vector<4x16x1xf32>
    %202 = arith.truncf %199 : vector<4x16x16xf32> to vector<4x16x16xbf16>
    %cst_49 = arith.constant dense<0.000000e+00> : vector<4x16x8xf32>
    %203 = tpu.matmul %202, %193, %cst_49 {dimension_numbers = #tpu.dot_dimension_numbers<[2], [1], [1], [2], [0, 0, 0, 1, 1, 2], [0], [0]>} : vector<4x16x16xbf16>, vector<4x16x8xbf16>, vector<4x16x8xf32> -> vector<4x16x8xf32>
    %204 = tpu.reciprocal %201 {approx = true} : vector<4x16x1xf32> -> vector<4x16x1xf32>
    %205 = vector.broadcast %204 : vector<4x16x1xf32> to vector<4x16x8xf32>
    %206 = arith.mulf %203, %205 : vector<4x16x8xf32>
    %207 = arith.truncf %206 : vector<4x16x8xf32> to vector<4x16x8xbf16>
    %208 = vector.shape_cast %207 : vector<4x16x8xbf16> to vector<4x1x16x8xbf16>
    %209 = vector.extract_strided_slice %208 {offsets = [0, 0, 0, 0], sizes = [1, 1, 8, 8], strides = [1, 1, 1, 1]} : vector<4x1x16x8xbf16> to vector<1x1x8x8xbf16>
    %210 = vector.shape_cast %209 : vector<1x1x8x8xbf16> to vector<1x8x8xbf16>
    %211 = vector.shape_cast %210 : vector<1x8x8xbf16> to vector<8x8xbf16>
    %212 = vector.extract_strided_slice %208 {offsets = [1, 0, 0, 0], sizes = [1, 1, 8, 8], strides = [1, 1, 1, 1]} : vector<4x1x16x8xbf16> to vector<1x1x8x8xbf16>
    %213 = vector.shape_cast %212 : vector<1x1x8x8xbf16> to vector<1x8x8xbf16>
    %214 = vector.shape_cast %213 : vector<1x8x8xbf16> to vector<8x8xbf16>
    %215 = vector.extract_strided_slice %208 {offsets = [2, 0, 0, 0], sizes = [1, 1, 8, 8], strides = [1, 1, 1, 1]} : vector<4x1x16x8xbf16> to vector<1x1x8x8xbf16>
    %216 = vector.shape_cast %215 : vector<1x1x8x8xbf16> to vector<1x8x8xbf16>
    %217 = vector.shape_cast %216 : vector<1x8x8xbf16> to vector<8x8xbf16>
    %218 = vector.extract_strided_slice %208 {offsets = [3, 0, 0, 0], sizes = [1, 1, 8, 8], strides = [1, 1, 1, 1]} : vector<4x1x16x8xbf16> to vector<1x1x8x8xbf16>
    %219 = vector.shape_cast %218 : vector<1x1x8x8xbf16> to vector<1x8x8xbf16>
    %220 = vector.shape_cast %219 : vector<1x8x8xbf16> to vector<8x8xbf16>
    %221 = tpu.concatenate %211, %214, %217, %220 in 1 : vector<8x8xbf16>, vector<8x8xbf16>, vector<8x8xbf16>, vector<8x8xbf16> -> vector<8x32xbf16>
    %222 = vector.extract_strided_slice %208 {offsets = [0, 0, 8, 0], sizes = [1, 1, 8, 8], strides = [1, 1, 1, 1]} : vector<4x1x16x8xbf16> to vector<1x1x8x8xbf16>
    %223 = vector.shape_cast %222 : vector<1x1x8x8xbf16> to vector<1x8x8xbf16>
    %224 = vector.shape_cast %223 : vector<1x8x8xbf16> to vector<8x8xbf16>
    %225 = vector.extract_strided_slice %208 {offsets = [1, 0, 8, 0], sizes = [1, 1, 8, 8], strides = [1, 1, 1, 1]} : vector<4x1x16x8xbf16> to vector<1x1x8x8xbf16>
    %226 = vector.shape_cast %225 : vector<1x1x8x8xbf16> to vector<1x8x8xbf16>
    %227 = vector.shape_cast %226 : vector<1x8x8xbf16> to vector<8x8xbf16>
    %228 = vector.extract_strided_slice %208 {offsets = [2, 0, 8, 0], sizes = [1, 1, 8, 8], strides = [1, 1, 1, 1]} : vector<4x1x16x8xbf16> to vector<1x1x8x8xbf16>
    %229 = vector.shape_cast %228 : vector<1x1x8x8xbf16> to vector<1x8x8xbf16>
    %230 = vector.shape_cast %229 : vector<1x8x8xbf16> to vector<8x8xbf16>
    %231 = vector.extract_strided_slice %208 {offsets = [3, 0, 8, 0], sizes = [1, 1, 8, 8], strides = [1, 1, 1, 1]} : vector<4x1x16x8xbf16> to vector<1x1x8x8xbf16>
    %232 = vector.shape_cast %231 : vector<1x1x8x8xbf16> to vector<1x8x8xbf16>
    %233 = vector.shape_cast %232 : vector<1x8x8xbf16> to vector<8x8xbf16>
    %234 = tpu.concatenate %224, %227, %230, %233 in 1 : vector<8x8xbf16>, vector<8x8xbf16>, vector<8x8xbf16>, vector<8x8xbf16> -> vector<8x32xbf16>
    %c0_50 = arith.constant 0 : index
    %c0_51 = arith.constant 0 : index
    %235 = vector.load %arg13[%c0_50, %c0_51] : memref<32x128xbf16, #tpu.memory_space<vmem>>, vector<32x128xbf16>
    %cst_52 = arith.constant dense<0.000000e+00> : vector<8x128xf32>
    %236 = tpu.matmul %221, %235, %cst_52 {dimension_numbers = #tpu.dot_dimension_numbers<[1], [0], [0], [1], [0, 0, 1, 1], [], []>} : vector<8x32xbf16>, vector<32x128xbf16>, vector<8x128xf32> -> vector<8x128xf32>
    %c0_53 = arith.constant 0 : index
    %c0_54 = arith.constant 0 : index
    %237 = vector.load %arg14[%c0_53, %c0_54] : memref<32x128xbf16, #tpu.memory_space<vmem>>, vector<32x128xbf16>
    %cst_55 = arith.constant dense<0.000000e+00> : vector<8x128xf32>
    %238 = tpu.matmul %234, %237, %cst_55 {dimension_numbers = #tpu.dot_dimension_numbers<[1], [0], [0], [1], [0, 0, 1, 1], [], []>} : vector<8x32xbf16>, vector<32x128xbf16>, vector<8x128xf32> -> vector<8x128xf32>
    %239 = vector.shape_cast %236 : vector<8x128xf32> to vector<1x8x128xf32>
    %c0_56 = arith.constant 0 : index
    %c0_57 = arith.constant 0 : index
    %c0_58 = arith.constant 0 : index
    %240 = vector.load %arg15[%c0_56, %c0_57, %c0_58] : memref<1x8x128xf32, #tpu.memory_space<vmem>>, vector<1x8x128xf32>
    tpu.vector_store %arg15[%c0_56, %c0_57, %c0_58], %239 {strides = array<i32>} : memref<1x8x128xf32, #tpu.memory_space<vmem>>, vector<1x8x128xf32>,
    %241 = vector.shape_cast %238 : vector<8x128xf32> to vector<1x8x128xf32>
    %c0_59 = arith.constant 0 : index
    %c0_60 = arith.constant 0 : index
    %c0_61 = arith.constant 0 : index
    %242 = vector.load %arg16[%c0_59, %c0_60, %c0_61] : memref<1x8x128xf32, #tpu.memory_space<vmem>>, vector<1x8x128xf32>
    tpu.vector_store %arg16[%c0_59, %c0_60, %c0_61], %241 {strides = array<i32>} : memref<1x8x128xf32, #tpu.memory_space<vmem>>, vector<1x8x128xf32>,
    return
  }
  func.func @transform_0(%arg0: i32) -> (i32, i32, i32) {
    %c0_i32 = arith.constant 0 : i32
    %c0_i32_0 = arith.constant 0 : i32
    %c0_i32_1 = arith.constant 0 : i32
    return %arg0, %c0_i32, %c0_i32_0 : i32, i32, i32
  }
  func.func @transform_1(%arg0: i32) -> (i32, i32, i32) {
    %c0_i32 = arith.constant 0 : i32
    %c0_i32_0 = arith.constant 0 : i32
    %c0_i32_1 = arith.constant 0 : i32
    return %arg0, %c0_i32, %c0_i32_0 : i32, i32, i32
  }
  func.func @transform_2(%arg0: i32) -> (i32, i32) {
    %c0_i32 = arith.constant 0 : i32
    %c0_i32_0 = arith.constant 0 : i32
    %c0_i32_1 = arith.constant 0 : i32
    return %c0_i32, %c0_i32_0 : i32, i32
  }
  func.func @transform_3(%arg0: i32) -> (i32, i32) {
    %c0_i32 = arith.constant 0 : i32
    %c0_i32_0 = arith.constant 0 : i32
    %c0_i32_1 = arith.constant 0 : i32
    return %c0_i32, %c0_i32_0 : i32, i32
  }
  func.func @transform_4(%arg0: i32) -> (i32, i32) {
    %c0_i32 = arith.constant 0 : i32
    %c0_i32_0 = arith.constant 0 : i32
    %c0_i32_1 = arith.constant 0 : i32
    return %c0_i32, %c0_i32_0 : i32, i32
  }
  func.func @transform_5(%arg0: i32) -> (i32, i32) {
    %c0_i32 = arith.constant 0 : i32
    %c0_i32_0 = arith.constant 0 : i32
    %c0_i32_1 = arith.constant 0 : i32
    return %c0_i32, %c0_i32_0 : i32, i32
  }
  func.func @transform_6(%arg0: i32) -> (i32, i32) {
    %c0_i32 = arith.constant 0 : i32
    %c0_i32_0 = arith.constant 0 : i32
    %c0_i32_1 = arith.constant 0 : i32
    return %c0_i32, %c0_i32_0 : i32, i32
  }
  func.func @transform_7(%arg0: i32) -> (i32, i32) {
    %c0_i32 = arith.constant 0 : i32
    %c0_i32_0 = arith.constant 0 : i32
    %c0_i32_1 = arith.constant 0 : i32
    return %c0_i32, %c0_i32_0 : i32, i32
  }
  func.func @transform_8(%arg0: i32) -> (i32, i32) {
    %c0_i32 = arith.constant 0 : i32
    %c0_i32_0 = arith.constant 0 : i32
    %c0_i32_1 = arith.constant 0 : i32
    return %c0_i32, %c0_i32_0 : i32, i32
  }
  func.func @transform_9(%arg0: i32) -> (i32, i32) {
    %c0_i32 = arith.constant 0 : i32
    %c0_i32_0 = arith.constant 0 : i32
    %c0_i32_1 = arith.constant 0 : i32
    return %c0_i32, %c0_i32_0 : i32, i32
  }
  func.func @transform_10(%arg0: i32) -> (i32, i32) {
    %c0_i32 = arith.constant 0 : i32
    %c0_i32_0 = arith.constant 0 : i32
    %c0_i32_1 = arith.constant 0 : i32
    return %c0_i32, %c0_i32_0 : i32, i32
  }
  func.func @transform_11(%arg0: i32) -> (i32, i32) {
    %c0_i32 = arith.constant 0 : i32
    %c0_i32_0 = arith.constant 0 : i32
    %c0_i32_1 = arith.constant 0 : i32
    return %c0_i32, %c0_i32_0 : i32, i32
  }
  func.func @transform_12(%arg0: i32) -> (i32, i32) {
    %c0_i32 = arith.constant 0 : i32
    %c0_i32_0 = arith.constant 0 : i32
    %c0_i32_1 = arith.constant 0 : i32
    return %c0_i32, %c0_i32_0 : i32, i32
  }
  func.func @transform_13(%arg0: i32) -> (i32, i32) {
    %c0_i32 = arith.constant 0 : i32
    %c0_i32_0 = arith.constant 0 : i32
    %c0_i32_1 = arith.constant 0 : i32
    return %c0_i32, %c0_i32_0 : i32, i32
  }
  func.func @transform_14(%arg0: i32) -> (i32, i32, i32) {
    %c0_i32 = arith.constant 0 : i32
    %c0_i32_0 = arith.constant 0 : i32
    %c0_i32_1 = arith.constant 0 : i32
    return %arg0, %c0_i32, %c0_i32_0 : i32, i32, i32
  }
  func.func @transform_15(%arg0: i32) -> (i32, i32, i32) {
    %c0_i32 = arith.constant 0 : i32
    %c0_i32_0 = arith.constant 0 : i32
    %c0_i32_1 = arith.constant 0 : i32
    return %arg0, %c0_i32, %c0_i32_0 : i32, i32, i32
  }
}

module attributes {stable_mosaic.version = 11 : i64} {
  func.func @_double_attention_kernel(%arg0: i32, %arg1: memref<1x8x32xbf16, #tpu.memory_space<vmem>>, %arg2: memref<1x8x32xbf16, #tpu.memory_space<vmem>>, %arg3: memref<32x96xbf16, #tpu.memory_space<vmem>>, %arg4: memref<32x96xbf16, #tpu.memory_space<vmem>>, %arg5: memref<1x32xf32, #tpu.memory_space<vmem>>, %arg6: memref<1x32xf32, #tpu.memory_space<vmem>>, %arg7: memref<1x32xf32, #tpu.memory_space<vmem>>, %arg8: memref<1x32xf32, #tpu.memory_space<vmem>>, %arg9: memref<1x32xf32, #tpu.memory_space<vmem>>, %arg10: memref<1x32xf32, #tpu.memory_space<vmem>>, %arg11: memref<1x32xf32, #tpu.memory_space<vmem>>, %arg12: memref<1x32xf32, #tpu.memory_space<vmem>>, %arg13: memref<32x128xbf16, #tpu.memory_space<vmem>>, %arg14: memref<32x128xbf16, #tpu.memory_space<vmem>>, %arg15: memref<1x8x128xf32, #tpu.memory_space<vmem>>, %arg16: memref<1x8x128xf32, #tpu.memory_space<vmem>>) attributes {dimension_semantics = [#tpu.dimension_semantics<parallel>], iteration_bounds = array<i64: 2>, scalar_prefetch = 0 : i64, scratch_operands = 0 : i64, tpu.core_type = #tpu.core_type<tc>, window_params = [{transform_indices = @transform_0, window_bounds = array<i64: 1, 8, 32>}, {transform_indices = @transform_1, window_bounds = array<i64: 1, 8, 32>}, {pipeline_mode = #tpu.pipeline_mode<synchronous>, transform_indices = @transform_2, window_bounds = array<i64: 32, 96>}, {pipeline_mode = #tpu.pipeline_mode<synchronous>, transform_indices = @transform_3, window_bounds = array<i64: 32, 96>}, {pipeline_mode = #tpu.pipeline_mode<synchronous>, transform_indices = @transform_4, window_bounds = array<i64: 1, 32>}, {pipeline_mode = #tpu.pipeline_mode<synchronous>, transform_indices = @transform_5, window_bounds = array<i64: 1, 32>}, {pipeline_mode = #tpu.pipeline_mode<synchronous>, transform_indices = @transform_6, window_bounds = array<i64: 1, 32>}, {pipeline_mode = #tpu.pipeline_mode<synchronous>, transform_indices = @transform_7, window_bounds = array<i64: 1, 32>}, {pipeline_mode = #tpu.pipeline_mode<synchronous>, transform_indices = @transform_8, window_bounds = array<i64: 1, 32>}, {pipeline_mode = #tpu.pipeline_mode<synchronous>, transform_indices = @transform_9, window_bounds = array<i64: 1, 32>}, {pipeline_mode = #tpu.pipeline_mode<synchronous>, transform_indices = @transform_10, window_bounds = array<i64: 1, 32>}, {pipeline_mode = #tpu.pipeline_mode<synchronous>, transform_indices = @transform_11, window_bounds = array<i64: 1, 32>}, {pipeline_mode = #tpu.pipeline_mode<synchronous>, transform_indices = @transform_12, window_bounds = array<i64: 32, 128>}, {pipeline_mode = #tpu.pipeline_mode<synchronous>, transform_indices = @transform_13, window_bounds = array<i64: 32, 128>}, {transform_indices = @transform_14, window_bounds = array<i64: 1, 8, 128>}, {transform_indices = @transform_15, window_bounds = array<i64: 1, 8, 128>}]} {
    %c0 = arith.constant 0 : index
    %c0_0 = arith.constant 0 : index
    %c0_1 = arith.constant 0 : index
    %0 = vector.load %arg1[%c0, %c0_0, %c0_1] : memref<1x8x32xbf16, #tpu.memory_space<vmem>>, vector<1x8x32xbf16>
    %1 = vector.shape_cast %0 : vector<1x8x32xbf16> to vector<8x32xbf16>
    %c0_2 = arith.constant 0 : index
    %c0_3 = arith.constant 0 : index
    %c0_4 = arith.constant 0 : index
    %2 = vector.load %arg2[%c0_2, %c0_3, %c0_4] : memref<1x8x32xbf16, #tpu.memory_space<vmem>>, vector<1x8x32xbf16>
    %3 = vector.shape_cast %2 : vector<1x8x32xbf16> to vector<8x32xbf16>
    %c0_5 = arith.constant 0 : index
    %c0_6 = arith.constant 0 : index
    %4 = vector.load %arg3[%c0_5, %c0_6] : memref<32x96xbf16, #tpu.memory_space<vmem>>, vector<32x96xbf16>
    %cst = arith.constant dense<0.000000e+00> : vector<8x96xf32>
    %5 = tpu.matmul %1, %4, %cst {dimension_numbers = #tpu.dot_dimension_numbers<[1], [0], [0], [1], [0, 0, 1, 1], [], []>} : vector<8x32xbf16>, vector<32x96xbf16>, vector<8x96xf32> -> vector<8x96xf32>
    %c0_7 = arith.constant 0 : index
    %c0_8 = arith.constant 0 : index
    %6 = vector.load %arg4[%c0_7, %c0_8] : memref<32x96xbf16, #tpu.memory_space<vmem>>, vector<32x96xbf16>
    %cst_9 = arith.constant dense<0.000000e+00> : vector<8x96xf32>
    %7 = tpu.matmul %3, %6, %cst_9 {dimension_numbers = #tpu.dot_dimension_numbers<[1], [0], [0], [1], [0, 0, 1, 1], [], []>} : vector<8x32xbf16>, vector<32x96xbf16>, vector<8x96xf32> -> vector<8x96xf32>
    %8 = vector.extract_strided_slice %5 {offsets = [0, 0], sizes = [8, 32], strides = [1, 1]} : vector<8x96xf32> to vector<8x32xf32>
    %c0_10 = arith.constant 0 : index
    %c0_11 = arith.constant 0 : index
    %9 = vector.load %arg5[%c0_10, %c0_11] : memref<1x32xf32, #tpu.memory_space<vmem>>, vector<1x32xf32>
    %c0_12 = arith.constant 0 : index
    %c0_13 = arith.constant 0 : index
    %10 = vector.load %arg6[%c0_12, %c0_13] : memref<1x32xf32, #tpu.memory_space<vmem>>, vector<1x32xf32>
    %cst_14 = arith.constant dense<0.000000e+00> : vector<8xf32>
    %11 = vector.multi_reduction <add>, %8, %cst_14 [1] : vector<8x32xf32> to vector<8xf32>
    %12 = vector.shape_cast %11 : vector<8xf32> to vector<8x1xf32>
    %cst_15 = arith.constant 3.200000e+01 : f32
    %13 = vector.broadcast %cst_15 : f32 to vector<8x1xf32>
    %14 = arith.divf %12, %13 : vector<8x1xf32>
    %15 = vector.broadcast %14 : vector<8x1xf32> to vector<8x32xf32>
    %16 = arith.subf %8, %15 : vector<8x32xf32>
    %17 = arith.mulf %16, %16 : vector<8x32xf32>
    %cst_16 = arith.constant dense<0.000000e+00> : vector<8xf32>
    %18 = vector.multi_reduction <add>, %17, %cst_16 [1] : vector<8x32xf32> to vector<8xf32>
    %19 = vector.shape_cast %18 : vector<8xf32> to vector<8x1xf32>
    %cst_17 = arith.constant 3.200000e+01 : f32
    %20 = vector.broadcast %cst_17 : f32 to vector<8x1xf32>
    %21 = arith.divf %19, %20 : vector<8x1xf32>
    %22 = vector.broadcast %14 : vector<8x1xf32> to vector<8x32xf32>
    %23 = arith.subf %8, %22 : vector<8x32xf32>
    %cst_18 = arith.constant 9.99999974E-6 : f32
    %24 = vector.broadcast %cst_18 : f32 to vector<8x1xf32>
    %25 = arith.addf %21, %24 : vector<8x1xf32>
    %26 = math.rsqrt %25 : vector<8x1xf32>
    %27 = vector.broadcast %26 : vector<8x1xf32> to vector<8x32xf32>
    %28 = arith.mulf %23, %27 : vector<8x32xf32>
    %29 = vector.broadcast %9 : vector<1x32xf32> to vector<8x32xf32>
    %30 = arith.mulf %28, %29 : vector<8x32xf32>
    %31 = vector.broadcast %10 : vector<1x32xf32> to vector<8x32xf32>
    %32 = arith.addf %30, %31 : vector<8x32xf32>
    %33 = arith.truncf %32 : vector<8x32xf32> to vector<8x32xbf16>
    %34 = vector.extract_strided_slice %5 {offsets = [0, 32], sizes = [8, 32], strides = [1, 1]} : vector<8x96xf32> to vector<8x32xf32>
    %c0_19 = arith.constant 0 : index
    %c0_20 = arith.constant 0 : index
    %35 = vector.load %arg7[%c0_19, %c0_20] : memref<1x32xf32, #tpu.memory_space<vmem>>, vector<1x32xf32>
    %c0_21 = arith.constant 0 : index
    %c0_22 = arith.constant 0 : index
    %36 = vector.load %arg8[%c0_21, %c0_22] : memref<1x32xf32, #tpu.memory_space<vmem>>, vector<1x32xf32>
    %cst_23 = arith.constant dense<0.000000e+00> : vector<8xf32>
    %37 = vector.multi_reduction <add>, %34, %cst_23 [1] : vector<8x32xf32> to vector<8xf32>
    %38 = vector.shape_cast %37 : vector<8xf32> to vector<8x1xf32>
    %cst_24 = arith.constant 3.200000e+01 : f32
    %39 = vector.broadcast %cst_24 : f32 to vector<8x1xf32>
    %40 = arith.divf %38, %39 : vector<8x1xf32>
    %41 = vector.broadcast %40 : vector<8x1xf32> to vector<8x32xf32>
    %42 = arith.subf %34, %41 : vector<8x32xf32>
    %43 = arith.mulf %42, %42 : vector<8x32xf32>
    %cst_25 = arith.constant dense<0.000000e+00> : vector<8xf32>
    %44 = vector.multi_reduction <add>, %43, %cst_25 [1] : vector<8x32xf32> to vector<8xf32>
    %45 = vector.shape_cast %44 : vector<8xf32> to vector<8x1xf32>
    %cst_26 = arith.constant 3.200000e+01 : f32
    %46 = vector.broadcast %cst_26 : f32 to vector<8x1xf32>
    %47 = arith.divf %45, %46 : vector<8x1xf32>
    %48 = vector.broadcast %40 : vector<8x1xf32> to vector<8x32xf32>
    %49 = arith.subf %34, %48 : vector<8x32xf32>
    %cst_27 = arith.constant 9.99999974E-6 : f32
    %50 = vector.broadcast %cst_27 : f32 to vector<8x1xf32>
    %51 = arith.addf %47, %50 : vector<8x1xf32>
    %52 = math.rsqrt %51 : vector<8x1xf32>
    %53 = vector.broadcast %52 : vector<8x1xf32> to vector<8x32xf32>
    %54 = arith.mulf %49, %53 : vector<8x32xf32>
    %55 = vector.broadcast %35 : vector<1x32xf32> to vector<8x32xf32>
    %56 = arith.mulf %54, %55 : vector<8x32xf32>
    %57 = vector.broadcast %36 : vector<1x32xf32> to vector<8x32xf32>
    %58 = arith.addf %56, %57 : vector<8x32xf32>
    %59 = arith.truncf %58 : vector<8x32xf32> to vector<8x32xbf16>
    %60 = vector.extract_strided_slice %5 {offsets = [0, 64], sizes = [8, 32], strides = [1, 1]} : vector<8x96xf32> to vector<8x32xf32>
    %61 = arith.truncf %60 : vector<8x32xf32> to vector<8x32xbf16>
    %62 = vector.extract_strided_slice %7 {offsets = [0, 0], sizes = [8, 32], strides = [1, 1]} : vector<8x96xf32> to vector<8x32xf32>
    %c0_28 = arith.constant 0 : index
    %c0_29 = arith.constant 0 : index
    %63 = vector.load %arg9[%c0_28, %c0_29] : memref<1x32xf32, #tpu.memory_space<vmem>>, vector<1x32xf32>
    %c0_30 = arith.constant 0 : index
    %c0_31 = arith.constant 0 : index
    %64 = vector.load %arg10[%c0_30, %c0_31] : memref<1x32xf32, #tpu.memory_space<vmem>>, vector<1x32xf32>
    %cst_32 = arith.constant dense<0.000000e+00> : vector<8xf32>
    %65 = vector.multi_reduction <add>, %62, %cst_32 [1] : vector<8x32xf32> to vector<8xf32>
    %66 = vector.shape_cast %65 : vector<8xf32> to vector<8x1xf32>
    %cst_33 = arith.constant 3.200000e+01 : f32
    %67 = vector.broadcast %cst_33 : f32 to vector<8x1xf32>
    %68 = arith.divf %66, %67 : vector<8x1xf32>
    %69 = vector.broadcast %68 : vector<8x1xf32> to vector<8x32xf32>
    %70 = arith.subf %62, %69 : vector<8x32xf32>
    %71 = arith.mulf %70, %70 : vector<8x32xf32>
    %cst_34 = arith.constant dense<0.000000e+00> : vector<8xf32>
    %72 = vector.multi_reduction <add>, %71, %cst_34 [1] : vector<8x32xf32> to vector<8xf32>
    %73 = vector.shape_cast %72 : vector<8xf32> to vector<8x1xf32>
    %cst_35 = arith.constant 3.200000e+01 : f32
    %74 = vector.broadcast %cst_35 : f32 to vector<8x1xf32>
    %75 = arith.divf %73, %74 : vector<8x1xf32>
    %76 = vector.broadcast %68 : vector<8x1xf32> to vector<8x32xf32>
    %77 = arith.subf %62, %76 : vector<8x32xf32>
    %cst_36 = arith.constant 9.99999974E-6 : f32
    %78 = vector.broadcast %cst_36 : f32 to vector<8x1xf32>
    %79 = arith.addf %75, %78 : vector<8x1xf32>
    %80 = math.rsqrt %79 : vector<8x1xf32>
    %81 = vector.broadcast %80 : vector<8x1xf32> to vector<8x32xf32>
    %82 = arith.mulf %77, %81 : vector<8x32xf32>
    %83 = vector.broadcast %63 : vector<1x32xf32> to vector<8x32xf32>
    %84 = arith.mulf %82, %83 : vector<8x32xf32>
    %85 = vector.broadcast %64 : vector<1x32xf32> to vector<8x32xf32>
    %86 = arith.addf %84, %85 : vector<8x32xf32>
    %87 = arith.truncf %86 : vector<8x32xf32> to vector<8x32xbf16>
    %88 = vector.extract_strided_slice %7 {offsets = [0, 32], sizes = [8, 32], strides = [1, 1]} : vector<8x96xf32> to vector<8x32xf32>
    %c0_37 = arith.constant 0 : index
    %c0_38 = arith.constant 0 : index
    %89 = vector.load %arg11[%c0_37, %c0_38] : memref<1x32xf32, #tpu.memory_space<vmem>>, vector<1x32xf32>
    %c0_39 = arith.constant 0 : index
    %c0_40 = arith.constant 0 : index
    %90 = vector.load %arg12[%c0_39, %c0_40] : memref<1x32xf32, #tpu.memory_space<vmem>>, vector<1x32xf32>
    %cst_41 = arith.constant dense<0.000000e+00> : vector<8xf32>
    %91 = vector.multi_reduction <add>, %88, %cst_41 [1] : vector<8x32xf32> to vector<8xf32>
    %92 = vector.shape_cast %91 : vector<8xf32> to vector<8x1xf32>
    %cst_42 = arith.constant 3.200000e+01 : f32
    %93 = vector.broadcast %cst_42 : f32 to vector<8x1xf32>
    %94 = arith.divf %92, %93 : vector<8x1xf32>
    %95 = vector.broadcast %94 : vector<8x1xf32> to vector<8x32xf32>
    %96 = arith.subf %88, %95 : vector<8x32xf32>
    %97 = arith.mulf %96, %96 : vector<8x32xf32>
    %cst_43 = arith.constant dense<0.000000e+00> : vector<8xf32>
    %98 = vector.multi_reduction <add>, %97, %cst_43 [1] : vector<8x32xf32> to vector<8xf32>
    %99 = vector.shape_cast %98 : vector<8xf32> to vector<8x1xf32>
    %cst_44 = arith.constant 3.200000e+01 : f32
    %100 = vector.broadcast %cst_44 : f32 to vector<8x1xf32>
    %101 = arith.divf %99, %100 : vector<8x1xf32>
    %102 = vector.broadcast %94 : vector<8x1xf32> to vector<8x32xf32>
    %103 = arith.subf %88, %102 : vector<8x32xf32>
    %cst_45 = arith.constant 9.99999974E-6 : f32
    %104 = vector.broadcast %cst_45 : f32 to vector<8x1xf32>
    %105 = arith.addf %101, %104 : vector<8x1xf32>
    %106 = math.rsqrt %105 : vector<8x1xf32>
    %107 = vector.broadcast %106 : vector<8x1xf32> to vector<8x32xf32>
    %108 = arith.mulf %103, %107 : vector<8x32xf32>
    %109 = vector.broadcast %89 : vector<1x32xf32> to vector<8x32xf32>
    %110 = arith.mulf %108, %109 : vector<8x32xf32>
    %111 = vector.broadcast %90 : vector<1x32xf32> to vector<8x32xf32>
    %112 = arith.addf %110, %111 : vector<8x32xf32>
    %113 = arith.truncf %112 : vector<8x32xf32> to vector<8x32xbf16>
    %114 = vector.extract_strided_slice %7 {offsets = [0, 64], sizes = [8, 32], strides = [1, 1]} : vector<8x96xf32> to vector<8x32xf32>
    %115 = arith.truncf %114 : vector<8x32xf32> to vector<8x32xbf16>
    %116 = vector.extract_strided_slice %33 {offsets = [0, 0], sizes = [8, 8], strides = [1, 1]} : vector<8x32xbf16> to vector<8x8xbf16>
    %117 = vector.shape_cast %116 : vector<8x8xbf16> to vector<1x8x8xbf16>
    %118 = vector.extract_strided_slice %87 {offsets = [0, 0], sizes = [8, 8], strides = [1, 1]} : vector<8x32xbf16> to vector<8x8xbf16>
    %119 = vector.shape_cast %118 : vector<8x8xbf16> to vector<1x8x8xbf16>
    %120 = tpu.concatenate %117, %119 in 1 : vector<1x8x8xbf16>, vector<1x8x8xbf16> -> vector<1x16x8xbf16>
    %121 = vector.extract_strided_slice %33 {offsets = [0, 8], sizes = [8, 8], strides = [1, 1]} : vector<8x32xbf16> to vector<8x8xbf16>
    %122 = vector.shape_cast %121 : vector<8x8xbf16> to vector<1x8x8xbf16>
    %123 = vector.extract_strided_slice %87 {offsets = [0, 8], sizes = [8, 8], strides = [1, 1]} : vector<8x32xbf16> to vector<8x8xbf16>
    %124 = vector.shape_cast %123 : vector<8x8xbf16> to vector<1x8x8xbf16>
    %125 = tpu.concatenate %122, %124 in 1 : vector<1x8x8xbf16>, vector<1x8x8xbf16> -> vector<1x16x8xbf16>
    %126 = vector.extract_strided_slice %33 {offsets = [0, 16], sizes = [8, 8], strides = [1, 1]} : vector<8x32xbf16> to vector<8x8xbf16>
    %127 = vector.shape_cast %126 : vector<8x8xbf16> to vector<1x8x8xbf16>
    %128 = vector.extract_strided_slice %87 {offsets = [0, 16], sizes = [8, 8], strides = [1, 1]} : vector<8x32xbf16> to vector<8x8xbf16>
    %129 = vector.shape_cast %128 : vector<8x8xbf16> to vector<1x8x8xbf16>
    %130 = tpu.concatenate %127, %129 in 1 : vector<1x8x8xbf16>, vector<1x8x8xbf16> -> vector<1x16x8xbf16>
    %131 = vector.extract_strided_slice %33 {offsets = [0, 24], sizes = [8, 8], strides = [1, 1]} : vector<8x32xbf16> to vector<8x8xbf16>
    %132 = vector.shape_cast %131 : vector<8x8xbf16> to vector<1x8x8xbf16>
    %133 = vector.extract_strided_slice %87 {offsets = [0, 24], sizes = [8, 8], strides = [1, 1]} : vector<8x32xbf16> to vector<8x8xbf16>
    %134 = vector.shape_cast %133 : vector<8x8xbf16> to vector<1x8x8xbf16>
    %135 = tpu.concatenate %132, %134 in 1 : vector<1x8x8xbf16>, vector<1x8x8xbf16> -> vector<1x16x8xbf16>
    %136 = vector.shape_cast %120 : vector<1x16x8xbf16> to vector<1x1x16x8xbf16>
    %137 = vector.shape_cast %125 : vector<1x16x8xbf16> to vector<1x1x16x8xbf16>
    %138 = vector.shape_cast %130 : vector<1x16x8xbf16> to vector<1x1x16x8xbf16>
    %139 = vector.shape_cast %135 : vector<1x16x8xbf16> to vector<1x1x16x8xbf16>
    %140 = tpu.concatenate %136, %137, %138, %139 in 0 : vector<1x1x16x8xbf16>, vector<1x1x16x8xbf16>, vector<1x1x16x8xbf16>, vector<1x1x16x8xbf16> -> vector<4x1x16x8xbf16>
    %141 = vector.shape_cast %140 : vector<4x1x16x8xbf16> to vector<4x16x8xbf16>
    %142 = vector.extract_strided_slice %59 {offsets = [0, 0], sizes = [8, 8], strides = [1, 1]} : vector<8x32xbf16> to vector<8x8xbf16>
    %143 = vector.shape_cast %142 : vector<8x8xbf16> to vector<1x8x8xbf16>
    %144 = vector.extract_strided_slice %113 {offsets = [0, 0], sizes = [8, 8], strides = [1, 1]} : vector<8x32xbf16> to vector<8x8xbf16>
    %145 = vector.shape_cast %144 : vector<8x8xbf16> to vector<1x8x8xbf16>
    %146 = tpu.concatenate %143, %145 in 1 : vector<1x8x8xbf16>, vector<1x8x8xbf16> -> vector<1x16x8xbf16>
    %147 = vector.extract_strided_slice %59 {offsets = [0, 8], sizes = [8, 8], strides = [1, 1]} : vector<8x32xbf16> to vector<8x8xbf16>
    %148 = vector.shape_cast %147 : vector<8x8xbf16> to vector<1x8x8xbf16>
    %149 = vector.extract_strided_slice %113 {offsets = [0, 8], sizes = [8, 8], strides = [1, 1]} : vector<8x32xbf16> to vector<8x8xbf16>
    %150 = vector.shape_cast %149 : vector<8x8xbf16> to vector<1x8x8xbf16>
    %151 = tpu.concatenate %148, %150 in 1 : vector<1x8x8xbf16>, vector<1x8x8xbf16> -> vector<1x16x8xbf16>
    %152 = vector.extract_strided_slice %59 {offsets = [0, 16], sizes = [8, 8], strides = [1, 1]} : vector<8x32xbf16> to vector<8x8xbf16>
    %153 = vector.shape_cast %152 : vector<8x8xbf16> to vector<1x8x8xbf16>
    %154 = vector.extract_strided_slice %113 {offsets = [0, 16], sizes = [8, 8], strides = [1, 1]} : vector<8x32xbf16> to vector<8x8xbf16>
    %155 = vector.shape_cast %154 : vector<8x8xbf16> to vector<1x8x8xbf16>
    %156 = tpu.concatenate %153, %155 in 1 : vector<1x8x8xbf16>, vector<1x8x8xbf16> -> vector<1x16x8xbf16>
    %157 = vector.extract_strided_slice %59 {offsets = [0, 24], sizes = [8, 8], strides = [1, 1]} : vector<8x32xbf16> to vector<8x8xbf16>
    %158 = vector.shape_cast %157 : vector<8x8xbf16> to vector<1x8x8xbf16>
    %159 = vector.extract_strided_slice %113 {offsets = [0, 24], sizes = [8, 8], strides = [1, 1]} : vector<8x32xbf16> to vector<8x8xbf16>
    %160 = vector.shape_cast %159 : vector<8x8xbf16> to vector<1x8x8xbf16>
    %161 = tpu.concatenate %158, %160 in 1 : vector<1x8x8xbf16>, vector<1x8x8xbf16> -> vector<1x16x8xbf16>
    %162 = vector.shape_cast %146 : vector<1x16x8xbf16> to vector<1x1x16x8xbf16>
    %163 = vector.shape_cast %151 : vector<1x16x8xbf16> to vector<1x1x16x8xbf16>
    %164 = vector.shape_cast %156 : vector<1x16x8xbf16> to vector<1x1x16x8xbf16>
    %165 = vector.shape_cast %161 : vector<1x16x8xbf16> to vector<1x1x16x8xbf16>
    %166 = tpu.concatenate %162, %163, %164, %165 in 0 : vector<1x1x16x8xbf16>, vector<1x1x16x8xbf16>, vector<1x1x16x8xbf16>, vector<1x1x16x8xbf16> -> vector<4x1x16x8xbf16>
    %167 = vector.shape_cast %166 : vector<4x1x16x8xbf16> to vector<4x16x8xbf16>
    %168 = vector.extract_strided_slice %61 {offsets = [0, 0], sizes = [8, 8], strides = [1, 1]} : vector<8x32xbf16> to vector<8x8xbf16>
    %169 = vector.shape_cast %168 : vector<8x8xbf16> to vector<1x8x8xbf16>
    %170 = vector.extract_strided_slice %115 {offsets = [0, 0], sizes = [8, 8], strides = [1, 1]} : vector<8x32xbf16> to vector<8x8xbf16>
    %171 = vector.shape_cast %170 : vector<8x8xbf16> to vector<1x8x8xbf16>
    %172 = tpu.concatenate %169, %171 in 1 : vector<1x8x8xbf16>, vector<1x8x8xbf16> -> vector<1x16x8xbf16>
    %173 = vector.extract_strided_slice %61 {offsets = [0, 8], sizes = [8, 8], strides = [1, 1]} : vector<8x32xbf16> to vector<8x8xbf16>
    %174 = vector.shape_cast %173 : vector<8x8xbf16> to vector<1x8x8xbf16>
    %175 = vector.extract_strided_slice %115 {offsets = [0, 8], sizes = [8, 8], strides = [1, 1]} : vector<8x32xbf16> to vector<8x8xbf16>
    %176 = vector.shape_cast %175 : vector<8x8xbf16> to vector<1x8x8xbf16>
    %177 = tpu.concatenate %174, %176 in 1 : vector<1x8x8xbf16>, vector<1x8x8xbf16> -> vector<1x16x8xbf16>
    %178 = vector.extract_strided_slice %61 {offsets = [0, 16], sizes = [8, 8], strides = [1, 1]} : vector<8x32xbf16> to vector<8x8xbf16>
    %179 = vector.shape_cast %178 : vector<8x8xbf16> to vector<1x8x8xbf16>
    %180 = vector.extract_strided_slice %115 {offsets = [0, 16], sizes = [8, 8], strides = [1, 1]} : vector<8x32xbf16> to vector<8x8xbf16>
    %181 = vector.shape_cast %180 : vector<8x8xbf16> to vector<1x8x8xbf16>
    %182 = tpu.concatenate %179, %181 in 1 : vector<1x8x8xbf16>, vector<1x8x8xbf16> -> vector<1x16x8xbf16>
    %183 = vector.extract_strided_slice %61 {offsets = [0, 24], sizes = [8, 8], strides = [1, 1]} : vector<8x32xbf16> to vector<8x8xbf16>
    %184 = vector.shape_cast %183 : vector<8x8xbf16> to vector<1x8x8xbf16>
    %185 = vector.extract_strided_slice %115 {offsets = [0, 24], sizes = [8, 8], strides = [1, 1]} : vector<8x32xbf16> to vector<8x8xbf16>
    %186 = vector.shape_cast %185 : vector<8x8xbf16> to vector<1x8x8xbf16>
    %187 = tpu.concatenate %184, %186 in 1 : vector<1x8x8xbf16>, vector<1x8x8xbf16> -> vector<1x16x8xbf16>
    %188 = vector.shape_cast %172 : vector<1x16x8xbf16> to vector<1x1x16x8xbf16>
    %189 = vector.shape_cast %177 : vector<1x16x8xbf16> to vector<1x1x16x8xbf16>
    %190 = vector.shape_cast %182 : vector<1x16x8xbf16> to vector<1x1x16x8xbf16>
    %191 = vector.shape_cast %187 : vector<1x16x8xbf16> to vector<1x1x16x8xbf16>
    %192 = tpu.concatenate %188, %189, %190, %191 in 0 : vector<1x1x16x8xbf16>, vector<1x1x16x8xbf16>, vector<1x1x16x8xbf16>, vector<1x1x16x8xbf16> -> vector<4x1x16x8xbf16>
    %193 = vector.shape_cast %192 : vector<4x1x16x8xbf16> to vector<4x16x8xbf16>
    %cst_46 = arith.constant dense<0.000000e+00> : vector<4x16x16xf32>
    %194 = tpu.matmul %141, %167, %cst_46 {dimension_numbers = #tpu.dot_dimension_numbers<[2], [2], [1], [1], [0, 0, 0, 1, 1, 1], [0], [0]>} : vector<4x16x8xbf16>, vector<4x16x8xbf16>, vector<4x16x16xf32> -> vector<4x16x16xf32>
    %cst_47 = arith.constant dense<0xFF800000> : vector<4x16xf32>
    %195 = vector.multi_reduction <maximumf>, %194, %cst_47 [2] : vector<4x16x16xf32> to vector<4x16xf32>
    %196 = vector.shape_cast %195 : vector<4x16xf32> to vector<4x16x1xf32>
    %197 = vector.broadcast %196 : vector<4x16x1xf32> to vector<4x16x16xf32>
    %198 = arith.subf %194, %197 : vector<4x16x16xf32>
    %199 = math.exp %198 : vector<4x16x16xf32>
    %cst_48 = arith.constant dense<0.000000e+00> : vector<4x16xf32>
    %200 = vector.multi_reduction <add>, %199, %cst_48 [2] : vector<4x16x16xf32> to vector<4x16xf32>
    %201 = vector.shape_cast %200 : vector<4x16xf32> to vector<4x16x1xf32>
    %202 = arith.truncf %199 : vector<4x16x16xf32> to vector<4x16x16xbf16>
    %cst_49 = arith.constant dense<0.000000e+00> : vector<4x16x8xf32>
    %203 = tpu.matmul %202, %193, %cst_49 {dimension_numbers = #tpu.dot_dimension_numbers<[2], [1], [1], [2], [0, 0, 0, 1, 1, 2], [0], [0]>} : vector<4x16x16xbf16>, vector<4x16x8xbf16>, vector<4x16x8xf32> -> vector<4x16x8xf32>
    %204 = tpu.reciprocal %201 {approx = true} : vector<4x16x1xf32> -> vector<4x16x1xf32>
    %205 = vector.broadcast %204 : vector<4x16x1xf32> to vector<4x16x8xf32>
    %206 = arith.mulf %203, %205 : vector<4x16x8xf32>
    %207 = arith.truncf %206 : vector<4x16x8xf32> to vector<4x16x8xbf16>
    %208 = vector.shape_cast %207 : vector<4x16x8xbf16> to vector<4x1x16x8xbf16>
    %209 = vector.extract_strided_slice %208 {offsets = [0, 0, 0, 0], sizes = [1, 1, 8, 8], strides = [1, 1, 1, 1]} : vector<4x1x16x8xbf16> to vector<1x1x8x8xbf16>
    %210 = vector.shape_cast %209 : vector<1x1x8x8xbf16> to vector<1x8x8xbf16>
    %211 = vector.shape_cast %210 : vector<1x8x8xbf16> to vector<8x8xbf16>
    %212 = vector.extract_strided_slice %208 {offsets = [1, 0, 0, 0], sizes = [1, 1, 8, 8], strides = [1, 1, 1, 1]} : vector<4x1x16x8xbf16> to vector<1x1x8x8xbf16>
    %213 = vector.shape_cast %212 : vector<1x1x8x8xbf16> to vector<1x8x8xbf16>
    %214 = vector.shape_cast %213 : vector<1x8x8xbf16> to vector<8x8xbf16>
    %215 = vector.extract_strided_slice %208 {offsets = [2, 0, 0, 0], sizes = [1, 1, 8, 8], strides = [1, 1, 1, 1]} : vector<4x1x16x8xbf16> to vector<1x1x8x8xbf16>
    %216 = vector.shape_cast %215 : vector<1x1x8x8xbf16> to vector<1x8x8xbf16>
    %217 = vector.shape_cast %216 : vector<1x8x8xbf16> to vector<8x8xbf16>
    %218 = vector.extract_strided_slice %208 {offsets = [3, 0, 0, 0], sizes = [1, 1, 8, 8], strides = [1, 1, 1, 1]} : vector<4x1x16x8xbf16> to vector<1x1x8x8xbf16>
    %219 = vector.shape_cast %218 : vector<1x1x8x8xbf16> to vector<1x8x8xbf16>
    %220 = vector.shape_cast %219 : vector<1x8x8xbf16> to vector<8x8xbf16>
    %221 = tpu.concatenate %211, %214, %217, %220 in 1 : vector<8x8xbf16>, vector<8x8xbf16>, vector<8x8xbf16>, vector<8x8xbf16> -> vector<8x32xbf16>
    %222 = vector.extract_strided_slice %208 {offsets = [0, 0, 8, 0], sizes = [1, 1, 8, 8], strides = [1, 1, 1, 1]} : vector<4x1x16x8xbf16> to vector<1x1x8x8xbf16>
    %223 = vector.shape_cast %222 : vector<1x1x8x8xbf16> to vector<1x8x8xbf16>
    %224 = vector.shape_cast %223 : vector<1x8x8xbf16> to vector<8x8xbf16>
    %225 = vector.extract_strided_slice %208 {offsets = [1, 0, 8, 0], sizes = [1, 1, 8, 8], strides = [1, 1, 1, 1]} : vector<4x1x16x8xbf16> to vector<1x1x8x8xbf16>
    %226 = vector.shape_cast %225 : vector<1x1x8x8xbf16> to vector<1x8x8xbf16>
    %227 = vector.shape_cast %226 : vector<1x8x8xbf16> to vector<8x8xbf16>
    %228 = vector.extract_strided_slice %208 {offsets = [2, 0, 8, 0], sizes = [1, 1, 8, 8], strides = [1, 1, 1, 1]} : vector<4x1x16x8xbf16> to vector<1x1x8x8xbf16>
    %229 = vector.shape_cast %228 : vector<1x1x8x8xbf16> to vector<1x8x8xbf16>
    %230 = vector.shape_cast %229 : vector<1x8x8xbf16> to vector<8x8xbf16>
    %231 = vector.extract_strided_slice %208 {offsets = [3, 0, 8, 0], sizes = [1, 1, 8, 8], strides = [1, 1, 1, 1]} : vector<4x1x16x8xbf16> to vector<1x1x8x8xbf16>
    %232 = vector.shape_cast %231 : vector<1x1x8x8xbf16> to vector<1x8x8xbf16>
    %233 = vector.shape_cast %232 : vector<1x8x8xbf16> to vector<8x8xbf16>
    %234 = tpu.concatenate %224, %227, %230, %233 in 1 : vector<8x8xbf16>, vector<8x8xbf16>, vector<8x8xbf16>, vector<8x8xbf16> -> vector<8x32xbf16>
    %c0_50 = arith.constant 0 : index
    %c0_51 = arith.constant 0 : index
    %235 = vector.load %arg13[%c0_50, %c0_51] : memref<32x128xbf16, #tpu.memory_space<vmem>>, vector<32x128xbf16>
    %cst_52 = arith.constant dense<0.000000e+00> : vector<8x128xf32>
    %236 = tpu.matmul %221, %235, %cst_52 {dimension_numbers = #tpu.dot_dimension_numbers<[1], [0], [0], [1], [0, 0, 1, 1], [], []>} : vector<8x32xbf16>, vector<32x128xbf16>, vector<8x128xf32> -> vector<8x128xf32>
    %c0_53 = arith.constant 0 : index
    %c0_54 = arith.constant 0 : index
    %237 = vector.load %arg14[%c0_53, %c0_54] : memref<32x128xbf16, #tpu.memory_space<vmem>>, vector<32x128xbf16>
    %cst_55 = arith.constant dense<0.000000e+00> : vector<8x128xf32>
    %238 = tpu.matmul %234, %237, %cst_55 {dimension_numbers = #tpu.dot_dimension_numbers<[1], [0], [0], [1], [0, 0, 1, 1], [], []>} : vector<8x32xbf16>, vector<32x128xbf16>, vector<8x128xf32> -> vector<8x128xf32>
    %239 = vector.shape_cast %236 : vector<8x128xf32> to vector<1x8x128xf32>
    %c0_56 = arith.constant 0 : index
    %c0_57 = arith.constant 0 : index
    %c0_58 = arith.constant 0 : index
    %240 = vector.load %arg15[%c0_56, %c0_57, %c0_58] : memref<1x8x128xf32, #tpu.memory_space<vmem>>, vector<1x8x128xf32>
    tpu.vector_store %arg15[%c0_56, %c0_57, %c0_58], %239 {strides = array<i32>} : memref<1x8x128xf32, #tpu.memory_space<vmem>>, vector<1x8x128xf32>,
    %241 = vector.shape_cast %238 : vector<8x128xf32> to vector<1x8x128xf32>
    %c0_59 = arith.constant 0 : index
    %c0_60 = arith.constant 0 : index
    %c0_61 = arith.constant 0 : index
    %242 = vector.load %arg16[%c0_59, %c0_60, %c0_61] : memref<1x8x128xf32, #tpu.memory_space<vmem>>, vector<1x8x128xf32>
    tpu.vector_store %arg16[%c0_59, %c0_60, %c0_61], %241 {strides = array<i32>} : memref<1x8x128xf32, #tpu.memory_space<vmem>>, vector<1x8x128xf32>,
    return
  }
  func.func @transform_0(%arg0: i32) -> (i32, i32, i32) {
    %c0_i32 = arith.constant 0 : i32
    %c0_i32_0 = arith.constant 0 : i32
    %c0_i32_1 = arith.constant 0 : i32
    return %arg0, %c0_i32, %c0_i32_0 : i32, i32, i32
  }
  func.func @transform_1(%arg0: i32) -> (i32, i32, i32) {
    %c0_i32 = arith.constant 0 : i32
    %c0_i32_0 = arith.constant 0 : i32
    %c0_i32_1 = arith.constant 0 : i32
    return %arg0, %c0_i32, %c0_i32_0 : i32, i32, i32
  }
  func.func @transform_2(%arg0: i32) -> (i32, i32) {
    %c0_i32 = arith.constant 0 : i32
    %c0_i32_0 = arith.constant 0 : i32
    %c0_i32_1 = arith.constant 0 : i32
    return %c0_i32, %c0_i32_0 : i32, i32
  }
  func.func @transform_3(%arg0: i32) -> (i32, i32) {
    %c0_i32 = arith.constant 0 : i32
    %c0_i32_0 = arith.constant 0 : i32
    %c0_i32_1 = arith.constant 0 : i32
    return %c0_i32, %c0_i32_0 : i32, i32
  }
  func.func @transform_4(%arg0: i32) -> (i32, i32) {
    %c0_i32 = arith.constant 0 : i32
    %c0_i32_0 = arith.constant 0 : i32
    %c0_i32_1 = arith.constant 0 : i32
    return %c0_i32, %c0_i32_0 : i32, i32
  }
  func.func @transform_5(%arg0: i32) -> (i32, i32) {
    %c0_i32 = arith.constant 0 : i32
    %c0_i32_0 = arith.constant 0 : i32
    %c0_i32_1 = arith.constant 0 : i32
    return %c0_i32, %c0_i32_0 : i32, i32
  }
  func.func @transform_6(%arg0: i32) -> (i32, i32) {
    %c0_i32 = arith.constant 0 : i32
    %c0_i32_0 = arith.constant 0 : i32
    %c0_i32_1 = arith.constant 0 : i32
    return %c0_i32, %c0_i32_0 : i32, i32
  }
  func.func @transform_7(%arg0: i32) -> (i32, i32) {
    %c0_i32 = arith.constant 0 : i32
    %c0_i32_0 = arith.constant 0 : i32
    %c0_i32_1 = arith.constant 0 : i32
    return %c0_i32, %c0_i32_0 : i32, i32
  }
  func.func @transform_8(%arg0: i32) -> (i32, i32) {
    %c0_i32 = arith.constant 0 : i32
    %c0_i32_0 = arith.constant 0 : i32
    %c0_i32_1 = arith.constant 0 : i32
    return %c0_i32, %c0_i32_0 : i32, i32
  }
  func.func @transform_9(%arg0: i32) -> (i32, i32) {
    %c0_i32 = arith.constant 0 : i32
    %c0_i32_0 = arith.constant 0 : i32
    %c0_i32_1 = arith.constant 0 : i32
    return %c0_i32, %c0_i32_0 : i32, i32
  }
  func.func @transform_10(%arg0: i32) -> (i32, i32) {
    %c0_i32 = arith.constant 0 : i32
    %c0_i32_0 = arith.constant 0 : i32
    %c0_i32_1 = arith.constant 0 : i32
    return %c0_i32, %c0_i32_0 : i32, i32
  }
  func.func @transform_11(%arg0: i32) -> (i32, i32) {
    %c0_i32 = arith.constant 0 : i32
    %c0_i32_0 = arith.constant 0 : i32
    %c0_i32_1 = arith.constant 0 : i32
    return %c0_i32, %c0_i32_0 : i32, i32
  }
  func.func @transform_12(%arg0: i32) -> (i32, i32) {
    %c0_i32 = arith.constant 0 : i32
    %c0_i32_0 = arith.constant 0 : i32
    %c0_i32_1 = arith.constant 0 : i32
    return %c0_i32, %c0_i32_0 : i32, i32
  }
  func.func @transform_13(%arg0: i32) -> (i32, i32) {
    %c0_i32 = arith.constant 0 : i32
    %c0_i32_0 = arith.constant 0 : i32
    %c0_i32_1 = arith.constant 0 : i32
    return %c0_i32, %c0_i32_0 : i32, i32
  }
  func.func @transform_14(%arg0: i32) -> (i32, i32, i32) {
    %c0_i32 = arith.constant 0 : i32
    %c0_i32_0 = arith.constant 0 : i32
    %c0_i32_1 = arith.constant 0 : i32
    return %arg0, %c0_i32, %c0_i32_0 : i32, i32, i32
  }
  func.func @transform_15(%arg0: i32) -> (i32, i32, i32) {
    %c0_i32 = arith.constant 0 : i32
    %c0_i32_0 = arith.constant 0 : i32
    %c0_i32_1 = arith.constant 0 : i32
    return %arg0, %c0_i32, %c0_i32_0 : i32, i32, i32
  }
}

</mosaic_0001>

<llo_original>
// kernel: tpu_custom_call.1
$region0: #{tpu_custom_call.1}
  #allocation0 [shape = 'u32[]', space=smem, size = 0x4, offset = 0x4, fixed_abs, tag = 'smem constant byte address 0x4 - core index']
  #allocation1 [shape = 'u32[144,128]{1,0:T(1,128)}', space=vmem, size = 0x12000, scoped, tag = 'internal scratch']
  %s0 = inlined_call_operand.hbm [shape: bf16[2,8,32], index: 0, kind: input, shape index: {}]
  %s1 = inlined_call_operand.hbm [shape: bf16[2,8,32], index: 1, kind: input, shape index: {}]
  %s2 = inlined_call_operand.hbm [shape: bf16[32,96], index: 2, kind: input, shape index: {}]
  %s3 = inlined_call_operand.hbm [shape: bf16[32,96], index: 3, kind: input, shape index: {}]
  %s4 = inlined_call_operand.vmem [shape: f32[1,32], index: 4, kind: input, shape index: {}]
  %s5 = inlined_call_operand.vmem [shape: f32[1,32], index: 5, kind: input, shape index: {}]
  %s6 = inlined_call_operand.hbm [shape: f32[1,32], index: 6, kind: input, shape index: {}]
  %s7 = inlined_call_operand.hbm [shape: f32[1,32], index: 7, kind: input, shape index: {}]
  %s8 = inlined_call_operand.hbm [shape: f32[1,32], index: 8, kind: input, shape index: {}]
  %s9 = inlined_call_operand.hbm [shape: f32[1,32], index: 9, kind: input, shape index: {}]
  %s10 = inlined_call_operand.vmem [shape: f32[1,32], index: 10, kind: input, shape index: {}]
  %s11 = inlined_call_operand.vmem [shape: f32[1,32], index: 11, kind: input, shape index: {}]
  %s12 = inlined_call_operand.vmem [shape: bf16[32,128], index: 12, kind: input, shape index: {}]
  %s13 = inlined_call_operand.vmem [shape: bf16[32,128], index: 13, kind: input, shape index: {}]
  %s14 = inlined_call_operand.hbm [shape: f32[2,8,128], index: 14, kind: output, shape index: {0}]
  %s15 = inlined_call_operand.hbm [shape: f32[2,8,128], index: 15, kind: output, shape index: {1}]
  %16 = xla_tuple %s14, %s15
  %s17 = sld [smem:[#allocation0]]
  $region129: #{tpu_custom_call.1} parent=0
    _
  %s19 = ssub.s32 1, %s17
  %s20 = scalar_select 0, %s19, %s17
  $region1: #{tpu_custom_call.1} parent=0
    #allocation2 [shape = 'u8[4096]{0}', space=vmem, size = 0x1000, scoped, tag = 'input window, operand 0']
    #allocation3 [shape = 's32[2]{0}', space=sflag, size = 0x8, scoped, tag = 'scoped memory for tpu_custom_call.1']
    #allocation4 [shape = 's32[2]{0}', space=sflag, size = 0x8, scoped, tag = 'scoped memory for tpu_custom_call.1']
    #allocation5 [shape = 'u8[4096]{0}', space=vmem, size = 0x1000, scoped, tag = 'input window, operand 1']
    #allocation6 [shape = 's32[2]{0}', space=sflag, size = 0x8, scoped, tag = 'scoped memory for tpu_custom_call.1']
    #allocation7 [shape = 'u8[8192]{0}', space=vmem, size = 0x2000, scoped, tag = 'input window, operand 2, single buffered']
    #allocation8 [shape = 'u8[8192]{0}', space=vmem, size = 0x2000, scoped, tag = 'input window, operand 3, single buffered']
    #allocation9 [shape = 's32[1]{0}', space=sflag, size = 0x4, scoped, tag = 'scoped memory for tpu_custom_call.1']
    #allocation10 [shape = 'u8[512]{0}', space=vmem, size = 0x400, scoped, tag = 'input window, operand 6, single buffered']
    #allocation11 [shape = 'u8[512]{0}', space=vmem, size = 0x400, scoped, tag = 'input window, operand 7, single buffered']
    #allocation12 [shape = 's32[1]{0}', space=sflag, size = 0x4, scoped, tag = 'scoped memory for tpu_custom_call.1']
    #allocation13 [shape = 'u8[512]{0}', space=vmem, size = 0x400, scoped, tag = 'input window, operand 8, single buffered']
    #allocation14 [shape = 'u8[512]{0}', space=vmem, size = 0x400, scoped, tag = 'input window, operand 9, single buffered']
    #allocation15 [shape = 's32[1]{0}', space=sflag, size = 0x4, scoped, tag = 'scoped memory for tpu_custom_call.1']
    #allocation16 [shape = 'u8[8192]{0}', space=vmem, size = 0x2000, scoped, tag = 'output window, operand 0']
    #allocation17 [shape = 'u8[8192]{0}', space=vmem, size = 0x2000, scoped, tag = 'output window, operand 1']
    #allocation18 [shape = 's32[2]{0}', space=sflag, size = 0x8, scoped, tag = 'scoped memory for tpu_custom_call.1']
    %21 = vsyncpa [#allocation3], 0
    %s22 = scalar_lea.sflag [#allocation3], 1
    %23 = vsyncpa %s22, 0
    %24 = vsyncpa [#allocation6], 0
    %s25 = scalar_lea.sflag [#allocation6], 1
    %26 = vsyncpa %s25, 0
    %27 = vsyncpa [#allocation9], 0
    %28 = vsyncpa [#allocation12], 0
    %29 = vsyncpa [#allocation15], 0
    %30 = vsyncpa [#allocation4], 0
    %s31 = scalar_lea.sflag [#allocation4], 1
    %32 = vsyncpa %s31, 0
    %33 = vsyncpa [#allocation18], 0
    %s34 = scalar_lea.sflag [#allocation18], 1
    %35 = vsyncpa %s34, 0
    loop: start=0, step=1, limit=4
    $region2: #{tpu_custom_call.1} parent=1 // loop_pre_header
      _
    $region3: #{tpu_custom_call.1} parent=1 // loop_header
      %s37 = sphi 0, %s41
      %p38 = scmp.ge.s32.totalorder %s37, 4
      %s47 = sphi 0, %s49
      %s50 = sphi 0, %s47
      %s51 = sphi 0, %s50
      %s67 = sphi 0, %s51
      %s73 = sphi 0, %s75
      %s76 = sphi 0, %s73
      %s77 = sphi 0, %s76
      %s93 = sphi 0, %s77
      %s97 = sphi 0, %s97
      %s99 = sphi 0, %s97
      %s100 = sphi 0, %s99
      %s114 = sphi 0, %s100
      %s118 = sphi 0, %s118
      %s120 = sphi 0, %s118
      %s121 = sphi 0, %s120
      %s135 = sphi 0, %s121
      %s139 = sphi 0, %s139
      %s141 = sphi 0, %s139
      %s142 = sphi 0, %s141
      %s156 = sphi 0, %s142
      %s160 = sphi 0, %s160
      %s162 = sphi 0, %s160
      %s163 = sphi 0, %s162
      %s177 = sphi 0, %s163
      %s181 = sphi 0, %s181
      %s183 = sphi 0, %s181
      %s184 = sphi 0, %s183
      %s198 = sphi 0, %s184
      %s202 = sphi 0, %s202
      %s204 = sphi 0, %s202
      %s205 = sphi 0, %s204
      %s219 = sphi 0, %s205
      %s223 = sphi 0, %s223
      %s225 = sphi 0, %s223
      %s226 = sphi 0, %s225
      %s240 = sphi 0, %s226
      %s244 = sphi 0, %s244
      %s246 = sphi 0, %s244
      %s247 = sphi 0, %s246
      %s261 = sphi 0, %s247
      %s265 = sphi 0, %s265
      %s267 = sphi 0, %s265
      %s268 = sphi 0, %s267
      %s282 = sphi 0, %s268
      %s286 = sphi 0, %s286
      %s288 = sphi 0, %s286
      %s289 = sphi 0, %s288
      %s303 = sphi 0, %s289
      %s307 = sphi 0, %s307
      %s309 = sphi 0, %s307
      %s310 = sphi 0, %s309
      %s324 = sphi 0, %s310
      %s328 = sphi 0, %s328
      %s330 = sphi 0, %s328
      %s331 = sphi 0, %s330
      %s345 = sphi 0, %s331
      %s351 = sphi 0, %s353
      %s354 = sphi 0, %s351
      %s355 = sphi 0, %s354
      %s371 = sphi 0, %s355
      %s377 = sphi 0, %s379
      %s380 = sphi 0, %s377
      %s381 = sphi 0, %s380
      %s397 = sphi 0, %s381
    $region4: #{tpu_custom_call.1} parent=1 // loop_header_branch
      %40 = sbr.rel (%p38) target = $region8
    $region5: #{tpu_custom_call.1} parent=1 // loop_body
      %s42 = ssub.s32 %s37, 1
      %s43 = ssub.s32 %s37, 2
      %s44 = sadd.s32 %s37, 1
      %s45 = ssub.s32 %s37, %s44
      %p46 = scmp.eq.s32.totalorder %s45, 0
      %s48 = sadd.s32 %s47, 1
      %s49 = scalar_select %p46, %s47, %s48
      %p52 = pneg %p46
      %p53 = scmp.eq.s32.totalorder %s37, 1
      %p54 = por %p52, %p53
      %p55 = scmp.ne.s32.totalorder %s47, %s50
      %p56 = scmp.eq.s32.totalorder %s37, 0
      %p57 = por %p55, %p56
      %p58 = scmp.ne.s32.totalorder %s47, %s50
      %p59 = scmp.eq.s32.totalorder %s42, 1
      %p60 = por %p58, %p59
      %p61 = scmp.ne.s32.totalorder %s50, %s51
      %p62 = scmp.eq.s32.totalorder %s42, 0
      %p63 = por %p61, %p62
      %p64 = scmp.ne.s32.totalorder %s50, %s51
      %p65 = scmp.eq.s32.totalorder %s43, 1
      %p66 = por %p64, %p65
      %p68 = scmp.ne.s32.totalorder %s51, %s67
      %p69 = scmp.eq.s32.totalorder %s43, 0
      %p70 = por %p68, %p69
      %s71 = ssub.s32 %s37, %s44
      %p72 = scmp.eq.s32.totalorder %s71, 0
      %s74 = sadd.s32 %s73, 1
      %s75 = scalar_select %p72, %s73, %s74
      %p78 = pneg %p72
      %p79 = scmp.eq.s32.totalorder %s37, 1
      %p80 = por %p78, %p79
      %p81 = scmp.ne.s32.totalorder %s73, %s76
      %p82 = scmp.eq.s32.totalorder %s37, 0
      %p83 = por %p81, %p82
      %p84 = scmp.ne.s32.totalorder %s73, %s76
      %p85 = scmp.eq.s32.totalorder %s42, 1
      %p86 = por %p84, %p85
      %p87 = scmp.ne.s32.totalorder %s76, %s77
      %p88 = scmp.eq.s32.totalorder %s42, 0
      %p89 = por %p87, %p88
      %p90 = scmp.ne.s32.totalorder %s76, %s77
      %p91 = scmp.eq.s32.totalorder %s43, 1
      %p92 = por %p90, %p91
      %p94 = scmp.ne.s32.totalorder %s77, %s93
      %p95 = scmp.eq.s32.totalorder %s43, 0
      %p96 = por %p94, %p95
      %s98 = sadd.s32 %s97, 1
      %p101 = scmp.eq.s32.totalorder %s37, 1
      %p102 = scmp.ne.s32.totalorder %s97, %s99
      %p103 = scmp.eq.s32.totalorder %s37, 0
      %p104 = por %p102, %p103
      %p105 = scmp.ne.s32.totalorder %s97, %s99
      %p106 = scmp.eq.s32.totalorder %s42, 1
      %p107 = por %p105, %p106
      %p108 = scmp.ne.s32.totalorder %s99, %s100
      %p109 = scmp.eq.s32.totalorder %s42, 0
      %p110 = por %p108, %p109
      %p111 = scmp.ne.s32.totalorder %s99, %s100
      %p112 = scmp.eq.s32.totalorder %s43, 1
      %p113 = por %p111, %p112
      %p115 = scmp.ne.s32.totalorder %s100, %s114
      %p116 = scmp.eq.s32.totalorder %s43, 0
      %p117 = por %p115, %p116
      %s119 = sadd.s32 %s118, 1
      %p122 = scmp.eq.s32.totalorder %s37, 1
      %p123 = scmp.ne.s32.totalorder %s118, %s120
      %p124 = scmp.eq.s32.totalorder %s37, 0
      %p125 = por %p123, %p124
      %p126 = scmp.ne.s32.totalorder %s118, %s120
      %p127 = scmp.eq.s32.totalorder %s42, 1
      %p128 = por %p126, %p127
      %p129 = scmp.ne.s32.totalorder %s120, %s121
      %p130 = scmp.eq.s32.totalorder %s42, 0
      %p131 = por %p129, %p130
      %p132 = scmp.ne.s32.totalorder %s120, %s121
      %p133 = scmp.eq.s32.totalorder %s43, 1
      %p134 = por %p132, %p133
      %p136 = scmp.ne.s32.totalorder %s121, %s135
      %p137 = scmp.eq.s32.totalorder %s43, 0
      %p138 = por %p136, %p137
      %s140 = sadd.s32 %s139, 1
      %p143 = scmp.eq.s32.totalorder %s37, 1
      %p144 = scmp.ne.s32.totalorder %s139, %s141
      %p145 = scmp.eq.s32.totalorder %s37, 0
      %p146 = por %p144, %p145
      %p147 = scmp.ne.s32.totalorder %s139, %s141
      %p148 = scmp.eq.s32.totalorder %s42, 1
      %p149 = por %p147, %p148
      %p150 = scmp.ne.s32.totalorder %s141, %s142
      %p151 = scmp.eq.s32.totalorder %s42, 0
      %p152 = por %p150, %p151
      %p153 = scmp.ne.s32.totalorder %s141, %s142
      %p154 = scmp.eq.s32.totalorder %s43, 1
      %p155 = por %p153, %p154
      %p157 = scmp.ne.s32.totalorder %s142, %s156
      %p158 = scmp.eq.s32.totalorder %s43, 0
      %p159 = por %p157, %p158
      %s161 = sadd.s32 %s160, 1
      %p164 = scmp.eq.s32.totalorder %s37, 1
      %p165 = scmp.ne.s32.totalorder %s160, %s162
      %p166 = scmp.eq.s32.totalorder %s37, 0
      %p167 = por %p165, %p166
      %p168 = scmp.ne.s32.totalorder %s160, %s162
      %p169 = scmp.eq.s32.totalorder %s42, 1
      %p170 = por %p168, %p169
      %p171 = scmp.ne.s32.totalorder %s162, %s163
      %p172 = scmp.eq.s32.totalorder %s42, 0
      %p173 = por %p171, %p172
      %p174 = scmp.ne.s32.totalorder %s162, %s163
      %p175 = scmp.eq.s32.totalorder %s43, 1
      %p176 = por %p174, %p175
      %p178 = scmp.ne.s32.totalorder %s163, %s177
      %p179 = scmp.eq.s32.totalorder %s43, 0
      %p180 = por %p178, %p179
      %s182 = sadd.s32 %s181, 1
      %p185 = scmp.eq.s32.totalorder %s37, 1
      %p186 = scmp.ne.s32.totalorder %s181, %s183
      %p187 = scmp.eq.s32.totalorder %s37, 0
      %p188 = por %p186, %p187
      %p189 = scmp.ne.s32.totalorder %s181, %s183
      %p190 = scmp.eq.s32.totalorder %s42, 1
      %p191 = por %p189, %p190
      %p192 = scmp.ne.s32.totalorder %s183, %s184
      %p193 = scmp.eq.s32.totalorder %s42, 0
      %p194 = por %p192, %p193
      %p195 = scmp.ne.s32.totalorder %s183, %s184
      %p196 = scmp.eq.s32.totalorder %s43, 1
      %p197 = por %p195, %p196
      %p199 = scmp.ne.s32.totalorder %s184, %s198
      %p200 = scmp.eq.s32.totalorder %s43, 0
      %p201 = por %p199, %p200
      %s203 = sadd.s32 %s202, 1
      %p206 = scmp.eq.s32.totalorder %s37, 1
      %p207 = scmp.ne.s32.totalorder %s202, %s204
      %p208 = scmp.eq.s32.totalorder %s37, 0
      %p209 = por %p207, %p208
      %p210 = scmp.ne.s32.totalorder %s202, %s204
      %p211 = scmp.eq.s32.totalorder %s42, 1
      %p212 = por %p210, %p211
      %p213 = scmp.ne.s32.totalorder %s204, %s205
      %p214 = scmp.eq.s32.totalorder %s42, 0
      %p215 = por %p213, %p214
      %p216 = scmp.ne.s32.totalorder %s204, %s205
      %p217 = scmp.eq.s32.totalorder %s43, 1
      %p218 = por %p216, %p217
      %p220 = scmp.ne.s32.totalorder %s205, %s219
      %p221 = scmp.eq.s32.totalorder %s43, 0
      %p222 = por %p220, %p221
      %s224 = sadd.s32 %s223, 1
      %p227 = scmp.eq.s32.totalorder %s37, 1
      %p228 = scmp.ne.s32.totalorder %s223, %s225
      %p229 = scmp.eq.s32.totalorder %s37, 0
      %p230 = por %p228, %p229
      %p231 = scmp.ne.s32.totalorder %s223, %s225
      %p232 = scmp.eq.s32.totalorder %s42, 1
      %p233 = por %p231, %p232
      %p234 = scmp.ne.s32.totalorder %s225, %s226
      %p235 = scmp.eq.s32.totalorder %s42, 0
      %p236 = por %p234, %p235
      %p237 = scmp.ne.s32.totalorder %s225, %s226
      %p238 = scmp.eq.s32.totalorder %s43, 1
      %p239 = por %p237, %p238
      %p241 = scmp.ne.s32.totalorder %s226, %s240
      %p242 = scmp.eq.s32.totalorder %s43, 0
      %p243 = por %p241, %p242
      %s245 = sadd.s32 %s244, 1
      %p248 = scmp.eq.s32.totalorder %s37, 1
      %p249 = scmp.ne.s32.totalorder %s244, %s246
      %p250 = scmp.eq.s32.totalorder %s37, 0
      %p251 = por %p249, %p250
      %p252 = scmp.ne.s32.totalorder %s244, %s246
      %p253 = scmp.eq.s32.totalorder %s42, 1
      %p254 = por %p252, %p253
      %p255 = scmp.ne.s32.totalorder %s246, %s247
      %p256 = scmp.eq.s32.totalorder %s42, 0
      %p257 = por %p255, %p256
      %p258 = scmp.ne.s32.totalorder %s246, %s247
      %p259 = scmp.eq.s32.totalorder %s43, 1
      %p260 = por %p258, %p259
      %p262 = scmp.ne.s32.totalorder %s247, %s261
      %p263 = scmp.eq.s32.totalorder %s43, 0
      %p264 = por %p262, %p263
      %s266 = sadd.s32 %s265, 1
      %p269 = scmp.eq.s32.totalorder %s37, 1
      %p270 = scmp.ne.s32.totalorder %s265, %s267
      %p271 = scmp.eq.s32.totalorder %s37, 0
      %p272 = por %p270, %p271
      %p273 = scmp.ne.s32.totalorder %s265, %s267
      %p274 = scmp.eq.s32.totalorder %s42, 1
      %p275 = por %p273, %p274
      %p276 = scmp.ne.s32.totalorder %s267, %s268
      %p277 = scmp.eq.s32.totalorder %s42, 0
      %p278 = por %p276, %p277
      %p279 = scmp.ne.s32.totalorder %s267, %s268
      %p280 = scmp.eq.s32.totalorder %s43, 1
      %p281 = por %p279, %p280
      %p283 = scmp.ne.s32.totalorder %s268, %s282
      %p284 = scmp.eq.s32.totalorder %s43, 0
      %p285 = por %p283, %p284
      %s287 = sadd.s32 %s286, 1
      %p290 = scmp.eq.s32.totalorder %s37, 1
      %p291 = scmp.ne.s32.totalorder %s286, %s288
      %p292 = scmp.eq.s32.totalorder %s37, 0
      %p293 = por %p291, %p292
      %p294 = scmp.ne.s32.totalorder %s286, %s288
      %p295 = scmp.eq.s32.totalorder %s42, 1
      %p296 = por %p294, %p295
      %p297 = scmp.ne.s32.totalorder %s288, %s289
      %p298 = scmp.eq.s32.totalorder %s42, 0
      %p299 = por %p297, %p298
      %p300 = scmp.ne.s32.totalorder %s288, %s289
      %p301 = scmp.eq.s32.totalorder %s43, 1
      %p302 = por %p300, %p301
      %p304 = scmp.ne.s32.totalorder %s289, %s303
      %p305 = scmp.eq.s32.totalorder %s43, 0
      %p306 = por %p304, %p305
      %s308 = sadd.s32 %s307, 1
      %p311 = scmp.eq.s32.totalorder %s37, 1
      %p312 = scmp.ne.s32.totalorder %s307, %s309
      %p313 = scmp.eq.s32.totalorder %s37, 0
      %p314 = por %p312, %p313
      %p315 = scmp.ne.s32.totalorder %s307, %s309
      %p316 = scmp.eq.s32.totalorder %s42, 1
      %p317 = por %p315, %p316
      %p318 = scmp.ne.s32.totalorder %s309, %s310
      %p319 = scmp.eq.s32.totalorder %s42, 0
      %p320 = por %p318, %p319
      %p321 = scmp.ne.s32.totalorder %s309, %s310
      %p322 = scmp.eq.s32.totalorder %s43, 1
      %p323 = por %p321, %p322
      %p325 = scmp.ne.s32.totalorder %s310, %s324
      %p326 = scmp.eq.s32.totalorder %s43, 0
      %p327 = por %p325, %p326
      %s329 = sadd.s32 %s328, 1
      %p332 = scmp.eq.s32.totalorder %s37, 1
      %p333 = scmp.ne.s32.totalorder %s328, %s330
      %p334 = scmp.eq.s32.totalorder %s37, 0
      %p335 = por %p333, %p334
      %p336 = scmp.ne.s32.totalorder %s328, %s330
      %p337 = scmp.eq.s32.totalorder %s42, 1
      %p338 = por %p336, %p337
      %p339 = scmp.ne.s32.totalorder %s330, %s331
      %p340 = scmp.eq.s32.totalorder %s42, 0
      %p341 = por %p339, %p340
      %p342 = scmp.ne.s32.totalorder %s330, %s331
      %p343 = scmp.eq.s32.totalorder %s43, 1
      %p344 = por %p342, %p343
      %p346 = scmp.ne.s32.totalorder %s331, %s345
      %p347 = scmp.eq.s32.totalorder %s43, 0
      %p348 = por %p346, %p347
      %s349 = ssub.s32 %s37, %s44
      %p350 = scmp.eq.s32.totalorder %s349, 0
      %s352 = sadd.s32 %s351, 1
      %s353 = scalar_select %p350, %s351, %s352
      %p356 = pneg %p350
      %p357 = scmp.eq.s32.totalorder %s37, 1
      %p358 = por %p356, %p357
      %p359 = scmp.ne.s32.totalorder %s351, %s354
      %p360 = scmp.eq.s32.totalorder %s37, 0
      %p361 = por %p359, %p360
      %p362 = scmp.ne.s32.totalorder %s351, %s354
      %p363 = scmp.eq.s32.totalorder %s42, 1
      %p364 = por %p362, %p363
      %p365 = scmp.ne.s32.totalorder %s354, %s355
      %p366 = scmp.eq.s32.totalorder %s42, 0
      %p367 = por %p365, %p366
      %p368 = scmp.ne.s32.totalorder %s354, %s355
      %p369 = scmp.eq.s32.totalorder %s43, 1
      %p370 = por %p368, %p369
      %p372 = scmp.ne.s32.totalorder %s355, %s371
      %p373 = scmp.eq.s32.totalorder %s43, 0
      %p374 = por %p372, %p373
      %s375 = ssub.s32 %s37, %s44
      %p376 = scmp.eq.s32.totalorder %s375, 0
      %s378 = sadd.s32 %s377, 1
      %s379 = scalar_select %p376, %s377, %s378
      %p382 = pneg %p376
      %p383 = scmp.eq.s32.totalorder %s37, 1
      %p384 = por %p382, %p383
      %p385 = scmp.ne.s32.totalorder %s377, %s380
      %p386 = scmp.eq.s32.totalorder %s37, 0
      %p387 = por %p385, %p386
      %p388 = scmp.ne.s32.totalorder %s377, %s380
      %p389 = scmp.eq.s32.totalorder %s42, 1
      %p390 = por %p388, %p389
      %p391 = scmp.ne.s32.totalorder %s380, %s381
      %p392 = scmp.eq.s32.totalorder %s42, 0
      %p393 = por %p391, %p392
      %p394 = scmp.ne.s32.totalorder %s380, %s381
      %p395 = scmp.eq.s32.totalorder %s43, 1
      %p396 = por %p394, %p395
      %p398 = scmp.ne.s32.totalorder %s381, %s397
      %p399 = scmp.eq.s32.totalorder %s43, 0
      %p400 = por %p398, %p399
      %p401 = scmp.le.s32.totalorder 1, %s37
      %p402 = scmp.lt.s32.totalorder %s37, 3
      %p403 = pnand %p401, %p402
      %p404 = pneg %p403
      // Predicated region
      $region9: #{tpu_custom_call.1} parent=5 // pred_check
        _
      $region10: #{tpu_custom_call.1} parent=5 // pred_check_branch
        %406 = sbr.rel (%p403) target = $region12
      $region11: #{tpu_custom_call.1} parent=5 // pred_region
        %s407 = ssub.s32 %s37, 1
        // Predicated region
        $region13: #{tpu_custom_call.1} parent=11 // pred_check
          %p408 = pneg %p110
        $region14: #{tpu_custom_call.1} parent=11 // pred_check_branch
          %410 = sbr.rel (%p408) target = $region16
        $region15: #{tpu_custom_call.1} parent=11 // pred_region
          %s412 = ssub.s32 256, 256
          %413 = vsyncadd [#allocation6], %s412
          %s414 = sshll.u32 [#allocation7], 4
          %s415 = int_to_ptr.vmem [resolvable:$true] %s414
          %420 = dma.hbm_to_vmem [thread:$0]  %s2, 256, %s415, [#allocation6], 64, 64, 4
        $region16: #{tpu_custom_call.1} parent=11 // pred_fallthru
          _
        // Predicated region
        $region17: #{tpu_custom_call.1} parent=11 // pred_check
          %p421 = pneg %p131
        $region18: #{tpu_custom_call.1} parent=11 // pred_check_branch
          %423 = sbr.rel (%p421) target = $region20
        $region19: #{tpu_custom_call.1} parent=11 // pred_region
          %s425 = ssub.s32 256, 256
          %426 = vsyncadd [#allocation9], %s425
          %s427 = sshll.u32 [#allocation8], 4
          %s428 = int_to_ptr.vmem [resolvable:$true] %s427
          %433 = dma.hbm_to_vmem [thread:$0]  %s3, 256, %s428, [#allocation9], 64, 64, 4
        $region20: #{tpu_custom_call.1} parent=11 // pred_fallthru
          _
        // Predicated region
        $region21: #{tpu_custom_call.1} parent=11 // pred_check
          %p434 = pneg %p152
        $region22: #{tpu_custom_call.1} parent=11 // pred_check_branch
          %436 = sbr.rel (%p434) target = $region24
        $region23: #{tpu_custom_call.1} parent=11 // pred_region
          _
        $region24: #{tpu_custom_call.1} parent=11 // pred_fallthru
          _
        // Predicated region
        $region25: #{tpu_custom_call.1} parent=11 // pred_check
          %p437 = pneg %p173
        $region26: #{tpu_custom_call.1} parent=11 // pred_check_branch
          %439 = sbr.rel (%p437) target = $region28
        $region27: #{tpu_custom_call.1} parent=11 // pred_region
          _
        $region28: #{tpu_custom_call.1} parent=11 // pred_fallthru
          _
        // Predicated region
        $region29: #{tpu_custom_call.1} parent=11 // pred_check
          %p440 = pneg %p194
        $region30: #{tpu_custom_call.1} parent=11 // pred_check_branch
          %442 = sbr.rel (%p440) target = $region32
        $region31: #{tpu_custom_call.1} parent=11 // pred_region
          %s444 = ssub.s32 16, 16
          %445 = vsyncadd [#allocation9], %s444
          %s447 = sshll.u32 [#allocation10], 4
          %s448 = int_to_ptr.vmem [resolvable:$true] %s447
          %450 = dma.hbm_to_vmem [thread:$0]  %s6, 16, %s448, [#allocation9]
        $region32: #{tpu_custom_call.1} parent=11 // pred_fallthru
          _
        // Predicated region
        $region33: #{tpu_custom_call.1} parent=11 // pred_check
          %p451 = pneg %p215
        $region34: #{tpu_custom_call.1} parent=11 // pred_check_branch
          %453 = sbr.rel (%p451) target = $region36
        $region35: #{tpu_custom_call.1} parent=11 // pred_region
          %s455 = ssub.s32 16, 16
          %456 = vsyncadd [#allocation12], %s455
          %s458 = sshll.u32 [#allocation11], 4
          %s459 = int_to_ptr.vmem [resolvable:$true] %s458
          %461 = dma.hbm_to_vmem [thread:$0]  %s7, 16, %s459, [#allocation12]
        $region36: #{tpu_custom_call.1} parent=11 // pred_fallthru
          _
        // Predicated region
        $region37: #{tpu_custom_call.1} parent=11 // pred_check
          %p462 = pneg %p236
        $region38: #{tpu_custom_call.1} parent=11 // pred_check_branch
          %464 = sbr.rel (%p462) target = $region40
        $region39: #{tpu_custom_call.1} parent=11 // pred_region
          %s466 = ssub.s32 16, 16
          %467 = vsyncadd [#allocation12], %s466
          %s469 = sshll.u32 [#allocation13], 4
          %s470 = int_to_ptr.vmem [resolvable:$true] %s469
          %472 = dma.hbm_to_vmem [thread:$0]  %s8, 16, %s470, [#allocation12]
        $region40: #{tpu_custom_call.1} parent=11 // pred_fallthru
          _
        // Predicated region
        $region41: #{tpu_custom_call.1} parent=11 // pred_check
          %p473 = pneg %p257
        $region42: #{tpu_custom_call.1} parent=11 // pred_check_branch
          %475 = sbr.rel (%p473) target = $region44
        $region43: #{tpu_custom_call.1} parent=11 // pred_region
          %s477 = ssub.s32 16, 16
          %478 = vsyncadd [#allocation15], %s477
          %s480 = sshll.u32 [#allocation14], 4
          %s481 = int_to_ptr.vmem [resolvable:$true] %s480
          %483 = dma.hbm_to_vmem [thread:$0]  %s9, 16, %s481, [#allocation15]
        $region44: #{tpu_custom_call.1} parent=11 // pred_fallthru
          _
        // Predicated region
        $region45: #{tpu_custom_call.1} parent=11 // pred_check
          %p484 = pneg %p278
        $region46: #{tpu_custom_call.1} parent=11 // pred_check_branch
          %486 = sbr.rel (%p484) target = $region48
        $region47: #{tpu_custom_call.1} parent=11 // pred_region
          _
        $region48: #{tpu_custom_call.1} parent=11 // pred_fallthru
          _
        // Predicated region
        $region49: #{tpu_custom_call.1} parent=11 // pred_check
          %p487 = pneg %p299
        $region50: #{tpu_custom_call.1} parent=11 // pred_check_branch
          %489 = sbr.rel (%p487) target = $region52
        $region51: #{tpu_custom_call.1} parent=11 // pred_region
          _
        $region52: #{tpu_custom_call.1} parent=11 // pred_fallthru
          _
        // Predicated region
        $region53: #{tpu_custom_call.1} parent=11 // pred_check
          %p490 = pneg %p320
        $region54: #{tpu_custom_call.1} parent=11 // pred_check_branch
          %492 = sbr.rel (%p490) target = $region56
        $region55: #{tpu_custom_call.1} parent=11 // pred_region
          _
        $region56: #{tpu_custom_call.1} parent=11 // pred_fallthru
          _
        // Predicated region
        $region57: #{tpu_custom_call.1} parent=11 // pred_check
          %p493 = pneg %p341
        $region58: #{tpu_custom_call.1} parent=11 // pred_check_branch
          %495 = sbr.rel (%p493) target = $region60
        $region59: #{tpu_custom_call.1} parent=11 // pred_region
          _
        $region60: #{tpu_custom_call.1} parent=11 // pred_fallthru
          _
      $region12: #{tpu_custom_call.1} parent=5 // pred_fallthru
        _
      %p496 = scmp.lt.s32.totalorder %s37, 2
      // Predicated region
      $region61: #{tpu_custom_call.1} parent=5 // pred_check
        %p497 = pneg %p496
      $region62: #{tpu_custom_call.1} parent=5 // pred_check_branch
        %499 = sbr.rel (%p497) target = $region64
      $region63: #{tpu_custom_call.1} parent=5 // pred_region
        // Predicated region
        $region65: #{tpu_custom_call.1} parent=63 // pred_check
          %p500 = pneg %p57
        $region66: #{tpu_custom_call.1} parent=63 // pred_check_branch
          %502 = sbr.rel (%p500) target = $region68
        $region67: #{tpu_custom_call.1} parent=63 // pred_region
          %s503 = sand.u32 %s47, 1
          %s504 = scalar_lea.sflag [#allocation3], %s503
          %s505 = sand.u32 %s47, 1
          %s506 = smul.addr %s505, 4
          %s507 = scalar_lea.vmem [#allocation2], %s506
          %s509 = ssub.s32 64, 64
          %510 = vsyncadd %s504, %s509
          %s511 = smul.addr %s37, 64
          %s512 = scalar_lea.hbm %s0, %s511
          %s514 = sshll.u32 %s507, 4
          %s515 = int_to_ptr.vmem [resolvable:$true] %s514
          %517 = dma.hbm_to_vmem [thread:$0]  %s512, 64, %s515, %s504
        $region68: #{tpu_custom_call.1} parent=63 // pred_fallthru
          _
        // Predicated region
        $region69: #{tpu_custom_call.1} parent=63 // pred_check
          %p518 = pneg %p83
        $region70: #{tpu_custom_call.1} parent=63 // pred_check_branch
          %520 = sbr.rel (%p518) target = $region72
        $region71: #{tpu_custom_call.1} parent=63 // pred_region
          %s521 = sand.u32 %s37, 1
          %s522 = scalar_lea.sflag [#allocation6], %s521
          %s523 = sand.u32 %s73, 1
          %s524 = smul.addr %s523, 4
          %s525 = scalar_lea.vmem [#allocation5], %s524
          %s527 = ssub.s32 64, 64
          %528 = vsyncadd %s522, %s527
          %s529 = smul.addr %s37, 64
          %s530 = scalar_lea.hbm %s1, %s529
          %s532 = sshll.u32 %s525, 4
          %s533 = int_to_ptr.vmem [resolvable:$true] %s532
          %535 = dma.hbm_to_vmem [thread:$0]  %s530, 64, %s533, %s522
        $region72: #{tpu_custom_call.1} parent=63 // pred_fallthru
          _
      $region64: #{tpu_custom_call.1} parent=5 // pred_fallthru
        _
      %p536 = scmp.le.s32.totalorder 1, %s37
      %p537 = scmp.lt.s32.totalorder %s37, 3
      %p538 = pnand %p536, %p537
      %p539 = pneg %p538
      // Predicated region
      $region73: #{tpu_custom_call.1} parent=5 // pred_check
        _
      $region74: #{tpu_custom_call.1} parent=5 // pred_check_branch
        %541 = sbr.rel (%p538) target = $region76
      $region75: #{tpu_custom_call.1} parent=5 // pred_region
        %s542 = ssub.s32 %s37, 1
        %s543 = sand.u32 %s50, 1
        %s544 = scalar_lea.sflag [#allocation3], %s543
        %s545 = sand.u32 %s50, 1
        %s546 = smul.addr %s545, 4
        %s547 = scalar_lea.vmem [#allocation2], %s546
        // Predicated region
        $region77: #{tpu_custom_call.1} parent=75 // pred_check
          %p548 = pneg %p63
        $region78: #{tpu_custom_call.1} parent=75 // pred_check_branch
          %550 = sbr.rel (%p548) target = $region80
        $region79: #{tpu_custom_call.1} parent=75 // pred_region
          %551 = dma.done %s544, 64
        $region80: #{tpu_custom_call.1} parent=75 // pred_fallthru
          _
        %s552 = sand.u32 %s42, 1
        %s553 = scalar_lea.sflag [#allocation6], %s552
        %s554 = sand.u32 %s76, 1
        %s555 = smul.addr %s554, 4
        %s556 = scalar_lea.vmem [#allocation5], %s555
        // Predicated region
        $region81: #{tpu_custom_call.1} parent=75 // pred_check
          %p557 = pneg %p89
        $region82: #{tpu_custom_call.1} parent=75 // pred_check_branch
          %559 = sbr.rel (%p557) target = $region84
        $region83: #{tpu_custom_call.1} parent=75 // pred_region
          %560 = dma.done %s553, 64
        $region84: #{tpu_custom_call.1} parent=75 // pred_fallthru
          _
        // Predicated region
        $region85: #{tpu_custom_call.1} parent=75 // pred_check
          %p561 = pneg %p110
        $region86: #{tpu_custom_call.1} parent=75 // pred_check_branch
          %563 = sbr.rel (%p561) target = $region88
        $region87: #{tpu_custom_call.1} parent=75 // pred_region
          %564 = dma.done [#allocation6], 256
        $region88: #{tpu_custom_call.1} parent=75 // pred_fallthru
          _
        // Predicated region
        $region89: #{tpu_custom_call.1} parent=75 // pred_check
          %p565 = pneg %p131
        $region90: #{tpu_custom_call.1} parent=75 // pred_check_branch
          %567 = sbr.rel (%p565) target = $region92
        $region91: #{tpu_custom_call.1} parent=75 // pred_region
          %568 = dma.done [#allocation9], 256
        $region92: #{tpu_custom_call.1} parent=75 // pred_fallthru
          _
        // Predicated region
        $region93: #{tpu_custom_call.1} parent=75 // pred_check
          %p569 = pneg %p194
        $region94: #{tpu_custom_call.1} parent=75 // pred_check_branch
          %571 = sbr.rel (%p569) target = $region96
        $region95: #{tpu_custom_call.1} parent=75 // pred_region
          %572 = dma.done [#allocation9], 16
        $region96: #{tpu_custom_call.1} parent=75 // pred_fallthru
          _
        // Predicated region
        $region97: #{tpu_custom_call.1} parent=75 // pred_check
          %p573 = pneg %p215
        $region98: #{tpu_custom_call.1} parent=75 // pred_check_branch
          %575 = sbr.rel (%p573) target = $region100
        $region99: #{tpu_custom_call.1} parent=75 // pred_region
          %576 = dma.done [#allocation12], 16
        $region100: #{tpu_custom_call.1} parent=75 // pred_fallthru
          _
        // Predicated region
        $region101: #{tpu_custom_call.1} parent=75 // pred_check
          %p577 = pneg %p236
        $region102: #{tpu_custom_call.1} parent=75 // pred_check_branch
          %579 = sbr.rel (%p577) target = $region104
        $region103: #{tpu_custom_call.1} parent=75 // pred_region
          %580 = dma.done [#allocation12], 16
        $region104: #{tpu_custom_call.1} parent=75 // pred_fallthru
          _
        // Predicated region
        $region105: #{tpu_custom_call.1} parent=75 // pred_check
          %p581 = pneg %p257
        $region106: #{tpu_custom_call.1} parent=75 // pred_check_branch
          %583 = sbr.rel (%p581) target = $region108
        $region107: #{tpu_custom_call.1} parent=75 // pred_region
          %584 = dma.done [#allocation15], 16
        $region108: #{tpu_custom_call.1} parent=75 // pred_fallthru
          _
        %s585 = sand.u32 %s50, 1
        %s586 = scalar_lea.sflag [#allocation3], %s585
        %s587 = sand.u32 %s50, 1
        %s588 = smul.addr %s587, 4
        %s589 = scalar_lea.vmem [#allocation2], %s588
        %p590 = pneg %p63
        %p591 = pneg %p60
        %s592 = sand.u32 %s42, 1
        %s593 = scalar_lea.sflag [#allocation6], %s592
        %s594 = sand.u32 %s76, 1
        %s595 = smul.addr %s594, 4
        %s596 = scalar_lea.vmem [#allocation5], %s595
        %p597 = pneg %p89
        %p598 = pneg %p86
        %p599 = pneg %p110
        %p600 = pneg %p107
        %p601 = pneg %p131
        %p602 = pneg %p128
        %p603 = pneg %p152
        %p604 = pneg %p149
        %p605 = pneg %p173
        %p606 = pneg %p170
        %p607 = pneg %p194
        %p608 = pneg %p191
        %p609 = pneg %p215
        %p610 = pneg %p212
        %p611 = pneg %p236
        %p612 = pneg %p233
        %p613 = pneg %p257
        %p614 = pneg %p254
        %p615 = pneg %p278
        %p616 = pneg %p275
        %p617 = pneg %p299
        %p618 = pneg %p296
        %p619 = pneg %p320
        %p620 = pneg %p317
        %p621 = pneg %p341
        %p622 = pneg %p338
        %p623 = pneg %p367
        %p624 = pneg %p364
        %s625 = sand.u32 %s354, 1
        %s626 = scalar_lea.sflag [#allocation4], %s625
        %s627 = sand.u32 %s354, 1
        %s628 = smul.addr %s627, 8
        %s629 = scalar_lea.vmem [#allocation16], %s628
        %p630 = pneg %p393
        %p631 = pneg %p390
        %s632 = sand.u32 %s380, 1
        %s633 = scalar_lea.sflag [#allocation18], %s632
        %s634 = sand.u32 %s380, 1
        %s635 = smul.addr %s634, 8
        %s636 = scalar_lea.vmem [#allocation17], %s635
        %v638 = vld [vmem:[%s547] sm:$0xf]
        %v639 = vld [vmem:[%s556] sm:$0xf]
        %v640 = vld [vmem:[#allocation7] sm:$0xf]
        %v641 = vld [vmem:[#allocation7 + $0x4] sm:$0xf]
        %v642 = vld [vmem:[#allocation7 + $0x8] sm:$0xf]
        %v643 = vld [vmem:[#allocation7 + $0xc] sm:$0xf]
        %v648 = vunpack.c.l.b16 %v640
        %v649 = vunpack.c.l.b16 %v641
        %v650 = vunpack.c.l.b16 %v642
        %v651 = vunpack.c.l.b16 %v643
        %v652 = vpack.c.b16 %v649, %v648
        %v653 = vpack.c.b16 %v651, %v650
        %vm656 = vcmask 261120
        %v658 = vsel %vm656, %v638, 0
        %660 = vmatprep.subr.bf16.mxu0 0
        %661 = vmatpush1.bf16.msra.mxu0 %v652
        %662 = vmatprep.subr.bf16.mxu0 0
        %663 = vmatpush1.bf16.msra.mxu0 %v653
        %664 = vmatprep.subr.bf16.mxu0 0
        %665 = vmatpush1.bf16.msra.mxu0 0
        %666 = vmatprep.subr.bf16.mxu0 0
        %667 = vmatpush1.bf16.msra.mxu0 0
        %668 = vmatprep.subr.bf16.mxu0 0
        %669 = vmatpush1.bf16.msra.mxu0 0
        %670 = vmatprep.subr.bf16.mxu0 0
        %671 = vmatpush1.bf16.msra.mxu0 0
        %672 = vmatprep.subr.bf16.mxu0 0
        %673 = vmatpush1.bf16.msra.mxu0 0
        %674 = vmatprep.subr.bf16.mxu0 0
        %675 = vmatpush1.bf16.msra.mxu0 0
        %676 = vmatprep.subr.bf16.mxu0 0
        %677 = vmatpush1.bf16.msra.mxu0 0
        %678 = vmatprep.subr.bf16.mxu0 0
        %679 = vmatpush1.bf16.msra.mxu0 0
        %680 = vmatprep.subr.bf16.mxu0 0
        %681 = vmatpush1.bf16.msra.mxu0 0
        %682 = vmatprep.subr.bf16.mxu0 0
        %683 = vmatpush1.bf16.msra.mxu0 0
        %684 = vmatprep.subr.bf16.mxu0 0
        %685 = vmatpush1.bf16.msra.mxu0 0
        %686 = vmatprep.subr.bf16.mxu0 0
        %687 = vmatpush1.bf16.msra.mxu0 0
        %688 = vmatprep.subr.bf16.mxu0 0
        %689 = vmatpush1.bf16.msra.mxu0 0
        %690 = vmatprep.subr.bf16.mxu0 0
        %691 = vmatpush1.bf16.msra.mxu0 0
        %692 = vmatprep.mubr.bf16.mxu0 0
        %693 = vmatmul.mubr.bf16.gmra.mrb[0].mxu0 %v658
        %v694 = vpop.f32.mrb[0].mxu0
        %v695 = vadd.f32 0.0, %v694
        %v696 = vpop.f32.mrb[0].mxu0
        %v697 = vpop.f32.mrb[0].mxu0
        %v698 = vpop.f32.mrb[0].mxu0
        %699 = vdwg.mxu0
        %v700 = vld [vmem:[#allocation8] sm:$0xf]
        %v701 = vld [vmem:[#allocation8 + $0x4] sm:$0xf]
        %v702 = vld [vmem:[#allocation8 + $0x8] sm:$0xf]
        %v703 = vld [vmem:[#allocation8 + $0xc] sm:$0xf]
        %v708 = vunpack.c.l.b16 %v700
        %v709 = vunpack.c.l.b16 %v701
        %v710 = vunpack.c.l.b16 %v702
        %v711 = vunpack.c.l.b16 %v703
        %v712 = vpack.c.b16 %v709, %v708
        %v713 = vpack.c.b16 %v711, %v710
        %v717 = vsel %vm656, %v639, 0
        %719 = vmatprep.subr.bf16.mxu0 0
        %720 = vmatpush1.bf16.msra.mxu0 %v712
        %721 = vmatprep.subr.bf16.mxu0 0
        %722 = vmatpush1.bf16.msra.mxu0 %v713
        %723 = vmatprep.subr.bf16.mxu0 0
        %724 = vmatpush1.bf16.msra.mxu0 0
        %725 = vmatprep.subr.bf16.mxu0 0
        %726 = vmatpush1.bf16.msra.mxu0 0
        %727 = vmatprep.subr.bf16.mxu0 0
        %728 = vmatpush1.bf16.msra.mxu0 0
        %729 = vmatprep.subr.bf16.mxu0 0
        %730 = vmatpush1.bf16.msra.mxu0 0
        %731 = vmatprep.subr.bf16.mxu0 0
        %732 = vmatpush1.bf16.msra.mxu0 0
        %733 = vmatprep.subr.bf16.mxu0 0
        %734 = vmatpush1.bf16.msra.mxu0 0
        %735 = vmatprep.subr.bf16.mxu0 0
        %736 = vmatpush1.bf16.msra.mxu0 0
        %737 = vmatprep.subr.bf16.mxu0 0
        %738 = vmatpush1.bf16.msra.mxu0 0
        %739 = vmatprep.subr.bf16.mxu0 0
        %740 = vmatpush1.bf16.msra.mxu0 0
        %741 = vmatprep.subr.bf16.mxu0 0
        %742 = vmatpush1.bf16.msra.mxu0 0
        %743 = vmatprep.subr.bf16.mxu0 0
        %744 = vmatpush1.bf16.msra.mxu0 0
        %745 = vmatprep.subr.bf16.mxu0 0
        %746 = vmatpush1.bf16.msra.mxu0 0
        %747 = vmatprep.subr.bf16.mxu0 0
        %748 = vmatpush1.bf16.msra.mxu0 0
        %749 = vmatprep.subr.bf16.mxu0 0
        %750 = vmatpush1.bf16.msra.mxu0 0
        %751 = vmatprep.mubr.bf16.mxu0 0
        %752 = vmatmul.mubr.bf16.gmra.mrb[0].mxu0 %v717
        %v753 = vpop.f32.mrb[0].mxu0
        %v754 = vadd.f32 0.0, %v753
        %v755 = vpop.f32.mrb[0].mxu0
        %v756 = vpop.f32.mrb[0].mxu0
        %v757 = vpop.f32.mrb[0].mxu0
        %758 = vdwg.mxu0
        %v759 = vld [vmem:[%s4] sm:$0x1]
        %v760 = vld [vmem:[%s5] sm:$0x1]
        %v761 = vsel %vm656, %v695, 0.0
        %762 = vadd.xlane.f32.xlu0 %v761
        %v763 = vpop.xlane.xlu0 %762
        %v764 = vrcp.pop 32.0
        %v765 = vmul.f32 %v763, %v764
        %v766 = vsub.f32 %v695, %v765
        %v767 = vmul.f32 %v766, %v766
        %v768 = vsel %vm656, %v767, 0.0
        %769 = vadd.xlane.f32.xlu0 %v768
        %v770 = vpop.xlane.xlu0 %769
        %v771 = vmul.f32 %v770, %v764
        %v772 = vadd.f32 %v771, 1e-05
        %v773 = vrsqrt.pop %v772
        %v774 = vmul.f32 %v766, %v773
        %v776 = vlaneseq
        %v777 = vshrl.u32 %v776, 7
        %v778 = vsub.s32 0, %v777
        %v779 = vrot.slane %v759, %v778
        %v781 = vmul.f32 %v774, %v779
        %v783 = vlaneseq
        %v784 = vshrl.u32 %v783, 7
        %v785 = vsub.s32 0, %v784
        %v786 = vrot.slane %v760, %v785
        %v788 = vadd.f32 %v781, %v786
        %v789 = vpack.c.bf16 %v788, %v788
        %v790 = vld [vmem:[#allocation10] sm:$0x1]
        %v791 = vld [vmem:[#allocation11] sm:$0x1]
        %793 = vrot.lane.b32.xlu0 %v695, 96
        %v794 = vpop.permute.xlu0 %793
        %v796 = vsel %vm656, %v794, 0.0
        %797 = vadd.xlane.f32.xlu0 %v796
        %v798 = vpop.xlane.xlu0 %797
        %v799 = vmul.f32 %v798, %v764
        %v800 = vsub.f32 %v695, %v799
        %v801 = vmul.f32 %v800, %v800
        %803 = vrot.lane.b32.xlu0 %v801, 96
        %v804 = vpop.permute.xlu0 %803
        %v806 = vsel %vm656, %v804, 0.0
        %807 = vadd.xlane.f32.xlu0 %v806
        %v808 = vpop.xlane.xlu0 %807
        %v809 = vmul.f32 %v808, %v764
        %v810 = vadd.f32 %v809, 1e-05
        %v811 = vrsqrt.pop %v810
        %v812 = vmul.f32 %v800, %v811
        %v814 = vlaneseq
        %v815 = vshrl.u32 %v814, 7
        %v816 = vsub.s32 0, %v815
        %v817 = vrot.slane %v790, %v816
        %818 = vrot.lane.b32.xlu0 %v817, 32
        %v819 = vpop.permute.xlu0 %818
        %v821 = vmul.f32 %v812, %v819
        %v823 = vlaneseq
        %v824 = vshrl.u32 %v823, 7
        %v825 = vsub.s32 0, %v824
        %v826 = vrot.slane %v791, %v825
        %827 = vrot.lane.b32.xlu0 %v826, 32
        %v828 = vpop.permute.xlu0 %827
        %v830 = vadd.f32 %v821, %v828
        %v831 = vpack.c.bf16 %v830, %v830
        %v832 = vpack.c.bf16 %v695, %v695
        %v833 = vld [vmem:[#allocation13] sm:$0x1]
        %v834 = vld [vmem:[#allocation14] sm:$0x1]
        %v835 = vsel %vm656, %v754, 0.0
        %836 = vadd.xlane.f32.xlu0 %v835
        %v837 = vpop.xlane.xlu0 %836
        %v838 = vmul.f32 %v837, %v764
        %v839 = vsub.f32 %v754, %v838
        %v840 = vmul.f32 %v839, %v839
        %v841 = vsel %vm656, %v840, 0.0
        %842 = vadd.xlane.f32.xlu0 %v841
        %v843 = vpop.xlane.xlu0 %842
        %v844 = vmul.f32 %v843, %v764
        %v845 = vadd.f32 %v844, 1e-05
        %v846 = vrsqrt.pop %v845
        %v847 = vmul.f32 %v839, %v846
        %v849 = vlaneseq
        %v850 = vshrl.u32 %v849, 7
        %v851 = vsub.s32 0, %v850
        %v852 = vrot.slane %v833, %v851
        %v854 = vmul.f32 %v847, %v852
        %v856 = vlaneseq
        %v857 = vshrl.u32 %v856, 7
        %v858 = vsub.s32 0, %v857
        %v859 = vrot.slane %v834, %v858
        %v861 = vadd.f32 %v854, %v859
        %v862 = vpack.c.bf16 %v861, %v861
        %v863 = vld [vmem:[%s10] sm:$0x1]
        %v864 = vld [vmem:[%s11] sm:$0x1]
        %866 = vrot.lane.b32.xlu0 %v754, 96
        %v867 = vpop.permute.xlu0 %866
        %v869 = vsel %vm656, %v867, 0.0
        %870 = vadd.xlane.f32.xlu0 %v869
        %v871 = vpop.xlane.xlu0 %870
        %v872 = vmul.f32 %v871, %v764
        %v873 = vsub.f32 %v754, %v872
        %v874 = vmul.f32 %v873, %v873
        %876 = vrot.lane.b32.xlu0 %v874, 96
        %v877 = vpop.permute.xlu0 %876
        %v879 = vsel %vm656, %v877, 0.0
        %880 = vadd.xlane.f32.xlu0 %v879
        %v881 = vpop.xlane.xlu0 %880
        %v882 = vmul.f32 %v881, %v764
        %v883 = vadd.f32 %v882, 1e-05
        %v884 = vrsqrt.pop %v883
        %v885 = vmul.f32 %v873, %v884
        %v887 = vlaneseq
        %v888 = vshrl.u32 %v887, 7
        %v889 = vsub.s32 0, %v888
        %v890 = vrot.slane %v863, %v889
        %891 = vrot.lane.b32.xlu0 %v890, 32
        %v892 = vpop.permute.xlu0 %891
        %v894 = vmul.f32 %v885, %v892
        %v896 = vlaneseq
        %v897 = vshrl.u32 %v896, 7
        %v898 = vsub.s32 0, %v897
        %v899 = vrot.slane %v864, %v898
        %900 = vrot.lane.b32.xlu0 %v899, 32
        %v901 = vpop.permute.xlu0 %900
        %v903 = vadd.f32 %v894, %v901
        %v904 = vpack.c.bf16 %v903, %v903
        %v905 = vpack.c.bf16 %v754, %v754
        %v907 = vrot.slane %v862, 4
        %vm908 = vcmask 1043456
        %v911 = vsel %vm908, %v789, %v907
        %913 = vrot.lane.b32.xlu0 %v911, 120
        %v914 = vpop.permute.xlu0 %913
        %915 = vrot.lane.b32.xlu0 %v911, 112
        %v916 = vpop.permute.xlu0 %915
        %917 = vrot.lane.b32.xlu0 %v911, 104
        %v918 = vpop.permute.xlu0 %917
        %v920 = vrot.slane %v904, 4
        %v923 = vsel %vm908, %v831, %v920
        %925 = vrot.lane.b32.xlu0 %v923, 120
        %v926 = vpop.permute.xlu0 %925
        %927 = vrot.lane.b32.xlu0 %v923, 112
        %v928 = vpop.permute.xlu0 %927
        %929 = vrot.lane.b32.xlu0 %v923, 104
        %v930 = vpop.permute.xlu0 %929
        %v932 = vrot.slane %v905, 4
        %v935 = vsel %vm908, %v832, %v932
        %937 = vrot.lane.b32.xlu0 %v935, 120
        %v938 = vpop.permute.xlu0 %937
        %939 = vrot.lane.b32.xlu0 %v935, 112
        %v940 = vpop.permute.xlu0 %939
        %941 = vrot.lane.b32.xlu0 %v935, 104
        %v942 = vpop.permute.xlu0 %941
        %943 = vrot.lane.b32.xlu0 %v923, 96
        %v944 = vpop.permute.xlu0 %943
        %vm945 = vcmask 64512
        %v946 = vsel %vm945, %v911, 0
        %v949 = vsel %vm945, %v944, 0
        %951 = vmatprep.subr.bf16.mxu0 0
        %952 = vmatpush1.bf16.xpose.msra.mxu0 %v949
        %953 = vmatprep.subr.bf16.mxu0 0
        %954 = vmatpush1.bf16.xpose.msra.mxu0 0
        %955 = vmatprep.subr.bf16.mxu0 0
        %956 = vmatpush1.bf16.xpose.msra.mxu0 0
        %957 = vmatprep.subr.bf16.mxu0 0
        %958 = vmatpush1.bf16.xpose.msra.mxu0 0
        %959 = vmatprep.subr.bf16.mxu0 0
        %960 = vmatpush1.bf16.xpose.msra.mxu0 0
        %961 = vmatprep.subr.bf16.mxu0 0
        %962 = vmatpush1.bf16.xpose.msra.mxu0 0
        %963 = vmatprep.subr.bf16.mxu0 0
        %964 = vmatpush1.bf16.xpose.msra.mxu0 0
        %965 = vmatprep.subr.bf16.mxu0 0
        %966 = vmatpush1.bf16.xpose.msra.mxu0 0
        %967 = vmatprep.subr.bf16.mxu0 0
        %968 = vmatpush1.bf16.xpose.msra.mxu0 0
        %969 = vmatprep.subr.bf16.mxu0 0
        %970 = vmatpush1.bf16.xpose.msra.mxu0 0
        %971 = vmatprep.subr.bf16.mxu0 0
        %972 = vmatpush1.bf16.xpose.msra.mxu0 0
        %973 = vmatprep.subr.bf16.mxu0 0
        %974 = vmatpush1.bf16.xpose.msra.mxu0 0
        %975 = vmatprep.subr.bf16.mxu0 0
        %976 = vmatpush1.bf16.xpose.msra.mxu0 0
        %977 = vmatprep.subr.bf16.mxu0 0
        %978 = vmatpush1.bf16.xpose.msra.mxu0 0
        %979 = vmatprep.subr.bf16.mxu0 0
        %980 = vmatpush1.bf16.xpose.msra.mxu0 0
        %981 = vmatprep.subr.bf16.mxu0 0
        %982 = vmatpush1.bf16.xpose.msra.mxu0 0
        %983 = vmatprep.mubr.bf16.mxu0 0
        %984 = vmatmul.mubr.bf16.gmra.mrb[0].mxu0 %v946
        %v985 = vpop.f32.mrb[0].mxu0
        %v986 = vadd.f32 0.0, %v985
        %v987 = vpop.f32.mrb[0].mxu0
        %v988 = vpop.f32.mrb[0].mxu0
        %v989 = vadd.f32 0.0, %v988
        %v990 = vpop.f32.mrb[0].mxu0
        %991 = vdwg.mxu0
        %992 = vrot.lane.b32.xlu0 %v926, 96
        %v993 = vpop.permute.xlu0 %992
        %v995 = vsel %vm945, %v914, 0
        %v998 = vsel %vm945, %v993, 0
        %1000 = vmatprep.subr.bf16.mxu0 0
        %1001 = vmatpush1.bf16.xpose.msra.mxu0 %v998
        %1002 = vmatprep.subr.bf16.mxu0 0
        %1003 = vmatpush1.bf16.xpose.msra.mxu0 0
        %1004 = vmatprep.subr.bf16.mxu0 0
        %1005 = vmatpush1.bf16.xpose.msra.mxu0 0
        %1006 = vmatprep.subr.bf16.mxu0 0
        %1007 = vmatpush1.bf16.xpose.msra.mxu0 0
        %1008 = vmatprep.subr.bf16.mxu0 0
        %1009 = vmatpush1.bf16.xpose.msra.mxu0 0
        %1010 = vmatprep.subr.bf16.mxu0 0
        %1011 = vmatpush1.bf16.xpose.msra.mxu0 0
        %1012 = vmatprep.subr.bf16.mxu0 0
        %1013 = vmatpush1.bf16.xpose.msra.mxu0 0
        %1014 = vmatprep.subr.bf16.mxu0 0
        %1015 = vmatpush1.bf16.xpose.msra.mxu0 0
        %1016 = vmatprep.subr.bf16.mxu0 0
        %1017 = vmatpush1.bf16.xpose.msra.mxu0 0
        %1018 = vmatprep.subr.bf16.mxu0 0
        %1019 = vmatpush1.bf16.xpose.msra.mxu0 0
        %1020 = vmatprep.subr.bf16.mxu0 0
        %1021 = vmatpush1.bf16.xpose.msra.mxu0 0
        %1022 = vmatprep.subr.bf16.mxu0 0
        %1023 = vmatpush1.bf16.xpose.msra.mxu0 0
        %1024 = vmatprep.subr.bf16.mxu0 0
        %1025 = vmatpush1.bf16.xpose.msra.mxu0 0
        %1026 = vmatprep.subr.bf16.mxu0 0
        %1027 = vmatpush1.bf16.xpose.msra.mxu0 0
        %1028 = vmatprep.subr.bf16.mxu0 0
        %1029 = vmatpush1.bf16.xpose.msra.mxu0 0
        %1030 = vmatprep.subr.bf16.mxu0 0
        %1031 = vmatpush1.bf16.xpose.msra.mxu0 0
        %1032 = vmatprep.mubr.bf16.mxu0 0
        %1033 = vmatmul.mubr.bf16.gmra.mrb[0].mxu0 %v995
        %v1034 = vpop.f32.mrb[0].mxu0
        %v1035 = vadd.f32 0.0, %v1034
        %v1036 = vpop.f32.mrb[0].mxu0
        %v1037 = vpop.f32.mrb[0].mxu0
        %v1038 = vadd.f32 0.0, %v1037
        %v1039 = vpop.f32.mrb[0].mxu0
        %1040 = vdwg.mxu0
        %1041 = vrot.lane.b32.xlu0 %v928, 96
        %v1042 = vpop.permute.xlu0 %1041
        %v1044 = vsel %vm945, %v916, 0
        %v1047 = vsel %vm945, %v1042, 0
        %1049 = vmatprep.subr.bf16.mxu0 0
        %1050 = vmatpush1.bf16.xpose.msra.mxu0 %v1047
        %1051 = vmatprep.subr.bf16.mxu0 0
        %1052 = vmatpush1.bf16.xpose.msra.mxu0 0
        %1053 = vmatprep.subr.bf16.mxu0 0
        %1054 = vmatpush1.bf16.xpose.msra.mxu0 0
        %1055 = vmatprep.subr.bf16.mxu0 0
        %1056 = vmatpush1.bf16.xpose.msra.mxu0 0
        %1057 = vmatprep.subr.bf16.mxu0 0
        %1058 = vmatpush1.bf16.xpose.msra.mxu0 0
        %1059 = vmatprep.subr.bf16.mxu0 0
        %1060 = vmatpush1.bf16.xpose.msra.mxu0 0
        %1061 = vmatprep.subr.bf16.mxu0 0
        %1062 = vmatpush1.bf16.xpose.msra.mxu0 0
        %1063 = vmatprep.subr.bf16.mxu0 0
        %1064 = vmatpush1.bf16.xpose.msra.mxu0 0
        %1065 = vmatprep.subr.bf16.mxu0 0
        %1066 = vmatpush1.bf16.xpose.msra.mxu0 0
        %1067 = vmatprep.subr.bf16.mxu0 0
        %1068 = vmatpush1.bf16.xpose.msra.mxu0 0
        %1069 = vmatprep.subr.bf16.mxu0 0
        %1070 = vmatpush1.bf16.xpose.msra.mxu0 0
        %1071 = vmatprep.subr.bf16.mxu0 0
        %1072 = vmatpush1.bf16.xpose.msra.mxu0 0
        %1073 = vmatprep.subr.bf16.mxu0 0
        %1074 = vmatpush1.bf16.xpose.msra.mxu0 0
        %1075 = vmatprep.subr.bf16.mxu0 0
        %1076 = vmatpush1.bf16.xpose.msra.mxu0 0
        %1077 = vmatprep.subr.bf16.mxu0 0
        %1078 = vmatpush1.bf16.xpose.msra.mxu0 0
        %1079 = vmatprep.subr.bf16.mxu0 0
        %1080 = vmatpush1.bf16.xpose.msra.mxu0 0
        %1081 = vmatprep.mubr.bf16.mxu0 0
        %1082 = vmatmul.mubr.bf16.gmra.mrb[0].mxu0 %v1044
        %v1083 = vpop.f32.mrb[0].mxu0
        %v1084 = vadd.f32 0.0, %v1083
        %v1085 = vpop.f32.mrb[0].mxu0
        %v1086 = vpop.f32.mrb[0].mxu0
        %v1087 = vadd.f32 0.0, %v1086
        %v1088 = vpop.f32.mrb[0].mxu0
        %1089 = vdwg.mxu0
        %1090 = vrot.lane.b32.xlu0 %v930, 96
        %v1091 = vpop.permute.xlu0 %1090
        %v1093 = vsel %vm945, %v918, 0
        %v1096 = vsel %vm945, %v1091, 0
        %1098 = vmatprep.subr.bf16.mxu0 0
        %1099 = vmatpush1.bf16.xpose.msra.mxu0 %v1096
        %1100 = vmatprep.subr.bf16.mxu0 0
        %1101 = vmatpush1.bf16.xpose.msra.mxu0 0
        %1102 = vmatprep.subr.bf16.mxu0 0
        %1103 = vmatpush1.bf16.xpose.msra.mxu0 0
        %1104 = vmatprep.subr.bf16.mxu0 0
        %1105 = vmatpush1.bf16.xpose.msra.mxu0 0
        %1106 = vmatprep.subr.bf16.mxu0 0
        %1107 = vmatpush1.bf16.xpose.msra.mxu0 0
        %1108 = vmatprep.subr.bf16.mxu0 0
        %1109 = vmatpush1.bf16.xpose.msra.mxu0 0
        %1110 = vmatprep.subr.bf16.mxu0 0
        %1111 = vmatpush1.bf16.xpose.msra.mxu0 0
        %1112 = vmatprep.subr.bf16.mxu0 0
        %1113 = vmatpush1.bf16.xpose.msra.mxu0 0
        %1114 = vmatprep.subr.bf16.mxu0 0
        %1115 = vmatpush1.bf16.xpose.msra.mxu0 0
        %1116 = vmatprep.subr.bf16.mxu0 0
        %1117 = vmatpush1.bf16.xpose.msra.mxu0 0
        %1118 = vmatprep.subr.bf16.mxu0 0
        %1119 = vmatpush1.bf16.xpose.msra.mxu0 0
        %1120 = vmatprep.subr.bf16.mxu0 0
        %1121 = vmatpush1.bf16.xpose.msra.mxu0 0
        %1122 = vmatprep.subr.bf16.mxu0 0
        %1123 = vmatpush1.bf16.xpose.msra.mxu0 0
        %1124 = vmatprep.subr.bf16.mxu0 0
        %1125 = vmatpush1.bf16.xpose.msra.mxu0 0
        %1126 = vmatprep.subr.bf16.mxu0 0
        %1127 = vmatpush1.bf16.xpose.msra.mxu0 0
        %1128 = vmatprep.subr.bf16.mxu0 0
        %1129 = vmatpush1.bf16.xpose.msra.mxu0 0
        %1130 = vmatprep.mubr.bf16.mxu0 0
        %1131 = vmatmul.mubr.bf16.gmra.mrb[0].mxu0 %v1093
        %v1132 = vpop.f32.mrb[0].mxu0
        %v1133 = vadd.f32 0.0, %v1132
        %v1134 = vpop.f32.mrb[0].mxu0
        %v1135 = vpop.f32.mrb[0].mxu0
        %v1136 = vadd.f32 0.0, %v1135
        %v1137 = vpop.f32.mrb[0].mxu0
        %1138 = vdwg.mxu0
        %vm1139 = vcmask 130048
        %v1140 = vsel %vm1139, %v986, -inf
        %1141 = vmax.xlane.f32.xlu0 %v1140
        %v1142 = vpop.xlane.xlu0 %1141
        %v1143 = vsel %vm1139, %v989, -inf
        %1144 = vmax.xlane.f32.xlu0 %v1143
        %v1145 = vpop.xlane.xlu0 %1144
        %v1146 = vsel %vm1139, %v1035, -inf
        %1147 = vmax.xlane.f32.xlu0 %v1146
        %v1148 = vpop.xlane.xlu0 %1147
        %v1149 = vsel %vm1139, %v1038, -inf
        %1150 = vmax.xlane.f32.xlu0 %v1149
        %v1151 = vpop.xlane.xlu0 %1150
        %v1152 = vsel %vm1139, %v1084, -inf
        %1153 = vmax.xlane.f32.xlu0 %v1152
        %v1154 = vpop.xlane.xlu0 %1153
        %v1155 = vsel %vm1139, %v1087, -inf
        %1156 = vmax.xlane.f32.xlu0 %v1155
        %v1157 = vpop.xlane.xlu0 %1156
        %v1158 = vsel %vm1139, %v1133, -inf
        %1159 = vmax.xlane.f32.xlu0 %v1158
        %v1160 = vpop.xlane.xlu0 %1159
        %v1161 = vsel %vm1139, %v1136, -inf
        %1162 = vmax.xlane.f32.xlu0 %v1161
        %v1163 = vpop.xlane.xlu0 %1162
        %v1164 = vsub.f32 %v986, %v1142
        %v1165 = vsub.f32 %v989, %v1145
        %v1166 = vsub.f32 %v1035, %v1148
        %v1167 = vsub.f32 %v1038, %v1151
        %v1168 = vsub.f32 %v1084, %v1154
        %v1169 = vsub.f32 %v1087, %v1157
        %v1170 = vsub.f32 %v1133, %v1160
        %v1171 = vsub.f32 %v1136, %v1163
        %v1172 = vmul.f32 %v1164, 1.442695
        %v1173 = vpow.pop %v1172
        %v1174 = vmul.f32 %v1165, 1.442695
        %v1175 = vpow.pop %v1174
        %v1176 = vmul.f32 %v1166, 1.442695
        %v1177 = vpow.pop %v1176
        %v1178 = vmul.f32 %v1167, 1.442695
        %v1179 = vpow.pop %v1178
        %v1180 = vmul.f32 %v1168, 1.442695
        %v1181 = vpow.pop %v1180
        %v1182 = vmul.f32 %v1169, 1.442695
        %v1183 = vpow.pop %v1182
        %v1184 = vmul.f32 %v1170, 1.442695
        %v1185 = vpow.pop %v1184
        %v1186 = vmul.f32 %v1171, 1.442695
        %v1187 = vpow.pop %v1186
        %v1188 = vsel %vm1139, %v1173, 0.0
        %1189 = vadd.xlane.f32.xlu0 %v1188
        %v1190 = vpop.xlane.xlu0 %1189
        %v1191 = vsel %vm1139, %v1175, 0.0
        %1192 = vadd.xlane.f32.xlu0 %v1191
        %v1193 = vpop.xlane.xlu0 %1192
        %v1194 = vsel %vm1139, %v1177, 0.0
        %1195 = vadd.xlane.f32.xlu0 %v1194
        %v1196 = vpop.xlane.xlu0 %1195
        %v1197 = vsel %vm1139, %v1179, 0.0
        %1198 = vadd.xlane.f32.xlu0 %v1197
        %v1199 = vpop.xlane.xlu0 %1198
        %v1200 = vsel %vm1139, %v1181, 0.0
        %1201 = vadd.xlane.f32.xlu0 %v1200
        %v1202 = vpop.xlane.xlu0 %1201
        %v1203 = vsel %vm1139, %v1183, 0.0
        %1204 = vadd.xlane.f32.xlu0 %v1203
        %v1205 = vpop.xlane.xlu0 %1204
        %v1206 = vsel %vm1139, %v1185, 0.0
        %1207 = vadd.xlane.f32.xlu0 %v1206
        %v1208 = vpop.xlane.xlu0 %1207
        %v1209 = vsel %vm1139, %v1187, 0.0
        %1210 = vadd.xlane.f32.xlu0 %v1209
        %v1211 = vpop.xlane.xlu0 %1210
        %v1212 = vpack.c.bf16 %v1175, %v1173
        %v1213 = vpack.c.bf16 %v1179, %v1177
        %v1214 = vpack.c.bf16 %v1183, %v1181
        %v1215 = vpack.c.bf16 %v1187, %v1185
        %1216 = vrot.lane.b32.xlu0 %v935, 64
        %v1217 = vpop.permute.xlu0 %1216
        %v1220 = vsel %vm1139, %v1212, 0
        %1222 = vmatprep.subr.bf16.mxu0 0
        %1223 = vmatpush1.bf16.msra.mxu0 %v1217
        %1224 = vmatprep.subr.bf16.mxu0 0
        %1225 = vmatpush1.bf16.msra.mxu0 0
        %1226 = vmatprep.subr.bf16.mxu0 0
        %1227 = vmatpush1.bf16.msra.mxu0 0
        %1228 = vmatprep.subr.bf16.mxu0 0
        %1229 = vmatpush1.bf16.msra.mxu0 0
        %1230 = vmatprep.subr.bf16.mxu0 0
        %1231 = vmatpush1.bf16.msra.mxu0 0
        %1232 = vmatprep.subr.bf16.mxu0 0
        %1233 = vmatpush1.bf16.msra.mxu0 0
        %1234 = vmatprep.subr.bf16.mxu0 0
        %1235 = vmatpush1.bf16.msra.mxu0 0
        %1236 = vmatprep.subr.bf16.mxu0 0
        %1237 = vmatpush1.bf16.msra.mxu0 0
        %1238 = vmatprep.subr.bf16.mxu0 0
        %1239 = vmatpush1.bf16.msra.mxu0 0
        %1240 = vmatprep.subr.bf16.mxu0 0
        %1241 = vmatpush1.bf16.msra.mxu0 0
        %1242 = vmatprep.subr.bf16.mxu0 0
        %1243 = vmatpush1.bf16.msra.mxu0 0
        %1244 = vmatprep.subr.bf16.mxu0 0
        %1245 = vmatpush1.bf16.msra.mxu0 0
        %1246 = vmatprep.subr.bf16.mxu0 0
        %1247 = vmatpush1.bf16.msra.mxu0 0
        %1248 = vmatprep.subr.bf16.mxu0 0
        %1249 = vmatpush1.bf16.msra.mxu0 0
        %1250 = vmatprep.subr.bf16.mxu0 0
        %1251 = vmatpush1.bf16.msra.mxu0 0
        %1252 = vmatprep.subr.bf16.mxu0 0
        %1253 = vmatpush1.bf16.msra.mxu0 0
        %1254 = vmatprep.mubr.bf16.mxu0 0
        %1255 = vmatmul.mubr.bf16.gmra.mrb[0].mxu0 %v1220
        %v1256 = vpop.f32.mrb[0].mxu0
        %v1257 = vadd.f32 0.0, %v1256
        %v1258 = vpop.f32.mrb[0].mxu0
        %v1259 = vpop.f32.mrb[0].mxu0
        %v1260 = vadd.f32 0.0, %v1259
        %v1261 = vpop.f32.mrb[0].mxu0
        %1262 = vdwg.mxu0
        %1263 = vrot.lane.b32.xlu0 %v938, 64
        %v1264 = vpop.permute.xlu0 %1263
        %v1267 = vsel %vm1139, %v1213, 0
        %1269 = vmatprep.subr.bf16.mxu0 0
        %1270 = vmatpush1.bf16.msra.mxu0 %v1264
        %1271 = vmatprep.subr.bf16.mxu0 0
        %1272 = vmatpush1.bf16.msra.mxu0 0
        %1273 = vmatprep.subr.bf16.mxu0 0
        %1274 = vmatpush1.bf16.msra.mxu0 0
        %1275 = vmatprep.subr.bf16.mxu0 0
        %1276 = vmatpush1.bf16.msra.mxu0 0
        %1277 = vmatprep.subr.bf16.mxu0 0
        %1278 = vmatpush1.bf16.msra.mxu0 0
        %1279 = vmatprep.subr.bf16.mxu0 0
        %1280 = vmatpush1.bf16.msra.mxu0 0
        %1281 = vmatprep.subr.bf16.mxu0 0
        %1282 = vmatpush1.bf16.msra.mxu0 0
        %1283 = vmatprep.subr.bf16.mxu0 0
        %1284 = vmatpush1.bf16.msra.mxu0 0
        %1285 = vmatprep.subr.bf16.mxu0 0
        %1286 = vmatpush1.bf16.msra.mxu0 0
        %1287 = vmatprep.subr.bf16.mxu0 0
        %1288 = vmatpush1.bf16.msra.mxu0 0
        %1289 = vmatprep.subr.bf16.mxu0 0
        %1290 = vmatpush1.bf16.msra.mxu0 0
        %1291 = vmatprep.subr.bf16.mxu0 0
        %1292 = vmatpush1.bf16.msra.mxu0 0
        %1293 = vmatprep.subr.bf16.mxu0 0
        %1294 = vmatpush1.bf16.msra.mxu0 0
        %1295 = vmatprep.subr.bf16.mxu0 0
        %1296 = vmatpush1.bf16.msra.mxu0 0
        %1297 = vmatprep.subr.bf16.mxu0 0
        %1298 = vmatpush1.bf16.msra.mxu0 0
        %1299 = vmatprep.subr.bf16.mxu0 0
        %1300 = vmatpush1.bf16.msra.mxu0 0
        %1301 = vmatprep.mubr.bf16.mxu0 0
        %1302 = vmatmul.mubr.bf16.gmra.mrb[0].mxu0 %v1267
        %v1303 = vpop.f32.mrb[0].mxu0
        %v1304 = vadd.f32 0.0, %v1303
        %v1305 = vpop.f32.mrb[0].mxu0
        %v1306 = vpop.f32.mrb[0].mxu0
        %v1307 = vadd.f32 0.0, %v1306
        %v1308 = vpop.f32.mrb[0].mxu0
        %1309 = vdwg.mxu0
        %1310 = vrot.lane.b32.xlu0 %v940, 64
        %v1311 = vpop.permute.xlu0 %1310
        %v1314 = vsel %vm1139, %v1214, 0
        %1316 = vmatprep.subr.bf16.mxu0 0
        %1317 = vmatpush1.bf16.msra.mxu0 %v1311
        %1318 = vmatprep.subr.bf16.mxu0 0
        %1319 = vmatpush1.bf16.msra.mxu0 0
        %1320 = vmatprep.subr.bf16.mxu0 0
        %1321 = vmatpush1.bf16.msra.mxu0 0
        %1322 = vmatprep.subr.bf16.mxu0 0
        %1323 = vmatpush1.bf16.msra.mxu0 0
        %1324 = vmatprep.subr.bf16.mxu0 0
        %1325 = vmatpush1.bf16.msra.mxu0 0
        %1326 = vmatprep.subr.bf16.mxu0 0
        %1327 = vmatpush1.bf16.msra.mxu0 0
        %1328 = vmatprep.subr.bf16.mxu0 0
        %1329 = vmatpush1.bf16.msra.mxu0 0
        %1330 = vmatprep.subr.bf16.mxu0 0
        %1331 = vmatpush1.bf16.msra.mxu0 0
        %1332 = vmatprep.subr.bf16.mxu0 0
        %1333 = vmatpush1.bf16.msra.mxu0 0
        %1334 = vmatprep.subr.bf16.mxu0 0
        %1335 = vmatpush1.bf16.msra.mxu0 0
        %1336 = vmatprep.subr.bf16.mxu0 0
        %1337 = vmatpush1.bf16.msra.mxu0 0
        %1338 = vmatprep.subr.bf16.mxu0 0
        %1339 = vmatpush1.bf16.msra.mxu0 0
        %1340 = vmatprep.subr.bf16.mxu0 0
        %1341 = vmatpush1.bf16.msra.mxu0 0
        %1342 = vmatprep.subr.bf16.mxu0 0
        %1343 = vmatpush1.bf16.msra.mxu0 0
        %1344 = vmatprep.subr.bf16.mxu0 0
        %1345 = vmatpush1.bf16.msra.mxu0 0
        %1346 = vmatprep.subr.bf16.mxu0 0
        %1347 = vmatpush1.bf16.msra.mxu0 0
        %1348 = vmatprep.mubr.bf16.mxu0 0
        %1349 = vmatmul.mubr.bf16.gmra.mrb[0].mxu0 %v1314
        %v1350 = vpop.f32.mrb[0].mxu0
        %v1351 = vadd.f32 0.0, %v1350
        %v1352 = vpop.f32.mrb[0].mxu0
        %v1353 = vpop.f32.mrb[0].mxu0
        %v1354 = vadd.f32 0.0, %v1353
        %v1355 = vpop.f32.mrb[0].mxu0
        %1356 = vdwg.mxu0
        %1357 = vrot.lane.b32.xlu0 %v942, 64
        %v1358 = vpop.permute.xlu0 %1357
        %v1361 = vsel %vm1139, %v1215, 0
        %1363 = vmatprep.subr.bf16.mxu0 0
        %1364 = vmatpush1.bf16.msra.mxu0 %v1358
        %1365 = vmatprep.subr.bf16.mxu0 0
        %1366 = vmatpush1.bf16.msra.mxu0 0
        %1367 = vmatprep.subr.bf16.mxu0 0
        %1368 = vmatpush1.bf16.msra.mxu0 0
        %1369 = vmatprep.subr.bf16.mxu0 0
        %1370 = vmatpush1.bf16.msra.mxu0 0
        %1371 = vmatprep.subr.bf16.mxu0 0
        %1372 = vmatpush1.bf16.msra.mxu0 0
        %1373 = vmatprep.subr.bf16.mxu0 0
        %1374 = vmatpush1.bf16.msra.mxu0 0
        %1375 = vmatprep.subr.bf16.mxu0 0
        %1376 = vmatpush1.bf16.msra.mxu0 0
        %1377 = vmatprep.subr.bf16.mxu0 0
        %1378 = vmatpush1.bf16.msra.mxu0 0
        %1379 = vmatprep.subr.bf16.mxu0 0
        %1380 = vmatpush1.bf16.msra.mxu0 0
        %1381 = vmatprep.subr.bf16.mxu0 0
        %1382 = vmatpush1.bf16.msra.mxu0 0
        %1383 = vmatprep.subr.bf16.mxu0 0
        %1384 = vmatpush1.bf16.msra.mxu0 0
        %1385 = vmatprep.subr.bf16.mxu0 0
        %1386 = vmatpush1.bf16.msra.mxu0 0
        %1387 = vmatprep.subr.bf16.mxu0 0
        %1388 = vmatpush1.bf16.msra.mxu0 0
        %1389 = vmatprep.subr.bf16.mxu0 0
        %1390 = vmatpush1.bf16.msra.mxu0 0
        %1391 = vmatprep.subr.bf16.mxu0 0
        %1392 = vmatpush1.bf16.msra.mxu0 0
        %1393 = vmatprep.subr.bf16.mxu0 0
        %1394 = vmatpush1.bf16.msra.mxu0 0
        %1395 = vmatprep.mubr.bf16.mxu0 0
        %1396 = vmatmul.mubr.bf16.gmra.mrb[0].mxu0 %v1361
        %v1397 = vpop.f32.mrb[0].mxu0
        %v1398 = vadd.f32 0.0, %v1397
        %v1399 = vpop.f32.mrb[0].mxu0
        %v1400 = vpop.f32.mrb[0].mxu0
        %v1401 = vadd.f32 0.0, %v1400
        %v1402 = vpop.f32.mrb[0].mxu0
        %1403 = vdwg.mxu0
        %v1404 = vrcp.pop %v1190
        %v1405 = vrcp.pop %v1193
        %v1406 = vrcp.pop %v1196
        %v1407 = vrcp.pop %v1199
        %v1408 = vrcp.pop %v1202
        %v1409 = vrcp.pop %v1205
        %v1410 = vrcp.pop %v1208
        %v1411 = vrcp.pop %v1211
        %v1412 = vmul.f32 %v1257, %v1404
        %v1413 = vmul.f32 %v1260, %v1405
        %v1414 = vmul.f32 %v1304, %v1406
        %v1415 = vmul.f32 %v1307, %v1407
        %v1416 = vmul.f32 %v1351, %v1408
        %v1417 = vmul.f32 %v1354, %v1409
        %v1418 = vmul.f32 %v1398, %v1410
        %v1419 = vmul.f32 %v1401, %v1411
        %v1420 = vpack.c.bf16 %v1413, %v1412
        %v1421 = vpack.c.bf16 %v1415, %v1414
        %v1422 = vpack.c.bf16 %v1417, %v1416
        %v1423 = vpack.c.bf16 %v1419, %v1418
        %1425 = vrot.lane.b32.xlu0 %v1421, 8
        %v1426 = vpop.permute.xlu0 %1425
        %1428 = vrot.lane.b32.xlu0 %v1422, 16
        %v1429 = vpop.permute.xlu0 %1428
        %1431 = vrot.lane.b32.xlu0 %v1423, 24
        %v1432 = vpop.permute.xlu0 %1431
        %v1435 = vsel %vm945, %v1420, %v1426
        %v1437 = vsel %vm1139, %v1435, %v1429
        %vm1438 = vcmask 195584
        %v1440 = vsel %vm1438, %v1437, %v1432
        %v1441 = vld [vmem:[%s12] sm:$0xf]
        %v1442 = vld [vmem:[%s12 + $0x4] sm:$0xf]
        %v1443 = vld [vmem:[%s12 + $0x8] sm:$0xf]
        %v1444 = vld [vmem:[%s12 + $0xc] sm:$0xf]
        %v1449 = vunpack.c.l.b16 %v1441
        %v1450 = vunpack.c.l.b16 %v1442
        %v1451 = vunpack.c.l.b16 %v1443
        %v1452 = vunpack.c.l.b16 %v1444
        %v1453 = vpack.c.b16 %v1450, %v1449
        %v1454 = vpack.c.b16 %v1452, %v1451
        %v1457 = vsel %vm656, %v1440, 0
        %1459 = vmatprep.subr.bf16.mxu0 0
        %1460 = vmatpush1.bf16.msra.mxu0 %v1453
        %1461 = vmatprep.subr.bf16.mxu0 0
        %1462 = vmatpush1.bf16.msra.mxu0 %v1454
        %1463 = vmatprep.subr.bf16.mxu0 0
        %1464 = vmatpush1.bf16.msra.mxu0 0
        %1465 = vmatprep.subr.bf16.mxu0 0
        %1466 = vmatpush1.bf16.msra.mxu0 0
        %1467 = vmatprep.subr.bf16.mxu0 0
        %1468 = vmatpush1.bf16.msra.mxu0 0
        %1469 = vmatprep.subr.bf16.mxu0 0
        %1470 = vmatpush1.bf16.msra.mxu0 0
        %1471 = vmatprep.subr.bf16.mxu0 0
        %1472 = vmatpush1.bf16.msra.mxu0 0
        %1473 = vmatprep.subr.bf16.mxu0 0
        %1474 = vmatpush1.bf16.msra.mxu0 0
        %1475 = vmatprep.subr.bf16.mxu0 0
        %1476 = vmatpush1.bf16.msra.mxu0 0
        %1477 = vmatprep.subr.bf16.mxu0 0
        %1478 = vmatpush1.bf16.msra.mxu0 0
        %1479 = vmatprep.subr.bf16.mxu0 0
        %1480 = vmatpush1.bf16.msra.mxu0 0
        %1481 = vmatprep.subr.bf16.mxu0 0
        %1482 = vmatpush1.bf16.msra.mxu0 0
        %1483 = vmatprep.subr.bf16.mxu0 0
        %1484 = vmatpush1.bf16.msra.mxu0 0
        %1485 = vmatprep.subr.bf16.mxu0 0
        %1486 = vmatpush1.bf16.msra.mxu0 0
        %1487 = vmatprep.subr.bf16.mxu0 0
        %1488 = vmatpush1.bf16.msra.mxu0 0
        %1489 = vmatprep.subr.bf16.mxu0 0
        %1490 = vmatpush1.bf16.msra.mxu0 0
        %1491 = vmatprep.mubr.bf16.mxu0 0
        %1492 = vmatmul.mubr.bf16.gmra.mrb[0].mxu0 %v1457
        %v1493 = vpop.f32.mrb[0].mxu0
        %v1494 = vadd.f32 0.0, %v1493
        %v1495 = vpop.f32.mrb[0].mxu0
        %v1496 = vpop.f32.mrb[0].mxu0
        %v1497 = vpop.f32.mrb[0].mxu0
        %1498 = vdwg.mxu0
        %v1499 = vld [vmem:[%s13] sm:$0xf]
        %v1500 = vld [vmem:[%s13 + $0x4] sm:$0xf]
        %v1501 = vld [vmem:[%s13 + $0x8] sm:$0xf]
        %v1502 = vld [vmem:[%s13 + $0xc] sm:$0xf]
        %v1504 = vrot.slane %v1440, 4
        %v1509 = vunpack.c.l.b16 %v1499
        %v1510 = vunpack.c.l.b16 %v1500
        %v1511 = vunpack.c.l.b16 %v1501
        %v1512 = vunpack.c.l.b16 %v1502
        %v1513 = vpack.c.b16 %v1510, %v1509
        %v1514 = vpack.c.b16 %v1512, %v1511
        %v1518 = vsel %vm656, %v1504, 0
        %1520 = vmatprep.subr.bf16.mxu0 0
        %1521 = vmatpush1.bf16.msra.mxu0 %v1513
        %1522 = vmatprep.subr.bf16.mxu0 0
        %1523 = vmatpush1.bf16.msra.mxu0 %v1514
        %1524 = vmatprep.subr.bf16.mxu0 0
        %1525 = vmatpush1.bf16.msra.mxu0 0
        %1526 = vmatprep.subr.bf16.mxu0 0
        %1527 = vmatpush1.bf16.msra.mxu0 0
        %1528 = vmatprep.subr.bf16.mxu0 0
        %1529 = vmatpush1.bf16.msra.mxu0 0
        %1530 = vmatprep.subr.bf16.mxu0 0
        %1531 = vmatpush1.bf16.msra.mxu0 0
        %1532 = vmatprep.subr.bf16.mxu0 0
        %1533 = vmatpush1.bf16.msra.mxu0 0
        %1534 = vmatprep.subr.bf16.mxu0 0
        %1535 = vmatpush1.bf16.msra.mxu0 0
        %1536 = vmatprep.subr.bf16.mxu0 0
        %1537 = vmatpush1.bf16.msra.mxu0 0
        %1538 = vmatprep.subr.bf16.mxu0 0
        %1539 = vmatpush1.bf16.msra.mxu0 0
        %1540 = vmatprep.subr.bf16.mxu0 0
        %1541 = vmatpush1.bf16.msra.mxu0 0
        %1542 = vmatprep.subr.bf16.mxu0 0
        %1543 = vmatpush1.bf16.msra.mxu0 0
        %1544 = vmatprep.subr.bf16.mxu0 0
        %1545 = vmatpush1.bf16.msra.mxu0 0
        %1546 = vmatprep.subr.bf16.mxu0 0
        %1547 = vmatpush1.bf16.msra.mxu0 0
        %1548 = vmatprep.subr.bf16.mxu0 0
        %1549 = vmatpush1.bf16.msra.mxu0 0
        %1550 = vmatprep.subr.bf16.mxu0 0
        %1551 = vmatpush1.bf16.msra.mxu0 0
        %1552 = vmatprep.mubr.bf16.mxu0 0
        %1553 = vmatmul.mubr.bf16.gmra.mrb[0].mxu0 %v1518
        %v1554 = vpop.f32.mrb[0].mxu0
        %v1555 = vadd.f32 0.0, %v1554
        %v1556 = vpop.f32.mrb[0].mxu0
        %v1557 = vpop.f32.mrb[0].mxu0
        %v1558 = vpop.f32.mrb[0].mxu0
        %1559 = vdwg.mxu0
        %1560 = vst [vmem:[%s629] sm:$0xff] %v1494
        %1561 = vst [vmem:[%s636] sm:$0xff] %v1555
        %s1562 = sand.u32 %s354, 1
        %s1563 = scalar_lea.sflag [#allocation4], %s1562
        %s1564 = sand.u32 %s354, 1
        %s1565 = smul.addr %s1564, 8
        %s1566 = scalar_lea.vmem [#allocation16], %s1565
        %s1567 = sand.u32 %s380, 1
        %s1568 = scalar_lea.sflag [#allocation18], %s1567
        %s1569 = sand.u32 %s380, 1
        %s1570 = smul.addr %s1569, 8
        %s1571 = scalar_lea.vmem [#allocation17], %s1570
        // Predicated region
        $region109: #{tpu_custom_call.1} parent=75 // pred_check
          %p1572 = pneg %p364
        $region110: #{tpu_custom_call.1} parent=75 // pred_check_branch
          %1574 = sbr.rel (%p1572) target = $region112
        $region111: #{tpu_custom_call.1} parent=75 // pred_region
          %s1576 = ssub.s32 128, 128
          %1577 = vsyncadd %s1563, %s1576
          %s1578 = smul.addr %s42, 128
          %s1579 = scalar_lea.hbm %s14, %s1578
          %s1581 = sshll.u32 %s1566, 4
          %s1582 = int_to_ptr.vmem [resolvable:$true] %s1581
          %1584 = dma.vmem_to_hbm [thread:$0]  %s1582, 128, %s1579, %s1563
        $region112: #{tpu_custom_call.1} parent=75 // pred_fallthru
          _
        // Predicated region
        $region113: #{tpu_custom_call.1} parent=75 // pred_check
          %p1585 = pneg %p390
        $region114: #{tpu_custom_call.1} parent=75 // pred_check_branch
          %1587 = sbr.rel (%p1585) target = $region116
        $region115: #{tpu_custom_call.1} parent=75 // pred_region
          %s1589 = ssub.s32 128, 128
          %1590 = vsyncadd %s1568, %s1589
          %s1591 = smul.addr %s42, 128
          %s1592 = scalar_lea.hbm %s15, %s1591
          %s1594 = sshll.u32 %s1571, 4
          %s1595 = int_to_ptr.vmem [resolvable:$true] %s1594
          %1597 = dma.vmem_to_hbm [thread:$0]  %s1595, 128, %s1592, %s1568
        $region116: #{tpu_custom_call.1} parent=75 // pred_fallthru
          _
      $region76: #{tpu_custom_call.1} parent=5 // pred_fallthru
        _
      %p1598 = scmp.le.s32.totalorder 2, %s37
      // Predicated region
      $region117: #{tpu_custom_call.1} parent=5 // pred_check
        %p1599 = pneg %p1598
      $region118: #{tpu_custom_call.1} parent=5 // pred_check_branch
        %1601 = sbr.rel (%p1599) target = $region120
      $region119: #{tpu_custom_call.1} parent=5 // pred_region
        %s1602 = ssub.s32 %s37, 2
        // Predicated region
        $region121: #{tpu_custom_call.1} parent=119 // pred_check
          %p1603 = pneg %p370
        $region122: #{tpu_custom_call.1} parent=119 // pred_check_branch
          %1605 = sbr.rel (%p1603) target = $region124
        $region123: #{tpu_custom_call.1} parent=119 // pred_region
          %s1606 = sand.u32 %s355, 1
          %s1607 = scalar_lea.sflag [#allocation4], %s1606
          %s1608 = sand.u32 %s355, 1
          %s1609 = smul.addr %s1608, 8
          %s1610 = scalar_lea.vmem [#allocation16], %s1609
          %1611 = dma.done %s1607, 128
        $region124: #{tpu_custom_call.1} parent=119 // pred_fallthru
          _
        // Predicated region
        $region125: #{tpu_custom_call.1} parent=119 // pred_check
          %p1612 = pneg %p396
        $region126: #{tpu_custom_call.1} parent=119 // pred_check_branch
          %1614 = sbr.rel (%p1612) target = $region128
        $region127: #{tpu_custom_call.1} parent=119 // pred_region
          %s1615 = sand.u32 %s381, 1
          %s1616 = scalar_lea.sflag [#allocation18], %s1615
          %s1617 = sand.u32 %s381, 1
          %s1618 = smul.addr %s1617, 8
          %s1619 = scalar_lea.vmem [#allocation17], %s1618
          %1620 = dma.done %s1616, 128
        $region128: #{tpu_custom_call.1} parent=119 // pred_fallthru
          _
      $region120: #{tpu_custom_call.1} parent=5 // pred_fallthru
        _
    $region6: #{tpu_custom_call.1} parent=1 // loop_footer
      %s41 = sadd.s32 1, %s37
    $region7: #{tpu_custom_call.1} parent=1 // loop_footer_branch
      %36 = sbr.rel target = $region3
    $region8: #{tpu_custom_call.1} parent=1 // loop_exit
      _
    %1621 = vsyncpa [#allocation3], 1
    %s1622 = scalar_lea.sflag [#allocation3], 1
    %1623 = vsyncpa %s1622, 1
    %1624 = vsyncpa [#allocation6], 1
    %s1625 = scalar_lea.sflag [#allocation6], 1
    %1626 = vsyncpa %s1625, 1
    %1627 = vsyncpa [#allocation9], 1
    %1628 = vsyncpa [#allocation12], 1
    %1629 = vsyncpa [#allocation15], 1
    %1630 = vsyncpa [#allocation4], 1
    %s1631 = scalar_lea.sflag [#allocation4], 1
    %1632 = vsyncpa %s1631, 1
    %1633 = vsyncpa [#allocation18], 1
    %s1634 = scalar_lea.sflag [#allocation18], 1
    %1635 = vsyncpa %s1634, 1

// kernel: tpu_custom_call.1
$region0: #{tpu_custom_call.1}
  #allocation0 [shape = 'u32[]', space=smem, size = 0x4, offset = 0x4, fixed_abs, tag = 'smem constant byte address 0x4 - core index']
  #allocation1 [shape = 'u32[144,128]{1,0:T(1,128)}', space=vmem, size = 0x12000, scoped, tag = 'internal scratch']
  %s0 = inlined_call_operand.hbm [shape: bf16[2,8,32], index: 0, kind: input, shape index: {}]
  %s1 = inlined_call_operand.hbm [shape: bf16[2,8,32], index: 1, kind: input, shape index: {}]
  %s2 = inlined_call_operand.hbm [shape: bf16[32,96], index: 2, kind: input, shape index: {}]
  %s3 = inlined_call_operand.hbm [shape: bf16[32,96], index: 3, kind: input, shape index: {}]
  %s4 = inlined_call_operand.vmem [shape: f32[1,32], index: 4, kind: input, shape index: {}]
  %s5 = inlined_call_operand.vmem [shape: f32[1,32], index: 5, kind: input, shape index: {}]
  %s6 = inlined_call_operand.hbm [shape: f32[1,32], index: 6, kind: input, shape index: {}]
  %s7 = inlined_call_operand.hbm [shape: f32[1,32], index: 7, kind: input, shape index: {}]
  %s8 = inlined_call_operand.hbm [shape: f32[1,32], index: 8, kind: input, shape index: {}]
  %s9 = inlined_call_operand.hbm [shape: f32[1,32], index: 9, kind: input, shape index: {}]
  %s10 = inlined_call_operand.vmem [shape: f32[1,32], index: 10, kind: input, shape index: {}]
  %s11 = inlined_call_operand.vmem [shape: f32[1,32], index: 11, kind: input, shape index: {}]
  %s12 = inlined_call_operand.vmem [shape: bf16[32,128], index: 12, kind: input, shape index: {}]
  %s13 = inlined_call_operand.vmem [shape: bf16[32,128], index: 13, kind: input, shape index: {}]
  %s14 = inlined_call_operand.hbm [shape: f32[2,8,128], index: 14, kind: output, shape index: {0}]
  %s15 = inlined_call_operand.hbm [shape: f32[2,8,128], index: 15, kind: output, shape index: {1}]
  %16 = xla_tuple %s14, %s15
  %s17 = sld [smem:[#allocation0]]
  $region129: #{tpu_custom_call.1} parent=0
    _
  %s19 = ssub.s32 1, %s17
  %s20 = scalar_select 0, %s19, %s17
  $region1: #{tpu_custom_call.1} parent=0
    #allocation2 [shape = 'u8[4096]{0}', space=vmem, size = 0x1000, scoped, tag = 'input window, operand 0']
    #allocation3 [shape = 's32[2]{0}', space=sflag, size = 0x8, scoped, tag = 'scoped memory for tpu_custom_call.1']
    #allocation4 [shape = 's32[2]{0}', space=sflag, size = 0x8, scoped, tag = 'scoped memory for tpu_custom_call.1']
    #allocation5 [shape = 'u8[4096]{0}', space=vmem, size = 0x1000, scoped, tag = 'input window, operand 1']
    #allocation6 [shape = 's32[2]{0}', space=sflag, size = 0x8, scoped, tag = 'scoped memory for tpu_custom_call.1']
    #allocation7 [shape = 'u8[8192]{0}', space=vmem, size = 0x2000, scoped, tag = 'input window, operand 2, single buffered']
    #allocation8 [shape = 'u8[8192]{0}', space=vmem, size = 0x2000, scoped, tag = 'input window, operand 3, single buffered']
    #allocation9 [shape = 's32[1]{0}', space=sflag, size = 0x4, scoped, tag = 'scoped memory for tpu_custom_call.1']
    #allocation10 [shape = 'u8[512]{0}', space=vmem, size = 0x400, scoped, tag = 'input window, operand 6, single buffered']
    #allocation11 [shape = 'u8[512]{0}', space=vmem, size = 0x400, scoped, tag = 'input window, operand 7, single buffered']
    #allocation12 [shape = 's32[1]{0}', space=sflag, size = 0x4, scoped, tag = 'scoped memory for tpu_custom_call.1']
    #allocation13 [shape = 'u8[512]{0}', space=vmem, size = 0x400, scoped, tag = 'input window, operand 8, single buffered']
    #allocation14 [shape = 'u8[512]{0}', space=vmem, size = 0x400, scoped, tag = 'input window, operand 9, single buffered']
    #allocation15 [shape = 's32[1]{0}', space=sflag, size = 0x4, scoped, tag = 'scoped memory for tpu_custom_call.1']
    #allocation16 [shape = 'u8[8192]{0}', space=vmem, size = 0x2000, scoped, tag = 'output window, operand 0']
    #allocation17 [shape = 'u8[8192]{0}', space=vmem, size = 0x2000, scoped, tag = 'output window, operand 1']
    #allocation18 [shape = 's32[2]{0}', space=sflag, size = 0x8, scoped, tag = 'scoped memory for tpu_custom_call.1']
    %21 = vsyncpa [#allocation3], 0
    %s22 = scalar_lea.sflag [#allocation3], 1
    %23 = vsyncpa %s22, 0
    %24 = vsyncpa [#allocation6], 0
    %s25 = scalar_lea.sflag [#allocation6], 1
    %26 = vsyncpa %s25, 0
    %27 = vsyncpa [#allocation9], 0
    %28 = vsyncpa [#allocation12], 0
    %29 = vsyncpa [#allocation15], 0
    %30 = vsyncpa [#allocation4], 0
    %s31 = scalar_lea.sflag [#allocation4], 1
    %32 = vsyncpa %s31, 0
    %33 = vsyncpa [#allocation18], 0
    %s34 = scalar_lea.sflag [#allocation18], 1
    %35 = vsyncpa %s34, 0
    loop: start=0, step=1, limit=4
    $region2: #{tpu_custom_call.1} parent=1 // loop_pre_header
      _
    $region3: #{tpu_custom_call.1} parent=1 // loop_header
      %s37 = sphi 0, %s41
      %p38 = scmp.ge.s32.totalorder %s37, 4
      %s47 = sphi 0, %s49
      %s50 = sphi 0, %s47
      %s51 = sphi 0, %s50
      %s67 = sphi 0, %s51
      %s73 = sphi 0, %s75
      %s76 = sphi 0, %s73
      %s77 = sphi 0, %s76
      %s93 = sphi 0, %s77
      %s97 = sphi 0, %s97
      %s99 = sphi 0, %s97
      %s100 = sphi 0, %s99
      %s114 = sphi 0, %s100
      %s118 = sphi 0, %s118
      %s120 = sphi 0, %s118
      %s121 = sphi 0, %s120
      %s135 = sphi 0, %s121
      %s139 = sphi 0, %s139
      %s141 = sphi 0, %s139
      %s142 = sphi 0, %s141
      %s156 = sphi 0, %s142
      %s160 = sphi 0, %s160
      %s162 = sphi 0, %s160
      %s163 = sphi 0, %s162
      %s177 = sphi 0, %s163
      %s181 = sphi 0, %s181
      %s183 = sphi 0, %s181
      %s184 = sphi 0, %s183
      %s198 = sphi 0, %s184
      %s202 = sphi 0, %s202
      %s204 = sphi 0, %s202
      %s205 = sphi 0, %s204
      %s219 = sphi 0, %s205
      %s223 = sphi 0, %s223
      %s225 = sphi 0, %s223
      %s226 = sphi 0, %s225
      %s240 = sphi 0, %s226
      %s244 = sphi 0, %s244
      %s246 = sphi 0, %s244
      %s247 = sphi 0, %s246
      %s261 = sphi 0, %s247
      %s265 = sphi 0, %s265
      %s267 = sphi 0, %s265
      %s268 = sphi 0, %s267
      %s282 = sphi 0, %s268
      %s286 = sphi 0, %s286
      %s288 = sphi 0, %s286
      %s289 = sphi 0, %s288
      %s303 = sphi 0, %s289
      %s307 = sphi 0, %s307
      %s309 = sphi 0, %s307
      %s310 = sphi 0, %s309
      %s324 = sphi 0, %s310
      %s328 = sphi 0, %s328
      %s330 = sphi 0, %s328
      %s331 = sphi 0, %s330
      %s345 = sphi 0, %s331
      %s351 = sphi 0, %s353
      %s354 = sphi 0, %s351
      %s355 = sphi 0, %s354
      %s371 = sphi 0, %s355
      %s377 = sphi 0, %s379
      %s380 = sphi 0, %s377
      %s381 = sphi 0, %s380
      %s397 = sphi 0, %s381
    $region4: #{tpu_custom_call.1} parent=1 // loop_header_branch
      %40 = sbr.rel (%p38) target = $region8
    $region5: #{tpu_custom_call.1} parent=1 // loop_body
      %s42 = ssub.s32 %s37, 1
      %s43 = ssub.s32 %s37, 2
      %s44 = sadd.s32 %s37, 1
      %s45 = ssub.s32 %s37, %s44
      %p46 = scmp.eq.s32.totalorder %s45, 0
      %s48 = sadd.s32 %s47, 1
      %s49 = scalar_select %p46, %s47, %s48
      %p52 = pneg %p46
      %p53 = scmp.eq.s32.totalorder %s37, 1
      %p54 = por %p52, %p53
      %p55 = scmp.ne.s32.totalorder %s47, %s50
      %p56 = scmp.eq.s32.totalorder %s37, 0
      %p57 = por %p55, %p56
      %p58 = scmp.ne.s32.totalorder %s47, %s50
      %p59 = scmp.eq.s32.totalorder %s42, 1
      %p60 = por %p58, %p59
      %p61 = scmp.ne.s32.totalorder %s50, %s51
      %p62 = scmp.eq.s32.totalorder %s42, 0
      %p63 = por %p61, %p62
      %p64 = scmp.ne.s32.totalorder %s50, %s51
      %p65 = scmp.eq.s32.totalorder %s43, 1
      %p66 = por %p64, %p65
      %p68 = scmp.ne.s32.totalorder %s51, %s67
      %p69 = scmp.eq.s32.totalorder %s43, 0
      %p70 = por %p68, %p69
      %s71 = ssub.s32 %s37, %s44
      %p72 = scmp.eq.s32.totalorder %s71, 0
      %s74 = sadd.s32 %s73, 1
      %s75 = scalar_select %p72, %s73, %s74
      %p78 = pneg %p72
      %p79 = scmp.eq.s32.totalorder %s37, 1
      %p80 = por %p78, %p79
      %p81 = scmp.ne.s32.totalorder %s73, %s76
      %p82 = scmp.eq.s32.totalorder %s37, 0
      %p83 = por %p81, %p82
      %p84 = scmp.ne.s32.totalorder %s73, %s76
      %p85 = scmp.eq.s32.totalorder %s42, 1
      %p86 = por %p84, %p85
      %p87 = scmp.ne.s32.totalorder %s76, %s77
      %p88 = scmp.eq.s32.totalorder %s42, 0
      %p89 = por %p87, %p88
      %p90 = scmp.ne.s32.totalorder %s76, %s77
      %p91 = scmp.eq.s32.totalorder %s43, 1
      %p92 = por %p90, %p91
      %p94 = scmp.ne.s32.totalorder %s77, %s93
      %p95 = scmp.eq.s32.totalorder %s43, 0
      %p96 = por %p94, %p95
      %s98 = sadd.s32 %s97, 1
      %p101 = scmp.eq.s32.totalorder %s37, 1
      %p102 = scmp.ne.s32.totalorder %s97, %s99
      %p103 = scmp.eq.s32.totalorder %s37, 0
      %p104 = por %p102, %p103
      %p105 = scmp.ne.s32.totalorder %s97, %s99
      %p106 = scmp.eq.s32.totalorder %s42, 1
      %p107 = por %p105, %p106
      %p108 = scmp.ne.s32.totalorder %s99, %s100
      %p109 = scmp.eq.s32.totalorder %s42, 0
      %p110 = por %p108, %p109
      %p111 = scmp.ne.s32.totalorder %s99, %s100
      %p112 = scmp.eq.s32.totalorder %s43, 1
      %p113 = por %p111, %p112
      %p115 = scmp.ne.s32.totalorder %s100, %s114
      %p116 = scmp.eq.s32.totalorder %s43, 0
      %p117 = por %p115, %p116
      %s119 = sadd.s32 %s118, 1
      %p122 = scmp.eq.s32.totalorder %s37, 1
      %p123 = scmp.ne.s32.totalorder %s118, %s120
      %p124 = scmp.eq.s32.totalorder %s37, 0
      %p125 = por %p123, %p124
      %p126 = scmp.ne.s32.totalorder %s118, %s120
      %p127 = scmp.eq.s32.totalorder %s42, 1
      %p128 = por %p126, %p127
      %p129 = scmp.ne.s32.totalorder %s120, %s121
      %p130 = scmp.eq.s32.totalorder %s42, 0
      %p131 = por %p129, %p130
      %p132 = scmp.ne.s32.totalorder %s120, %s121
      %p133 = scmp.eq.s32.totalorder %s43, 1
      %p134 = por %p132, %p133
      %p136 = scmp.ne.s32.totalorder %s121, %s135
      %p137 = scmp.eq.s32.totalorder %s43, 0
      %p138 = por %p136, %p137
      %s140 = sadd.s32 %s139, 1
      %p143 = scmp.eq.s32.totalorder %s37, 1
      %p144 = scmp.ne.s32.totalorder %s139, %s141
      %p145 = scmp.eq.s32.totalorder %s37, 0
      %p146 = por %p144, %p145
      %p147 = scmp.ne.s32.totalorder %s139, %s141
      %p148 = scmp.eq.s32.totalorder %s42, 1
      %p149 = por %p147, %p148
      %p150 = scmp.ne.s32.totalorder %s141, %s142
      %p151 = scmp.eq.s32.totalorder %s42, 0
      %p152 = por %p150, %p151
      %p153 = scmp.ne.s32.totalorder %s141, %s142
      %p154 = scmp.eq.s32.totalorder %s43, 1
      %p155 = por %p153, %p154
      %p157 = scmp.ne.s32.totalorder %s142, %s156
      %p158 = scmp.eq.s32.totalorder %s43, 0
      %p159 = por %p157, %p158
      %s161 = sadd.s32 %s160, 1
      %p164 = scmp.eq.s32.totalorder %s37, 1
      %p165 = scmp.ne.s32.totalorder %s160, %s162
      %p166 = scmp.eq.s32.totalorder %s37, 0
      %p167 = por %p165, %p166
      %p168 = scmp.ne.s32.totalorder %s160, %s162
      %p169 = scmp.eq.s32.totalorder %s42, 1
      %p170 = por %p168, %p169
      %p171 = scmp.ne.s32.totalorder %s162, %s163
      %p172 = scmp.eq.s32.totalorder %s42, 0
      %p173 = por %p171, %p172
      %p174 = scmp.ne.s32.totalorder %s162, %s163
      %p175 = scmp.eq.s32.totalorder %s43, 1
      %p176 = por %p174, %p175
      %p178 = scmp.ne.s32.totalorder %s163, %s177
      %p179 = scmp.eq.s32.totalorder %s43, 0
      %p180 = por %p178, %p179
      %s182 = sadd.s32 %s181, 1
      %p185 = scmp.eq.s32.totalorder %s37, 1
      %p186 = scmp.ne.s32.totalorder %s181, %s183
      %p187 = scmp.eq.s32.totalorder %s37, 0
      %p188 = por %p186, %p187
      %p189 = scmp.ne.s32.totalorder %s181, %s183
      %p190 = scmp.eq.s32.totalorder %s42, 1
      %p191 = por %p189, %p190
      %p192 = scmp.ne.s32.totalorder %s183, %s184
      %p193 = scmp.eq.s32.totalorder %s42, 0
      %p194 = por %p192, %p193
      %p195 = scmp.ne.s32.totalorder %s183, %s184
      %p196 = scmp.eq.s32.totalorder %s43, 1
      %p197 = por %p195, %p196
      %p199 = scmp.ne.s32.totalorder %s184, %s198
      %p200 = scmp.eq.s32.totalorder %s43, 0
      %p201 = por %p199, %p200
      %s203 = sadd.s32 %s202, 1
      %p206 = scmp.eq.s32.totalorder %s37, 1
      %p207 = scmp.ne.s32.totalorder %s202, %s204
      %p208 = scmp.eq.s32.totalorder %s37, 0
      %p209 = por %p207, %p208
      %p210 = scmp.ne.s32.totalorder %s202, %s204
      %p211 = scmp.eq.s32.totalorder %s42, 1
      %p212 = por %p210, %p211
      %p213 = scmp.ne.s32.totalorder %s204, %s205
      %p214 = scmp.eq.s32.totalorder %s42, 0
      %p215 = por %p213, %p214
      %p216 = scmp.ne.s32.totalorder %s204, %s205
      %p217 = scmp.eq.s32.totalorder %s43, 1
      %p218 = por %p216, %p217
      %p220 = scmp.ne.s32.totalorder %s205, %s219
      %p221 = scmp.eq.s32.totalorder %s43, 0
      %p222 = por %p220, %p221
      %s224 = sadd.s32 %s223, 1
      %p227 = scmp.eq.s32.totalorder %s37, 1
      %p228 = scmp.ne.s32.totalorder %s223, %s225
      %p229 = scmp.eq.s32.totalorder %s37, 0
      %p230 = por %p228, %p229
      %p231 = scmp.ne.s32.totalorder %s223, %s225
      %p232 = scmp.eq.s32.totalorder %s42, 1
      %p233 = por %p231, %p232
      %p234 = scmp.ne.s32.totalorder %s225, %s226
      %p235 = scmp.eq.s32.totalorder %s42, 0
      %p236 = por %p234, %p235
      %p237 = scmp.ne.s32.totalorder %s225, %s226
      %p238 = scmp.eq.s32.totalorder %s43, 1
      %p239 = por %p237, %p238
      %p241 = scmp.ne.s32.totalorder %s226, %s240
      %p242 = scmp.eq.s32.totalorder %s43, 0
      %p243 = por %p241, %p242
      %s245 = sadd.s32 %s244, 1
      %p248 = scmp.eq.s32.totalorder %s37, 1
      %p249 = scmp.ne.s32.totalorder %s244, %s246
      %p250 = scmp.eq.s32.totalorder %s37, 0
      %p251 = por %p249, %p250
      %p252 = scmp.ne.s32.totalorder %s244, %s246
      %p253 = scmp.eq.s32.totalorder %s42, 1
      %p254 = por %p252, %p253
      %p255 = scmp.ne.s32.totalorder %s246, %s247
      %p256 = scmp.eq.s32.totalorder %s42, 0
      %p257 = por %p255, %p256
      %p258 = scmp.ne.s32.totalorder %s246, %s247
      %p259 = scmp.eq.s32.totalorder %s43, 1
      %p260 = por %p258, %p259
      %p262 = scmp.ne.s32.totalorder %s247, %s261
      %p263 = scmp.eq.s32.totalorder %s43, 0
      %p264 = por %p262, %p263
      %s266 = sadd.s32 %s265, 1
      %p269 = scmp.eq.s32.totalorder %s37, 1
      %p270 = scmp.ne.s32.totalorder %s265, %s267
      %p271 = scmp.eq.s32.totalorder %s37, 0
      %p272 = por %p270, %p271
      %p273 = scmp.ne.s32.totalorder %s265, %s267
      %p274 = scmp.eq.s32.totalorder %s42, 1
      %p275 = por %p273, %p274
      %p276 = scmp.ne.s32.totalorder %s267, %s268
      %p277 = scmp.eq.s32.totalorder %s42, 0
      %p278 = por %p276, %p277
      %p279 = scmp.ne.s32.totalorder %s267, %s268
      %p280 = scmp.eq.s32.totalorder %s43, 1
      %p281 = por %p279, %p280
      %p283 = scmp.ne.s32.totalorder %s268, %s282
      %p284 = scmp.eq.s32.totalorder %s43, 0
      %p285 = por %p283, %p284
      %s287 = sadd.s32 %s286, 1
      %p290 = scmp.eq.s32.totalorder %s37, 1
      %p291 = scmp.ne.s32.totalorder %s286, %s288
      %p292 = scmp.eq.s32.totalorder %s37, 0
      %p293 = por %p291, %p292
      %p294 = scmp.ne.s32.totalorder %s286, %s288
      %p295 = scmp.eq.s32.totalorder %s42, 1
      %p296 = por %p294, %p295
      %p297 = scmp.ne.s32.totalorder %s288, %s289
      %p298 = scmp.eq.s32.totalorder %s42, 0
      %p299 = por %p297, %p298
      %p300 = scmp.ne.s32.totalorder %s288, %s289
      %p301 = scmp.eq.s32.totalorder %s43, 1
      %p302 = por %p300, %p301
      %p304 = scmp.ne.s32.totalorder %s289, %s303
      %p305 = scmp.eq.s32.totalorder %s43, 0
      %p306 = por %p304, %p305
      %s308 = sadd.s32 %s307, 1
      %p311 = scmp.eq.s32.totalorder %s37, 1
      %p312 = scmp.ne.s32.totalorder %s307, %s309
      %p313 = scmp.eq.s32.totalorder %s37, 0
      %p314 = por %p312, %p313
      %p315 = scmp.ne.s32.totalorder %s307, %s309
      %p316 = scmp.eq.s32.totalorder %s42, 1
      %p317 = por %p315, %p316
      %p318 = scmp.ne.s32.totalorder %s309, %s310
      %p319 = scmp.eq.s32.totalorder %s42, 0
      %p320 = por %p318, %p319
      %p321 = scmp.ne.s32.totalorder %s309, %s310
      %p322 = scmp.eq.s32.totalorder %s43, 1
      %p323 = por %p321, %p322
      %p325 = scmp.ne.s32.totalorder %s310, %s324
      %p326 = scmp.eq.s32.totalorder %s43, 0
      %p327 = por %p325, %p326
      %s329 = sadd.s32 %s328, 1
      %p332 = scmp.eq.s32.totalorder %s37, 1
      %p333 = scmp.ne.s32.totalorder %s328, %s330
      %p334 = scmp.eq.s32.totalorder %s37, 0
      %p335 = por %p333, %p334
      %p336 = scmp.ne.s32.totalorder %s328, %s330
      %p337 = scmp.eq.s32.totalorder %s42, 1
      %p338 = por %p336, %p337
      %p339 = scmp.ne.s32.totalorder %s330, %s331
      %p340 = scmp.eq.s32.totalorder %s42, 0
      %p341 = por %p339, %p340
      %p342 = scmp.ne.s32.totalorder %s330, %s331
      %p343 = scmp.eq.s32.totalorder %s43, 1
      %p344 = por %p342, %p343
      %p346 = scmp.ne.s32.totalorder %s331, %s345
      %p347 = scmp.eq.s32.totalorder %s43, 0
      %p348 = por %p346, %p347
      %s349 = ssub.s32 %s37, %s44
      %p350 = scmp.eq.s32.totalorder %s349, 0
      %s352 = sadd.s32 %s351, 1
      %s353 = scalar_select %p350, %s351, %s352
      %p356 = pneg %p350
      %p357 = scmp.eq.s32.totalorder %s37, 1
      %p358 = por %p356, %p357
      %p359 = scmp.ne.s32.totalorder %s351, %s354
      %p360 = scmp.eq.s32.totalorder %s37, 0
      %p361 = por %p359, %p360
      %p362 = scmp.ne.s32.totalorder %s351, %s354
      %p363 = scmp.eq.s32.totalorder %s42, 1
      %p364 = por %p362, %p363
      %p365 = scmp.ne.s32.totalorder %s354, %s355
      %p366 = scmp.eq.s32.totalorder %s42, 0
      %p367 = por %p365, %p366
      %p368 = scmp.ne.s32.totalorder %s354, %s355
      %p369 = scmp.eq.s32.totalorder %s43, 1
      %p370 = por %p368, %p369
      %p372 = scmp.ne.s32.totalorder %s355, %s371
      %p373 = scmp.eq.s32.totalorder %s43, 0
      %p374 = por %p372, %p373
      %s375 = ssub.s32 %s37, %s44
      %p376 = scmp.eq.s32.totalorder %s375, 0
      %s378 = sadd.s32 %s377, 1
      %s379 = scalar_select %p376, %s377, %s378
      %p382 = pneg %p376
      %p383 = scmp.eq.s32.totalorder %s37, 1
      %p384 = por %p382, %p383
      %p385 = scmp.ne.s32.totalorder %s377, %s380
      %p386 = scmp.eq.s32.totalorder %s37, 0
      %p387 = por %p385, %p386
      %p388 = scmp.ne.s32.totalorder %s377, %s380
      %p389 = scmp.eq.s32.totalorder %s42, 1
      %p390 = por %p388, %p389
      %p391 = scmp.ne.s32.totalorder %s380, %s381
      %p392 = scmp.eq.s32.totalorder %s42, 0
      %p393 = por %p391, %p392
      %p394 = scmp.ne.s32.totalorder %s380, %s381
      %p395 = scmp.eq.s32.totalorder %s43, 1
      %p396 = por %p394, %p395
      %p398 = scmp.ne.s32.totalorder %s381, %s397
      %p399 = scmp.eq.s32.totalorder %s43, 0
      %p400 = por %p398, %p399
      %p401 = scmp.le.s32.totalorder 1, %s37
      %p402 = scmp.lt.s32.totalorder %s37, 3
      %p403 = pnand %p401, %p402
      %p404 = pneg %p403
      // Predicated region
      $region9: #{tpu_custom_call.1} parent=5 // pred_check
        _
      $region10: #{tpu_custom_call.1} parent=5 // pred_check_branch
        %406 = sbr.rel (%p403) target = $region12
      $region11: #{tpu_custom_call.1} parent=5 // pred_region
        %s407 = ssub.s32 %s37, 1
        // Predicated region
        $region13: #{tpu_custom_call.1} parent=11 // pred_check
          %p408 = pneg %p110
        $region14: #{tpu_custom_call.1} parent=11 // pred_check_branch
          %410 = sbr.rel (%p408) target = $region16
        $region15: #{tpu_custom_call.1} parent=11 // pred_region
          %s412 = ssub.s32 256, 256
          %413 = vsyncadd [#allocation6], %s412
          %s414 = sshll.u32 [#allocation7], 4
          %s415 = int_to_ptr.vmem [resolvable:$true] %s414
          %420 = dma.hbm_to_vmem [thread:$0]  %s2, 256, %s415, [#allocation6], 64, 64, 4
        $region16: #{tpu_custom_call.1} parent=11 // pred_fallthru
          _
        // Predicated region
        $region17: #{tpu_custom_call.1} parent=11 // pred_check
          %p421 = pneg %p131
        $region18: #{tpu_custom_call.1} parent=11 // pred_check_branch
          %423 = sbr.rel (%p421) target = $region20
        $region19: #{tpu_custom_call.1} parent=11 // pred_region
          %s425 = ssub.s32 256, 256
          %426 = vsyncadd [#allocation9], %s425
          %s427 = sshll.u32 [#allocation8], 4
          %s428 = int_to_ptr.vmem [resolvable:$true] %s427
          %433 = dma.hbm_to_vmem [thread:$0]  %s3, 256, %s428, [#allocation9], 64, 64, 4
        $region20: #{tpu_custom_call.1} parent=11 // pred_fallthru
          _
        // Predicated region
        $region21: #{tpu_custom_call.1} parent=11 // pred_check
          %p434 = pneg %p152
        $region22: #{tpu_custom_call.1} parent=11 // pred_check_branch
          %436 = sbr.rel (%p434) target = $region24
        $region23: #{tpu_custom_call.1} parent=11 // pred_region
          _
        $region24: #{tpu_custom_call.1} parent=11 // pred_fallthru
          _
        // Predicated region
        $region25: #{tpu_custom_call.1} parent=11 // pred_check
          %p437 = pneg %p173
        $region26: #{tpu_custom_call.1} parent=11 // pred_check_branch
          %439 = sbr.rel (%p437) target = $region28
        $region27: #{tpu_custom_call.1} parent=11 // pred_region
          _
        $region28: #{tpu_custom_call.1} parent=11 // pred_fallthru
          _
        // Predicated region
        $region29: #{tpu_custom_call.1} parent=11 // pred_check
          %p440 = pneg %p194
        $region30: #{tpu_custom_call.1} parent=11 // pred_check_branch
          %442 = sbr.rel (%p440) target = $region32
        $region31: #{tpu_custom_call.1} parent=11 // pred_region
          %s444 = ssub.s32 16, 16
          %445 = vsyncadd [#allocation9], %s444
          %s447 = sshll.u32 [#allocation10], 4
          %s448 = int_to_ptr.vmem [resolvable:$true] %s447
          %450 = dma.hbm_to_vmem [thread:$0]  %s6, 16, %s448, [#allocation9]
        $region32: #{tpu_custom_call.1} parent=11 // pred_fallthru
          _
        // Predicated region
        $region33: #{tpu_custom_call.1} parent=11 // pred_check
          %p451 = pneg %p215
        $region34: #{tpu_custom_call.1} parent=11 // pred_check_branch
          %453 = sbr.rel (%p451) target = $region36
        $region35: #{tpu_custom_call.1} parent=11 // pred_region
          %s455 = ssub.s32 16, 16
          %456 = vsyncadd [#allocation12], %s455
          %s458 = sshll.u32 [#allocation11], 4
          %s459 = int_to_ptr.vmem [resolvable:$true] %s458
          %461 = dma.hbm_to_vmem [thread:$0]  %s7, 16, %s459, [#allocation12]
        $region36: #{tpu_custom_call.1} parent=11 // pred_fallthru
          _
        // Predicated region
        $region37: #{tpu_custom_call.1} parent=11 // pred_check
          %p462 = pneg %p236
        $region38: #{tpu_custom_call.1} parent=11 // pred_check_branch
          %464 = sbr.rel (%p462) target = $region40
        $region39: #{tpu_custom_call.1} parent=11 // pred_region
          %s466 = ssub.s32 16, 16
          %467 = vsyncadd [#allocation12], %s466
          %s469 = sshll.u32 [#allocation13], 4
          %s470 = int_to_ptr.vmem [resolvable:$true] %s469
          %472 = dma.hbm_to_vmem [thread:$0]  %s8, 16, %s470, [#allocation12]
        $region40: #{tpu_custom_call.1} parent=11 // pred_fallthru
          _
        // Predicated region
        $region41: #{tpu_custom_call.1} parent=11 // pred_check
          %p473 = pneg %p257
        $region42: #{tpu_custom_call.1} parent=11 // pred_check_branch
          %475 = sbr.rel (%p473) target = $region44
        $region43: #{tpu_custom_call.1} parent=11 // pred_region
          %s477 = ssub.s32 16, 16
          %478 = vsyncadd [#allocation15], %s477
          %s480 = sshll.u32 [#allocation14], 4
          %s481 = int_to_ptr.vmem [resolvable:$true] %s480
          %483 = dma.hbm_to_vmem [thread:$0]  %s9, 16, %s481, [#allocation15]
        $region44: #{tpu_custom_call.1} parent=11 // pred_fallthru
          _
        // Predicated region
        $region45: #{tpu_custom_call.1} parent=11 // pred_check
          %p484 = pneg %p278
        $region46: #{tpu_custom_call.1} parent=11 // pred_check_branch
          %486 = sbr.rel (%p484) target = $region48
        $region47: #{tpu_custom_call.1} parent=11 // pred_region
          _
        $region48: #{tpu_custom_call.1} parent=11 // pred_fallthru
          _
        // Predicated region
        $region49: #{tpu_custom_call.1} parent=11 // pred_check
          %p487 = pneg %p299
        $region50: #{tpu_custom_call.1} parent=11 // pred_check_branch
          %489 = sbr.rel (%p487) target = $region52
        $region51: #{tpu_custom_call.1} parent=11 // pred_region
          _
        $region52: #{tpu_custom_call.1} parent=11 // pred_fallthru
          _
        // Predicated region
        $region53: #{tpu_custom_call.1} parent=11 // pred_check
          %p490 = pneg %p320
        $region54: #{tpu_custom_call.1} parent=11 // pred_check_branch
          %492 = sbr.rel (%p490) target = $region56
        $region55: #{tpu_custom_call.1} parent=11 // pred_region
          _
        $region56: #{tpu_custom_call.1} parent=11 // pred_fallthru
          _
        // Predicated region
        $region57: #{tpu_custom_call.1} parent=11 // pred_check
          %p493 = pneg %p341
        $region58: #{tpu_custom_call.1} parent=11 // pred_check_branch
          %495 = sbr.rel (%p493) target = $region60
        $region59: #{tpu_custom_call.1} parent=11 // pred_region
          _
        $region60: #{tpu_custom_call.1} parent=11 // pred_fallthru
          _
      $region12: #{tpu_custom_call.1} parent=5 // pred_fallthru
        _
      %p496 = scmp.lt.s32.totalorder %s37, 2
      // Predicated region
      $region61: #{tpu_custom_call.1} parent=5 // pred_check
        %p497 = pneg %p496
      $region62: #{tpu_custom_call.1} parent=5 // pred_check_branch
        %499 = sbr.rel (%p497) target = $region64
      $region63: #{tpu_custom_call.1} parent=5 // pred_region
        // Predicated region
        $region65: #{tpu_custom_call.1} parent=63 // pred_check
          %p500 = pneg %p57
        $region66: #{tpu_custom_call.1} parent=63 // pred_check_branch
          %502 = sbr.rel (%p500) target = $region68
        $region67: #{tpu_custom_call.1} parent=63 // pred_region
          %s503 = sand.u32 %s47, 1
          %s504 = scalar_lea.sflag [#allocation3], %s503
          %s505 = sand.u32 %s47, 1
          %s506 = smul.addr %s505, 4
          %s507 = scalar_lea.vmem [#allocation2], %s506
          %s509 = ssub.s32 64, 64
          %510 = vsyncadd %s504, %s509
          %s511 = smul.addr %s37, 64
          %s512 = scalar_lea.hbm %s0, %s511
          %s514 = sshll.u32 %s507, 4
          %s515 = int_to_ptr.vmem [resolvable:$true] %s514
          %517 = dma.hbm_to_vmem [thread:$0]  %s512, 64, %s515, %s504
        $region68: #{tpu_custom_call.1} parent=63 // pred_fallthru
          _
        // Predicated region
        $region69: #{tpu_custom_call.1} parent=63 // pred_check
          %p518 = pneg %p83
        $region70: #{tpu_custom_call.1} parent=63 // pred_check_branch
          %520 = sbr.rel (%p518) target = $region72
        $region71: #{tpu_custom_call.1} parent=63 // pred_region
          %s521 = sand.u32 %s37, 1
          %s522 = scalar_lea.sflag [#allocation6], %s521
          %s523 = sand.u32 %s73, 1
          %s524 = smul.addr %s523, 4
          %s525 = scalar_lea.vmem [#allocation5], %s524
          %s527 = ssub.s32 64, 64
          %528 = vsyncadd %s522, %s527
          %s529 = smul.addr %s37, 64
          %s530 = scalar_lea.hbm %s1, %s529
          %s532 = sshll.u32 %s525, 4
          %s533 = int_to_ptr.vmem [resolvable:$true] %s532
          %535 = dma.hbm_to_vmem [thread:$0]  %s530, 64, %s533, %s522
        $region72: #{tpu_custom_call.1} parent=63 // pred_fallthru
          _
      $region64: #{tpu_custom_call.1} parent=5 // pred_fallthru
        _
      %p536 = scmp.le.s32.totalorder 1, %s37
      %p537 = scmp.lt.s32.totalorder %s37, 3
      %p538 = pnand %p536, %p537
      %p539 = pneg %p538
      // Predicated region
      $region73: #{tpu_custom_call.1} parent=5 // pred_check
        _
      $region74: #{tpu_custom_call.1} parent=5 // pred_check_branch
        %541 = sbr.rel (%p538) target = $region76
      $region75: #{tpu_custom_call.1} parent=5 // pred_region
        %s542 = ssub.s32 %s37, 1
        %s543 = sand.u32 %s50, 1
        %s544 = scalar_lea.sflag [#allocation3], %s543
        %s545 = sand.u32 %s50, 1
        %s546 = smul.addr %s545, 4
        %s547 = scalar_lea.vmem [#allocation2], %s546
        // Predicated region
        $region77: #{tpu_custom_call.1} parent=75 // pred_check
          %p548 = pneg %p63
        $region78: #{tpu_custom_call.1} parent=75 // pred_check_branch
          %550 = sbr.rel (%p548) target = $region80
        $region79: #{tpu_custom_call.1} parent=75 // pred_region
          %551 = dma.done %s544, 64
        $region80: #{tpu_custom_call.1} parent=75 // pred_fallthru
          _
        %s552 = sand.u32 %s42, 1
        %s553 = scalar_lea.sflag [#allocation6], %s552
        %s554 = sand.u32 %s76, 1
        %s555 = smul.addr %s554, 4
        %s556 = scalar_lea.vmem [#allocation5], %s555
        // Predicated region
        $region81: #{tpu_custom_call.1} parent=75 // pred_check
          %p557 = pneg %p89
        $region82: #{tpu_custom_call.1} parent=75 // pred_check_branch
          %559 = sbr.rel (%p557) target = $region84
        $region83: #{tpu_custom_call.1} parent=75 // pred_region
          %560 = dma.done %s553, 64
        $region84: #{tpu_custom_call.1} parent=75 // pred_fallthru
          _
        // Predicated region
        $region85: #{tpu_custom_call.1} parent=75 // pred_check
          %p561 = pneg %p110
        $region86: #{tpu_custom_call.1} parent=75 // pred_check_branch
          %563 = sbr.rel (%p561) target = $region88
        $region87: #{tpu_custom_call.1} parent=75 // pred_region
          %564 = dma.done [#allocation6], 256
        $region88: #{tpu_custom_call.1} parent=75 // pred_fallthru
          _
        // Predicated region
        $region89: #{tpu_custom_call.1} parent=75 // pred_check
          %p565 = pneg %p131
        $region90: #{tpu_custom_call.1} parent=75 // pred_check_branch
          %567 = sbr.rel (%p565) target = $region92
        $region91: #{tpu_custom_call.1} parent=75 // pred_region
          %568 = dma.done [#allocation9], 256
        $region92: #{tpu_custom_call.1} parent=75 // pred_fallthru
          _
        // Predicated region
        $region93: #{tpu_custom_call.1} parent=75 // pred_check
          %p569 = pneg %p194
        $region94: #{tpu_custom_call.1} parent=75 // pred_check_branch
          %571 = sbr.rel (%p569) target = $region96
        $region95: #{tpu_custom_call.1} parent=75 // pred_region
          %572 = dma.done [#allocation9], 16
        $region96: #{tpu_custom_call.1} parent=75 // pred_fallthru
          _
        // Predicated region
        $region97: #{tpu_custom_call.1} parent=75 // pred_check
          %p573 = pneg %p215
        $region98: #{tpu_custom_call.1} parent=75 // pred_check_branch
          %575 = sbr.rel (%p573) target = $region100
        $region99: #{tpu_custom_call.1} parent=75 // pred_region
          %576 = dma.done [#allocation12], 16
        $region100: #{tpu_custom_call.1} parent=75 // pred_fallthru
          _
        // Predicated region
        $region101: #{tpu_custom_call.1} parent=75 // pred_check
          %p577 = pneg %p236
        $region102: #{tpu_custom_call.1} parent=75 // pred_check_branch
          %579 = sbr.rel (%p577) target = $region104
        $region103: #{tpu_custom_call.1} parent=75 // pred_region
          %580 = dma.done [#allocation12], 16
        $region104: #{tpu_custom_call.1} parent=75 // pred_fallthru
          _
        // Predicated region
        $region105: #{tpu_custom_call.1} parent=75 // pred_check
          %p581 = pneg %p257
        $region106: #{tpu_custom_call.1} parent=75 // pred_check_branch
          %583 = sbr.rel (%p581) target = $region108
        $region107: #{tpu_custom_call.1} parent=75 // pred_region
          %584 = dma.done [#allocation15], 16
        $region108: #{tpu_custom_call.1} parent=75 // pred_fallthru
          _
        %s585 = sand.u32 %s50, 1
        %s586 = scalar_lea.sflag [#allocation3], %s585
        %s587 = sand.u32 %s50, 1
        %s588 = smul.addr %s587, 4
        %s589 = scalar_lea.vmem [#allocation2], %s588
        %p590 = pneg %p63
        %p591 = pneg %p60
        %s592 = sand.u32 %s42, 1
        %s593 = scalar_lea.sflag [#allocation6], %s592
        %s594 = sand.u32 %s76, 1
        %s595 = smul.addr %s594, 4
        %s596 = scalar_lea.vmem [#allocation5], %s595
        %p597 = pneg %p89
        %p598 = pneg %p86
        %p599 = pneg %p110
        %p600 = pneg %p107
        %p601 = pneg %p131
        %p602 = pneg %p128
        %p603 = pneg %p152
        %p604 = pneg %p149
        %p605 = pneg %p173
        %p606 = pneg %p170
        %p607 = pneg %p194
        %p608 = pneg %p191
        %p609 = pneg %p215
        %p610 = pneg %p212
        %p611 = pneg %p236
        %p612 = pneg %p233
        %p613 = pneg %p257
        %p614 = pneg %p254
        %p615 = pneg %p278
        %p616 = pneg %p275
        %p617 = pneg %p299
        %p618 = pneg %p296
        %p619 = pneg %p320
        %p620 = pneg %p317
        %p621 = pneg %p341
        %p622 = pneg %p338
        %p623 = pneg %p367
        %p624 = pneg %p364
        %s625 = sand.u32 %s354, 1
        %s626 = scalar_lea.sflag [#allocation4], %s625
        %s627 = sand.u32 %s354, 1
        %s628 = smul.addr %s627, 8
        %s629 = scalar_lea.vmem [#allocation16], %s628
        %p630 = pneg %p393
        %p631 = pneg %p390
        %s632 = sand.u32 %s380, 1
        %s633 = scalar_lea.sflag [#allocation18], %s632
        %s634 = sand.u32 %s380, 1
        %s635 = smul.addr %s634, 8
        %s636 = scalar_lea.vmem [#allocation17], %s635
        %v638 = vld [vmem:[%s547] sm:$0xf]
        %v639 = vld [vmem:[%s556] sm:$0xf]
        %v640 = vld [vmem:[#allocation7] sm:$0xf]
        %v641 = vld [vmem:[#allocation7 + $0x4] sm:$0xf]
        %v642 = vld [vmem:[#allocation7 + $0x8] sm:$0xf]
        %v643 = vld [vmem:[#allocation7 + $0xc] sm:$0xf]
        %v648 = vunpack.c.l.b16 %v640
        %v649 = vunpack.c.l.b16 %v641
        %v650 = vunpack.c.l.b16 %v642
        %v651 = vunpack.c.l.b16 %v643
        %v652 = vpack.c.b16 %v649, %v648
        %v653 = vpack.c.b16 %v651, %v650
        %vm656 = vcmask 261120
        %v658 = vsel %vm656, %v638, 0
        %660 = vmatprep.subr.bf16.mxu0 0
        %661 = vmatpush1.bf16.msra.mxu0 %v652
        %662 = vmatprep.subr.bf16.mxu0 0
        %663 = vmatpush1.bf16.msra.mxu0 %v653
        %664 = vmatprep.subr.bf16.mxu0 0
        %665 = vmatpush1.bf16.msra.mxu0 0
        %666 = vmatprep.subr.bf16.mxu0 0
        %667 = vmatpush1.bf16.msra.mxu0 0
        %668 = vmatprep.subr.bf16.mxu0 0
        %669 = vmatpush1.bf16.msra.mxu0 0
        %670 = vmatprep.subr.bf16.mxu0 0
        %671 = vmatpush1.bf16.msra.mxu0 0
        %672 = vmatprep.subr.bf16.mxu0 0
        %673 = vmatpush1.bf16.msra.mxu0 0
        %674 = vmatprep.subr.bf16.mxu0 0
        %675 = vmatpush1.bf16.msra.mxu0 0
        %676 = vmatprep.subr.bf16.mxu0 0
        %677 = vmatpush1.bf16.msra.mxu0 0
        %678 = vmatprep.subr.bf16.mxu0 0
        %679 = vmatpush1.bf16.msra.mxu0 0
        %680 = vmatprep.subr.bf16.mxu0 0
        %681 = vmatpush1.bf16.msra.mxu0 0
        %682 = vmatprep.subr.bf16.mxu0 0
        %683 = vmatpush1.bf16.msra.mxu0 0
        %684 = vmatprep.subr.bf16.mxu0 0
        %685 = vmatpush1.bf16.msra.mxu0 0
        %686 = vmatprep.subr.bf16.mxu0 0
        %687 = vmatpush1.bf16.msra.mxu0 0
        %688 = vmatprep.subr.bf16.mxu0 0
        %689 = vmatpush1.bf16.msra.mxu0 0
        %690 = vmatprep.subr.bf16.mxu0 0
        %691 = vmatpush1.bf16.msra.mxu0 0
        %692 = vmatprep.mubr.bf16.mxu0 0
        %693 = vmatmul.mubr.bf16.gmra.mrb[0].mxu0 %v658
        %v694 = vpop.f32.mrb[0].mxu0
        %v695 = vadd.f32 0.0, %v694
        %v696 = vpop.f32.mrb[0].mxu0
        %v697 = vpop.f32.mrb[0].mxu0
        %v698 = vpop.f32.mrb[0].mxu0
        %699 = vdwg.mxu0
        %v700 = vld [vmem:[#allocation8] sm:$0xf]
        %v701 = vld [vmem:[#allocation8 + $0x4] sm:$0xf]
        %v702 = vld [vmem:[#allocation8 + $0x8] sm:$0xf]
        %v703 = vld [vmem:[#allocation8 + $0xc] sm:$0xf]
        %v708 = vunpack.c.l.b16 %v700
        %v709 = vunpack.c.l.b16 %v701
        %v710 = vunpack.c.l.b16 %v702
        %v711 = vunpack.c.l.b16 %v703
        %v712 = vpack.c.b16 %v709, %v708
        %v713 = vpack.c.b16 %v711, %v710
        %v717 = vsel %vm656, %v639, 0
        %719 = vmatprep.subr.bf16.mxu0 0
        %720 = vmatpush1.bf16.msra.mxu0 %v712
        %721 = vmatprep.subr.bf16.mxu0 0
        %722 = vmatpush1.bf16.msra.mxu0 %v713
        %723 = vmatprep.subr.bf16.mxu0 0
        %724 = vmatpush1.bf16.msra.mxu0 0
        %725 = vmatprep.subr.bf16.mxu0 0
        %726 = vmatpush1.bf16.msra.mxu0 0
        %727 = vmatprep.subr.bf16.mxu0 0
        %728 = vmatpush1.bf16.msra.mxu0 0
        %729 = vmatprep.subr.bf16.mxu0 0
        %730 = vmatpush1.bf16.msra.mxu0 0
        %731 = vmatprep.subr.bf16.mxu0 0
        %732 = vmatpush1.bf16.msra.mxu0 0
        %733 = vmatprep.subr.bf16.mxu0 0
        %734 = vmatpush1.bf16.msra.mxu0 0
        %735 = vmatprep.subr.bf16.mxu0 0
        %736 = vmatpush1.bf16.msra.mxu0 0
        %737 = vmatprep.subr.bf16.mxu0 0
        %738 = vmatpush1.bf16.msra.mxu0 0
        %739 = vmatprep.subr.bf16.mxu0 0
        %740 = vmatpush1.bf16.msra.mxu0 0
        %741 = vmatprep.subr.bf16.mxu0 0
        %742 = vmatpush1.bf16.msra.mxu0 0
        %743 = vmatprep.subr.bf16.mxu0 0
        %744 = vmatpush1.bf16.msra.mxu0 0
        %745 = vmatprep.subr.bf16.mxu0 0
        %746 = vmatpush1.bf16.msra.mxu0 0
        %747 = vmatprep.subr.bf16.mxu0 0
        %748 = vmatpush1.bf16.msra.mxu0 0
        %749 = vmatprep.subr.bf16.mxu0 0
        %750 = vmatpush1.bf16.msra.mxu0 0
        %751 = vmatprep.mubr.bf16.mxu0 0
        %752 = vmatmul.mubr.bf16.gmra.mrb[0].mxu0 %v717
        %v753 = vpop.f32.mrb[0].mxu0
        %v754 = vadd.f32 0.0, %v753
        %v755 = vpop.f32.mrb[0].mxu0
        %v756 = vpop.f32.mrb[0].mxu0
        %v757 = vpop.f32.mrb[0].mxu0
        %758 = vdwg.mxu0
        %v759 = vld [vmem:[%s4] sm:$0x1]
        %v760 = vld [vmem:[%s5] sm:$0x1]
        %v761 = vsel %vm656, %v695, 0.0
        %762 = vadd.xlane.f32.xlu0 %v761
        %v763 = vpop.xlane.xlu0 %762
        %v764 = vrcp.pop 32.0
        %v765 = vmul.f32 %v763, %v764
        %v766 = vsub.f32 %v695, %v765
        %v767 = vmul.f32 %v766, %v766
        %v768 = vsel %vm656, %v767, 0.0
        %769 = vadd.xlane.f32.xlu0 %v768
        %v770 = vpop.xlane.xlu0 %769
        %v771 = vmul.f32 %v770, %v764
        %v772 = vadd.f32 %v771, 1e-05
        %v773 = vrsqrt.pop %v772
        %v774 = vmul.f32 %v766, %v773
        %v776 = vlaneseq
        %v777 = vshrl.u32 %v776, 7
        %v778 = vsub.s32 0, %v777
        %v779 = vrot.slane %v759, %v778
        %v781 = vmul.f32 %v774, %v779
        %v783 = vlaneseq
        %v784 = vshrl.u32 %v783, 7
        %v785 = vsub.s32 0, %v784
        %v786 = vrot.slane %v760, %v785
        %v788 = vadd.f32 %v781, %v786
        %v789 = vpack.c.bf16 %v788, %v788
        %v790 = vld [vmem:[#allocation10] sm:$0x1]
        %v791 = vld [vmem:[#allocation11] sm:$0x1]
        %793 = vrot.lane.b32.xlu0 %v695, 96
        %v794 = vpop.permute.xlu0 %793
        %v796 = vsel %vm656, %v794, 0.0
        %797 = vadd.xlane.f32.xlu0 %v796
        %v798 = vpop.xlane.xlu0 %797
        %v799 = vmul.f32 %v798, %v764
        %v800 = vsub.f32 %v695, %v799
        %v801 = vmul.f32 %v800, %v800
        %803 = vrot.lane.b32.xlu0 %v801, 96
        %v804 = vpop.permute.xlu0 %803
        %v806 = vsel %vm656, %v804, 0.0
        %807 = vadd.xlane.f32.xlu0 %v806
        %v808 = vpop.xlane.xlu0 %807
        %v809 = vmul.f32 %v808, %v764
        %v810 = vadd.f32 %v809, 1e-05
        %v811 = vrsqrt.pop %v810
        %v812 = vmul.f32 %v800, %v811
        %v814 = vlaneseq
        %v815 = vshrl.u32 %v814, 7
        %v816 = vsub.s32 0, %v815
        %v817 = vrot.slane %v790, %v816
        %818 = vrot.lane.b32.xlu0 %v817, 32
        %v819 = vpop.permute.xlu0 %818
        %v821 = vmul.f32 %v812, %v819
        %v823 = vlaneseq
        %v824 = vshrl.u32 %v823, 7
        %v825 = vsub.s32 0, %v824
        %v826 = vrot.slane %v791, %v825
        %827 = vrot.lane.b32.xlu0 %v826, 32
        %v828 = vpop.permute.xlu0 %827
        %v830 = vadd.f32 %v821, %v828
        %v831 = vpack.c.bf16 %v830, %v830
        %v832 = vpack.c.bf16 %v695, %v695
        %v833 = vld [vmem:[#allocation13] sm:$0x1]
        %v834 = vld [vmem:[#allocation14] sm:$0x1]
        %v835 = vsel %vm656, %v754, 0.0
        %836 = vadd.xlane.f32.xlu0 %v835
        %v837 = vpop.xlane.xlu0 %836
        %v838 = vmul.f32 %v837, %v764
        %v839 = vsub.f32 %v754, %v838
        %v840 = vmul.f32 %v839, %v839
        %v841 = vsel %vm656, %v840, 0.0
        %842 = vadd.xlane.f32.xlu0 %v841
        %v843 = vpop.xlane.xlu0 %842
        %v844 = vmul.f32 %v843, %v764
        %v845 = vadd.f32 %v844, 1e-05
        %v846 = vrsqrt.pop %v845
        %v847 = vmul.f32 %v839, %v846
        %v849 = vlaneseq
        %v850 = vshrl.u32 %v849, 7
        %v851 = vsub.s32 0, %v850
        %v852 = vrot.slane %v833, %v851
        %v854 = vmul.f32 %v847, %v852
        %v856 = vlaneseq
        %v857 = vshrl.u32 %v856, 7
        %v858 = vsub.s32 0, %v857
        %v859 = vrot.slane %v834, %v858
        %v861 = vadd.f32 %v854, %v859
        %v862 = vpack.c.bf16 %v861, %v861
        %v863 = vld [vmem:[%s10] sm:$0x1]
        %v864 = vld [vmem:[%s11] sm:$0x1]
        %866 = vrot.lane.b32.xlu0 %v754, 96
        %v867 = vpop.permute.xlu0 %866
        %v869 = vsel %vm656, %v867, 0.0
        %870 = vadd.xlane.f32.xlu0 %v869
        %v871 = vpop.xlane.xlu0 %870
        %v872 = vmul.f32 %v871, %v764
        %v873 = vsub.f32 %v754, %v872
        %v874 = vmul.f32 %v873, %v873
        %876 = vrot.lane.b32.xlu0 %v874, 96
        %v877 = vpop.permute.xlu0 %876
        %v879 = vsel %vm656, %v877, 0.0
        %880 = vadd.xlane.f32.xlu0 %v879
        %v881 = vpop.xlane.xlu0 %880
        %v882 = vmul.f32 %v881, %v764
        %v883 = vadd.f32 %v882, 1e-05
        %v884 = vrsqrt.pop %v883
        %v885 = vmul.f32 %v873, %v884
        %v887 = vlaneseq
        %v888 = vshrl.u32 %v887, 7
        %v889 = vsub.s32 0, %v888
        %v890 = vrot.slane %v863, %v889
        %891 = vrot.lane.b32.xlu0 %v890, 32
        %v892 = vpop.permute.xlu0 %891
        %v894 = vmul.f32 %v885, %v892
        %v896 = vlaneseq
        %v897 = vshrl.u32 %v896, 7
        %v898 = vsub.s32 0, %v897
        %v899 = vrot.slane %v864, %v898
        %900 = vrot.lane.b32.xlu0 %v899, 32
        %v901 = vpop.permute.xlu0 %900
        %v903 = vadd.f32 %v894, %v901
        %v904 = vpack.c.bf16 %v903, %v903
        %v905 = vpack.c.bf16 %v754, %v754
        %v907 = vrot.slane %v862, 4
        %vm908 = vcmask 1043456
        %v911 = vsel %vm908, %v789, %v907
        %913 = vrot.lane.b32.xlu0 %v911, 120
        %v914 = vpop.permute.xlu0 %913
        %915 = vrot.lane.b32.xlu0 %v911, 112
        %v916 = vpop.permute.xlu0 %915
        %917 = vrot.lane.b32.xlu0 %v911, 104
        %v918 = vpop.permute.xlu0 %917
        %v920 = vrot.slane %v904, 4
        %v923 = vsel %vm908, %v831, %v920
        %925 = vrot.lane.b32.xlu0 %v923, 120
        %v926 = vpop.permute.xlu0 %925
        %927 = vrot.lane.b32.xlu0 %v923, 112
        %v928 = vpop.permute.xlu0 %927
        %929 = vrot.lane.b32.xlu0 %v923, 104
        %v930 = vpop.permute.xlu0 %929
        %v932 = vrot.slane %v905, 4
        %v935 = vsel %vm908, %v832, %v932
        %937 = vrot.lane.b32.xlu0 %v935, 120
        %v938 = vpop.permute.xlu0 %937
        %939 = vrot.lane.b32.xlu0 %v935, 112
        %v940 = vpop.permute.xlu0 %939
        %941 = vrot.lane.b32.xlu0 %v935, 104
        %v942 = vpop.permute.xlu0 %941
        %943 = vrot.lane.b32.xlu0 %v923, 96
        %v944 = vpop.permute.xlu0 %943
        %vm945 = vcmask 64512
        %v946 = vsel %vm945, %v911, 0
        %v949 = vsel %vm945, %v944, 0
        %951 = vmatprep.subr.bf16.mxu0 0
        %952 = vmatpush1.bf16.xpose.msra.mxu0 %v949
        %953 = vmatprep.subr.bf16.mxu0 0
        %954 = vmatpush1.bf16.xpose.msra.mxu0 0
        %955 = vmatprep.subr.bf16.mxu0 0
        %956 = vmatpush1.bf16.xpose.msra.mxu0 0
        %957 = vmatprep.subr.bf16.mxu0 0
        %958 = vmatpush1.bf16.xpose.msra.mxu0 0
        %959 = vmatprep.subr.bf16.mxu0 0
        %960 = vmatpush1.bf16.xpose.msra.mxu0 0
        %961 = vmatprep.subr.bf16.mxu0 0
        %962 = vmatpush1.bf16.xpose.msra.mxu0 0
        %963 = vmatprep.subr.bf16.mxu0 0
        %964 = vmatpush1.bf16.xpose.msra.mxu0 0
        %965 = vmatprep.subr.bf16.mxu0 0
        %966 = vmatpush1.bf16.xpose.msra.mxu0 0
        %967 = vmatprep.subr.bf16.mxu0 0
        %968 = vmatpush1.bf16.xpose.msra.mxu0 0
        %969 = vmatprep.subr.bf16.mxu0 0
        %970 = vmatpush1.bf16.xpose.msra.mxu0 0
        %971 = vmatprep.subr.bf16.mxu0 0
        %972 = vmatpush1.bf16.xpose.msra.mxu0 0
        %973 = vmatprep.subr.bf16.mxu0 0
        %974 = vmatpush1.bf16.xpose.msra.mxu0 0
        %975 = vmatprep.subr.bf16.mxu0 0
        %976 = vmatpush1.bf16.xpose.msra.mxu0 0
        %977 = vmatprep.subr.bf16.mxu0 0
        %978 = vmatpush1.bf16.xpose.msra.mxu0 0
        %979 = vmatprep.subr.bf16.mxu0 0
        %980 = vmatpush1.bf16.xpose.msra.mxu0 0
        %981 = vmatprep.subr.bf16.mxu0 0
        %982 = vmatpush1.bf16.xpose.msra.mxu0 0
        %983 = vmatprep.mubr.bf16.mxu0 0
        %984 = vmatmul.mubr.bf16.gmra.mrb[0].mxu0 %v946
        %v985 = vpop.f32.mrb[0].mxu0
        %v986 = vadd.f32 0.0, %v985
        %v987 = vpop.f32.mrb[0].mxu0
        %v988 = vpop.f32.mrb[0].mxu0
        %v989 = vadd.f32 0.0, %v988
        %v990 = vpop.f32.mrb[0].mxu0
        %991 = vdwg.mxu0
        %992 = vrot.lane.b32.xlu0 %v926, 96
        %v993 = vpop.permute.xlu0 %992
        %v995 = vsel %vm945, %v914, 0
        %v998 = vsel %vm945, %v993, 0
        %1000 = vmatprep.subr.bf16.mxu0 0
        %1001 = vmatpush1.bf16.xpose.msra.mxu0 %v998
        %1002 = vmatprep.subr.bf16.mxu0 0
        %1003 = vmatpush1.bf16.xpose.msra.mxu0 0
        %1004 = vmatprep.subr.bf16.mxu0 0
        %1005 = vmatpush1.bf16.xpose.msra.mxu0 0
        %1006 = vmatprep.subr.bf16.mxu0 0
        %1007 = vmatpush1.bf16.xpose.msra.mxu0 0
        %1008 = vmatprep.subr.bf16.mxu0 0
        %1009 = vmatpush1.bf16.xpose.msra.mxu0 0
        %1010 = vmatprep.subr.bf16.mxu0 0
        %1011 = vmatpush1.bf16.xpose.msra.mxu0 0
        %1012 = vmatprep.subr.bf16.mxu0 0
        %1013 = vmatpush1.bf16.xpose.msra.mxu0 0
        %1014 = vmatprep.subr.bf16.mxu0 0
        %1015 = vmatpush1.bf16.xpose.msra.mxu0 0
        %1016 = vmatprep.subr.bf16.mxu0 0
        %1017 = vmatpush1.bf16.xpose.msra.mxu0 0
        %1018 = vmatprep.subr.bf16.mxu0 0
        %1019 = vmatpush1.bf16.xpose.msra.mxu0 0
        %1020 = vmatprep.subr.bf16.mxu0 0
        %1021 = vmatpush1.bf16.xpose.msra.mxu0 0
        %1022 = vmatprep.subr.bf16.mxu0 0
        %1023 = vmatpush1.bf16.xpose.msra.mxu0 0
        %1024 = vmatprep.subr.bf16.mxu0 0
        %1025 = vmatpush1.bf16.xpose.msra.mxu0 0
        %1026 = vmatprep.subr.bf16.mxu0 0
        %1027 = vmatpush1.bf16.xpose.msra.mxu0 0
        %1028 = vmatprep.subr.bf16.mxu0 0
        %1029 = vmatpush1.bf16.xpose.msra.mxu0 0
        %1030 = vmatprep.subr.bf16.mxu0 0
        %1031 = vmatpush1.bf16.xpose.msra.mxu0 0
        %1032 = vmatprep.mubr.bf16.mxu0 0
        %1033 = vmatmul.mubr.bf16.gmra.mrb[0].mxu0 %v995
        %v1034 = vpop.f32.mrb[0].mxu0
        %v1035 = vadd.f32 0.0, %v1034
        %v1036 = vpop.f32.mrb[0].mxu0
        %v1037 = vpop.f32.mrb[0].mxu0
        %v1038 = vadd.f32 0.0, %v1037
        %v1039 = vpop.f32.mrb[0].mxu0
        %1040 = vdwg.mxu0
        %1041 = vrot.lane.b32.xlu0 %v928, 96
        %v1042 = vpop.permute.xlu0 %1041
        %v1044 = vsel %vm945, %v916, 0
        %v1047 = vsel %vm945, %v1042, 0
        %1049 = vmatprep.subr.bf16.mxu0 0
        %1050 = vmatpush1.bf16.xpose.msra.mxu0 %v1047
        %1051 = vmatprep.subr.bf16.mxu0 0
        %1052 = vmatpush1.bf16.xpose.msra.mxu0 0
        %1053 = vmatprep.subr.bf16.mxu0 0
        %1054 = vmatpush1.bf16.xpose.msra.mxu0 0
        %1055 = vmatprep.subr.bf16.mxu0 0
        %1056 = vmatpush1.bf16.xpose.msra.mxu0 0
        %1057 = vmatprep.subr.bf16.mxu0 0
        %1058 = vmatpush1.bf16.xpose.msra.mxu0 0
        %1059 = vmatprep.subr.bf16.mxu0 0
        %1060 = vmatpush1.bf16.xpose.msra.mxu0 0
        %1061 = vmatprep.subr.bf16.mxu0 0
        %1062 = vmatpush1.bf16.xpose.msra.mxu0 0
        %1063 = vmatprep.subr.bf16.mxu0 0
        %1064 = vmatpush1.bf16.xpose.msra.mxu0 0
        %1065 = vmatprep.subr.bf16.mxu0 0
        %1066 = vmatpush1.bf16.xpose.msra.mxu0 0
        %1067 = vmatprep.subr.bf16.mxu0 0
        %1068 = vmatpush1.bf16.xpose.msra.mxu0 0
        %1069 = vmatprep.subr.bf16.mxu0 0
        %1070 = vmatpush1.bf16.xpose.msra.mxu0 0
        %1071 = vmatprep.subr.bf16.mxu0 0
        %1072 = vmatpush1.bf16.xpose.msra.mxu0 0
        %1073 = vmatprep.subr.bf16.mxu0 0
        %1074 = vmatpush1.bf16.xpose.msra.mxu0 0
        %1075 = vmatprep.subr.bf16.mxu0 0
        %1076 = vmatpush1.bf16.xpose.msra.mxu0 0
        %1077 = vmatprep.subr.bf16.mxu0 0
        %1078 = vmatpush1.bf16.xpose.msra.mxu0 0
        %1079 = vmatprep.subr.bf16.mxu0 0
        %1080 = vmatpush1.bf16.xpose.msra.mxu0 0
        %1081 = vmatprep.mubr.bf16.mxu0 0
        %1082 = vmatmul.mubr.bf16.gmra.mrb[0].mxu0 %v1044
        %v1083 = vpop.f32.mrb[0].mxu0
        %v1084 = vadd.f32 0.0, %v1083
        %v1085 = vpop.f32.mrb[0].mxu0
        %v1086 = vpop.f32.mrb[0].mxu0
        %v1087 = vadd.f32 0.0, %v1086
        %v1088 = vpop.f32.mrb[0].mxu0
        %1089 = vdwg.mxu0
        %1090 = vrot.lane.b32.xlu0 %v930, 96
        %v1091 = vpop.permute.xlu0 %1090
        %v1093 = vsel %vm945, %v918, 0
        %v1096 = vsel %vm945, %v1091, 0
        %1098 = vmatprep.subr.bf16.mxu0 0
        %1099 = vmatpush1.bf16.xpose.msra.mxu0 %v1096
        %1100 = vmatprep.subr.bf16.mxu0 0
        %1101 = vmatpush1.bf16.xpose.msra.mxu0 0
        %1102 = vmatprep.subr.bf16.mxu0 0
        %1103 = vmatpush1.bf16.xpose.msra.mxu0 0
        %1104 = vmatprep.subr.bf16.mxu0 0
        %1105 = vmatpush1.bf16.xpose.msra.mxu0 0
        %1106 = vmatprep.subr.bf16.mxu0 0
        %1107 = vmatpush1.bf16.xpose.msra.mxu0 0
        %1108 = vmatprep.subr.bf16.mxu0 0
        %1109 = vmatpush1.bf16.xpose.msra.mxu0 0
        %1110 = vmatprep.subr.bf16.mxu0 0
        %1111 = vmatpush1.bf16.xpose.msra.mxu0 0
        %1112 = vmatprep.subr.bf16.mxu0 0
        %1113 = vmatpush1.bf16.xpose.msra.mxu0 0
        %1114 = vmatprep.subr.bf16.mxu0 0
        %1115 = vmatpush1.bf16.xpose.msra.mxu0 0
        %1116 = vmatprep.subr.bf16.mxu0 0
        %1117 = vmatpush1.bf16.xpose.msra.mxu0 0
        %1118 = vmatprep.subr.bf16.mxu0 0
        %1119 = vmatpush1.bf16.xpose.msra.mxu0 0
        %1120 = vmatprep.subr.bf16.mxu0 0
        %1121 = vmatpush1.bf16.xpose.msra.mxu0 0
        %1122 = vmatprep.subr.bf16.mxu0 0
        %1123 = vmatpush1.bf16.xpose.msra.mxu0 0
        %1124 = vmatprep.subr.bf16.mxu0 0
        %1125 = vmatpush1.bf16.xpose.msra.mxu0 0
        %1126 = vmatprep.subr.bf16.mxu0 0
        %1127 = vmatpush1.bf16.xpose.msra.mxu0 0
        %1128 = vmatprep.subr.bf16.mxu0 0
        %1129 = vmatpush1.bf16.xpose.msra.mxu0 0
        %1130 = vmatprep.mubr.bf16.mxu0 0
        %1131 = vmatmul.mubr.bf16.gmra.mrb[0].mxu0 %v1093
        %v1132 = vpop.f32.mrb[0].mxu0
        %v1133 = vadd.f32 0.0, %v1132
        %v1134 = vpop.f32.mrb[0].mxu0
        %v1135 = vpop.f32.mrb[0].mxu0
        %v1136 = vadd.f32 0.0, %v1135
        %v1137 = vpop.f32.mrb[0].mxu0
        %1138 = vdwg.mxu0
        %vm1139 = vcmask 130048
        %v1140 = vsel %vm1139, %v986, -inf
        %1141 = vmax.xlane.f32.xlu0 %v1140
        %v1142 = vpop.xlane.xlu0 %1141
        %v1143 = vsel %vm1139, %v989, -inf
        %1144 = vmax.xlane.f32.xlu0 %v1143
        %v1145 = vpop.xlane.xlu0 %1144
        %v1146 = vsel %vm1139, %v1035, -inf
        %1147 = vmax.xlane.f32.xlu0 %v1146
        %v1148 = vpop.xlane.xlu0 %1147
        %v1149 = vsel %vm1139, %v1038, -inf
        %1150 = vmax.xlane.f32.xlu0 %v1149
        %v1151 = vpop.xlane.xlu0 %1150
        %v1152 = vsel %vm1139, %v1084, -inf
        %1153 = vmax.xlane.f32.xlu0 %v1152
        %v1154 = vpop.xlane.xlu0 %1153
        %v1155 = vsel %vm1139, %v1087, -inf
        %1156 = vmax.xlane.f32.xlu0 %v1155
        %v1157 = vpop.xlane.xlu0 %1156
        %v1158 = vsel %vm1139, %v1133, -inf
        %1159 = vmax.xlane.f32.xlu0 %v1158
        %v1160 = vpop.xlane.xlu0 %1159
        %v1161 = vsel %vm1139, %v1136, -inf
        %1162 = vmax.xlane.f32.xlu0 %v1161
        %v1163 = vpop.xlane.xlu0 %1162
        %v1164 = vsub.f32 %v986, %v1142
        %v1165 = vsub.f32 %v989, %v1145
        %v1166 = vsub.f32 %v1035, %v1148
        %v1167 = vsub.f32 %v1038, %v1151
        %v1168 = vsub.f32 %v1084, %v1154
        %v1169 = vsub.f32 %v1087, %v1157
        %v1170 = vsub.f32 %v1133, %v1160
        %v1171 = vsub.f32 %v1136, %v1163
        %v1172 = vmul.f32 %v1164, 1.442695
        %v1173 = vpow.pop %v1172
        %v1174 = vmul.f32 %v1165, 1.442695
        %v1175 = vpow.pop %v1174
        %v1176 = vmul.f32 %v1166, 1.442695
        %v1177 = vpow.pop %v1176
        %v1178 = vmul.f32 %v1167, 1.442695
        %v1179 = vpow.pop %v1178
        %v1180 = vmul.f32 %v1168, 1.442695
        %v1181 = vpow.pop %v1180
        %v1182 = vmul.f32 %v1169, 1.442695
        %v1183 = vpow.pop %v1182
        %v1184 = vmul.f32 %v1170, 1.442695
        %v1185 = vpow.pop %v1184
        %v1186 = vmul.f32 %v1171, 1.442695
        %v1187 = vpow.pop %v1186
        %v1188 = vsel %vm1139, %v1173, 0.0
        %1189 = vadd.xlane.f32.xlu0 %v1188
        %v1190 = vpop.xlane.xlu0 %1189
        %v1191 = vsel %vm1139, %v1175, 0.0
        %1192 = vadd.xlane.f32.xlu0 %v1191
        %v1193 = vpop.xlane.xlu0 %1192
        %v1194 = vsel %vm1139, %v1177, 0.0
        %1195 = vadd.xlane.f32.xlu0 %v1194
        %v1196 = vpop.xlane.xlu0 %1195
        %v1197 = vsel %vm1139, %v1179, 0.0
        %1198 = vadd.xlane.f32.xlu0 %v1197
        %v1199 = vpop.xlane.xlu0 %1198
        %v1200 = vsel %vm1139, %v1181, 0.0
        %1201 = vadd.xlane.f32.xlu0 %v1200
        %v1202 = vpop.xlane.xlu0 %1201
        %v1203 = vsel %vm1139, %v1183, 0.0
        %1204 = vadd.xlane.f32.xlu0 %v1203
        %v1205 = vpop.xlane.xlu0 %1204
        %v1206 = vsel %vm1139, %v1185, 0.0
        %1207 = vadd.xlane.f32.xlu0 %v1206
        %v1208 = vpop.xlane.xlu0 %1207
        %v1209 = vsel %vm1139, %v1187, 0.0
        %1210 = vadd.xlane.f32.xlu0 %v1209
        %v1211 = vpop.xlane.xlu0 %1210
        %v1212 = vpack.c.bf16 %v1175, %v1173
        %v1213 = vpack.c.bf16 %v1179, %v1177
        %v1214 = vpack.c.bf16 %v1183, %v1181
        %v1215 = vpack.c.bf16 %v1187, %v1185
        %1216 = vrot.lane.b32.xlu0 %v935, 64
        %v1217 = vpop.permute.xlu0 %1216
        %v1220 = vsel %vm1139, %v1212, 0
        %1222 = vmatprep.subr.bf16.mxu0 0
        %1223 = vmatpush1.bf16.msra.mxu0 %v1217
        %1224 = vmatprep.subr.bf16.mxu0 0
        %1225 = vmatpush1.bf16.msra.mxu0 0
        %1226 = vmatprep.subr.bf16.mxu0 0
        %1227 = vmatpush1.bf16.msra.mxu0 0
        %1228 = vmatprep.subr.bf16.mxu0 0
        %1229 = vmatpush1.bf16.msra.mxu0 0
        %1230 = vmatprep.subr.bf16.mxu0 0
        %1231 = vmatpush1.bf16.msra.mxu0 0
        %1232 = vmatprep.subr.bf16.mxu0 0
        %1233 = vmatpush1.bf16.msra.mxu0 0
        %1234 = vmatprep.subr.bf16.mxu0 0
        %1235 = vmatpush1.bf16.msra.mxu0 0
        %1236 = vmatprep.subr.bf16.mxu0 0
        %1237 = vmatpush1.bf16.msra.mxu0 0
        %1238 = vmatprep.subr.bf16.mxu0 0
        %1239 = vmatpush1.bf16.msra.mxu0 0
        %1240 = vmatprep.subr.bf16.mxu0 0
        %1241 = vmatpush1.bf16.msra.mxu0 0
        %1242 = vmatprep.subr.bf16.mxu0 0
        %1243 = vmatpush1.bf16.msra.mxu0 0
        %1244 = vmatprep.subr.bf16.mxu0 0
        %1245 = vmatpush1.bf16.msra.mxu0 0
        %1246 = vmatprep.subr.bf16.mxu0 0
        %1247 = vmatpush1.bf16.msra.mxu0 0
        %1248 = vmatprep.subr.bf16.mxu0 0
        %1249 = vmatpush1.bf16.msra.mxu0 0
        %1250 = vmatprep.subr.bf16.mxu0 0
        %1251 = vmatpush1.bf16.msra.mxu0 0
        %1252 = vmatprep.subr.bf16.mxu0 0
        %1253 = vmatpush1.bf16.msra.mxu0 0
        %1254 = vmatprep.mubr.bf16.mxu0 0
        %1255 = vmatmul.mubr.bf16.gmra.mrb[0].mxu0 %v1220
        %v1256 = vpop.f32.mrb[0].mxu0
        %v1257 = vadd.f32 0.0, %v1256
        %v1258 = vpop.f32.mrb[0].mxu0
        %v1259 = vpop.f32.mrb[0].mxu0
        %v1260 = vadd.f32 0.0, %v1259
        %v1261 = vpop.f32.mrb[0].mxu0
        %1262 = vdwg.mxu0
        %1263 = vrot.lane.b32.xlu0 %v938, 64
        %v1264 = vpop.permute.xlu0 %1263
        %v1267 = vsel %vm1139, %v1213, 0
        %1269 = vmatprep.subr.bf16.mxu0 0
        %1270 = vmatpush1.bf16.msra.mxu0 %v1264
        %1271 = vmatprep.subr.bf16.mxu0 0
        %1272 = vmatpush1.bf16.msra.mxu0 0
        %1273 = vmatprep.subr.bf16.mxu0 0
        %1274 = vmatpush1.bf16.msra.mxu0 0
        %1275 = vmatprep.subr.bf16.mxu0 0
        %1276 = vmatpush1.bf16.msra.mxu0 0
        %1277 = vmatprep.subr.bf16.mxu0 0
        %1278 = vmatpush1.bf16.msra.mxu0 0
        %1279 = vmatprep.subr.bf16.mxu0 0
        %1280 = vmatpush1.bf16.msra.mxu0 0
        %1281 = vmatprep.subr.bf16.mxu0 0
        %1282 = vmatpush1.bf16.msra.mxu0 0
        %1283 = vmatprep.subr.bf16.mxu0 0
        %1284 = vmatpush1.bf16.msra.mxu0 0
        %1285 = vmatprep.subr.bf16.mxu0 0
        %1286 = vmatpush1.bf16.msra.mxu0 0
        %1287 = vmatprep.subr.bf16.mxu0 0
        %1288 = vmatpush1.bf16.msra.mxu0 0
        %1289 = vmatprep.subr.bf16.mxu0 0
        %1290 = vmatpush1.bf16.msra.mxu0 0
        %1291 = vmatprep.subr.bf16.mxu0 0
        %1292 = vmatpush1.bf16.msra.mxu0 0
        %1293 = vmatprep.subr.bf16.mxu0 0
        %1294 = vmatpush1.bf16.msra.mxu0 0
        %1295 = vmatprep.subr.bf16.mxu0 0
        %1296 = vmatpush1.bf16.msra.mxu0 0
        %1297 = vmatprep.subr.bf16.mxu0 0
        %1298 = vmatpush1.bf16.msra.mxu0 0
        %1299 = vmatprep.subr.bf16.mxu0 0
        %1300 = vmatpush1.bf16.msra.mxu0 0
        %1301 = vmatprep.mubr.bf16.mxu0 0
        %1302 = vmatmul.mubr.bf16.gmra.mrb[0].mxu0 %v1267
        %v1303 = vpop.f32.mrb[0].mxu0
        %v1304 = vadd.f32 0.0, %v1303
        %v1305 = vpop.f32.mrb[0].mxu0
        %v1306 = vpop.f32.mrb[0].mxu0
        %v1307 = vadd.f32 0.0, %v1306
        %v1308 = vpop.f32.mrb[0].mxu0
        %1309 = vdwg.mxu0
        %1310 = vrot.lane.b32.xlu0 %v940, 64
        %v1311 = vpop.permute.xlu0 %1310
        %v1314 = vsel %vm1139, %v1214, 0
        %1316 = vmatprep.subr.bf16.mxu0 0
        %1317 = vmatpush1.bf16.msra.mxu0 %v1311
        %1318 = vmatprep.subr.bf16.mxu0 0
        %1319 = vmatpush1.bf16.msra.mxu0 0
        %1320 = vmatprep.subr.bf16.mxu0 0
        %1321 = vmatpush1.bf16.msra.mxu0 0
        %1322 = vmatprep.subr.bf16.mxu0 0
        %1323 = vmatpush1.bf16.msra.mxu0 0
        %1324 = vmatprep.subr.bf16.mxu0 0
        %1325 = vmatpush1.bf16.msra.mxu0 0
        %1326 = vmatprep.subr.bf16.mxu0 0
        %1327 = vmatpush1.bf16.msra.mxu0 0
        %1328 = vmatprep.subr.bf16.mxu0 0
        %1329 = vmatpush1.bf16.msra.mxu0 0
        %1330 = vmatprep.subr.bf16.mxu0 0
        %1331 = vmatpush1.bf16.msra.mxu0 0
        %1332 = vmatprep.subr.bf16.mxu0 0
        %1333 = vmatpush1.bf16.msra.mxu0 0
        %1334 = vmatprep.subr.bf16.mxu0 0
        %1335 = vmatpush1.bf16.msra.mxu0 0
        %1336 = vmatprep.subr.bf16.mxu0 0
        %1337 = vmatpush1.bf16.msra.mxu0 0
        %1338 = vmatprep.subr.bf16.mxu0 0
        %1339 = vmatpush1.bf16.msra.mxu0 0
        %1340 = vmatprep.subr.bf16.mxu0 0
        %1341 = vmatpush1.bf16.msra.mxu0 0
        %1342 = vmatprep.subr.bf16.mxu0 0
        %1343 = vmatpush1.bf16.msra.mxu0 0
        %1344 = vmatprep.subr.bf16.mxu0 0
        %1345 = vmatpush1.bf16.msra.mxu0 0
        %1346 = vmatprep.subr.bf16.mxu0 0
        %1347 = vmatpush1.bf16.msra.mxu0 0
        %1348 = vmatprep.mubr.bf16.mxu0 0
        %1349 = vmatmul.mubr.bf16.gmra.mrb[0].mxu0 %v1314
        %v1350 = vpop.f32.mrb[0].mxu0
        %v1351 = vadd.f32 0.0, %v1350
        %v1352 = vpop.f32.mrb[0].mxu0
        %v1353 = vpop.f32.mrb[0].mxu0
        %v1354 = vadd.f32 0.0, %v1353
        %v1355 = vpop.f32.mrb[0].mxu0
        %1356 = vdwg.mxu0
        %1357 = vrot.lane.b32.xlu0 %v942, 64
        %v1358 = vpop.permute.xlu0 %1357
        %v1361 = vsel %vm1139, %v1215, 0
        %1363 = vmatprep.subr.bf16.mxu0 0
        %1364 = vmatpush1.bf16.msra.mxu0 %v1358
        %1365 = vmatprep.subr.bf16.mxu0 0
        %1366 = vmatpush1.bf16.msra.mxu0 0
        %1367 = vmatprep.subr.bf16.mxu0 0
        %1368 = vmatpush1.bf16.msra.mxu0 0
        %1369 = vmatprep.subr.bf16.mxu0 0
        %1370 = vmatpush1.bf16.msra.mxu0 0
        %1371 = vmatprep.subr.bf16.mxu0 0
        %1372 = vmatpush1.bf16.msra.mxu0 0
        %1373 = vmatprep.subr.bf16.mxu0 0
        %1374 = vmatpush1.bf16.msra.mxu0 0
        %1375 = vmatprep.subr.bf16.mxu0 0
        %1376 = vmatpush1.bf16.msra.mxu0 0
        %1377 = vmatprep.subr.bf16.mxu0 0
        %1378 = vmatpush1.bf16.msra.mxu0 0
        %1379 = vmatprep.subr.bf16.mxu0 0
        %1380 = vmatpush1.bf16.msra.mxu0 0
        %1381 = vmatprep.subr.bf16.mxu0 0
        %1382 = vmatpush1.bf16.msra.mxu0 0
        %1383 = vmatprep.subr.bf16.mxu0 0
        %1384 = vmatpush1.bf16.msra.mxu0 0
        %1385 = vmatprep.subr.bf16.mxu0 0
        %1386 = vmatpush1.bf16.msra.mxu0 0
        %1387 = vmatprep.subr.bf16.mxu0 0
        %1388 = vmatpush1.bf16.msra.mxu0 0
        %1389 = vmatprep.subr.bf16.mxu0 0
        %1390 = vmatpush1.bf16.msra.mxu0 0
        %1391 = vmatprep.subr.bf16.mxu0 0
        %1392 = vmatpush1.bf16.msra.mxu0 0
        %1393 = vmatprep.subr.bf16.mxu0 0
        %1394 = vmatpush1.bf16.msra.mxu0 0
        %1395 = vmatprep.mubr.bf16.mxu0 0
        %1396 = vmatmul.mubr.bf16.gmra.mrb[0].mxu0 %v1361
        %v1397 = vpop.f32.mrb[0].mxu0
        %v1398 = vadd.f32 0.0, %v1397
        %v1399 = vpop.f32.mrb[0].mxu0
        %v1400 = vpop.f32.mrb[0].mxu0
        %v1401 = vadd.f32 0.0, %v1400
        %v1402 = vpop.f32.mrb[0].mxu0
        %1403 = vdwg.mxu0
        %v1404 = vrcp.pop %v1190
        %v1405 = vrcp.pop %v1193
        %v1406 = vrcp.pop %v1196
        %v1407 = vrcp.pop %v1199
        %v1408 = vrcp.pop %v1202
        %v1409 = vrcp.pop %v1205
        %v1410 = vrcp.pop %v1208
        %v1411 = vrcp.pop %v1211
        %v1412 = vmul.f32 %v1257, %v1404
        %v1413 = vmul.f32 %v1260, %v1405
        %v1414 = vmul.f32 %v1304, %v1406
        %v1415 = vmul.f32 %v1307, %v1407
        %v1416 = vmul.f32 %v1351, %v1408
        %v1417 = vmul.f32 %v1354, %v1409
        %v1418 = vmul.f32 %v1398, %v1410
        %v1419 = vmul.f32 %v1401, %v1411
        %v1420 = vpack.c.bf16 %v1413, %v1412
        %v1421 = vpack.c.bf16 %v1415, %v1414
        %v1422 = vpack.c.bf16 %v1417, %v1416
        %v1423 = vpack.c.bf16 %v1419, %v1418
        %1425 = vrot.lane.b32.xlu0 %v1421, 8
        %v1426 = vpop.permute.xlu0 %1425
        %1428 = vrot.lane.b32.xlu0 %v1422, 16
        %v1429 = vpop.permute.xlu0 %1428
        %1431 = vrot.lane.b32.xlu0 %v1423, 24
        %v1432 = vpop.permute.xlu0 %1431
        %v1435 = vsel %vm945, %v1420, %v1426
        %v1437 = vsel %vm1139, %v1435, %v1429
        %vm1438 = vcmask 195584
        %v1440 = vsel %vm1438, %v1437, %v1432
        %v1441 = vld [vmem:[%s12] sm:$0xf]
        %v1442 = vld [vmem:[%s12 + $0x4] sm:$0xf]
        %v1443 = vld [vmem:[%s12 + $0x8] sm:$0xf]
        %v1444 = vld [vmem:[%s12 + $0xc] sm:$0xf]
        %v1449 = vunpack.c.l.b16 %v1441
        %v1450 = vunpack.c.l.b16 %v1442
        %v1451 = vunpack.c.l.b16 %v1443
        %v1452 = vunpack.c.l.b16 %v1444
        %v1453 = vpack.c.b16 %v1450, %v1449
        %v1454 = vpack.c.b16 %v1452, %v1451
        %v1457 = vsel %vm656, %v1440, 0
        %1459 = vmatprep.subr.bf16.mxu0 0
        %1460 = vmatpush1.bf16.msra.mxu0 %v1453
        %1461 = vmatprep.subr.bf16.mxu0 0
        %1462 = vmatpush1.bf16.msra.mxu0 %v1454
        %1463 = vmatprep.subr.bf16.mxu0 0
        %1464 = vmatpush1.bf16.msra.mxu0 0
        %1465 = vmatprep.subr.bf16.mxu0 0
        %1466 = vmatpush1.bf16.msra.mxu0 0
        %1467 = vmatprep.subr.bf16.mxu0 0
        %1468 = vmatpush1.bf16.msra.mxu0 0
        %1469 = vmatprep.subr.bf16.mxu0 0
        %1470 = vmatpush1.bf16.msra.mxu0 0
        %1471 = vmatprep.subr.bf16.mxu0 0
        %1472 = vmatpush1.bf16.msra.mxu0 0
        %1473 = vmatprep.subr.bf16.mxu0 0
        %1474 = vmatpush1.bf16.msra.mxu0 0
        %1475 = vmatprep.subr.bf16.mxu0 0
        %1476 = vmatpush1.bf16.msra.mxu0 0
        %1477 = vmatprep.subr.bf16.mxu0 0
        %1478 = vmatpush1.bf16.msra.mxu0 0
        %1479 = vmatprep.subr.bf16.mxu0 0
        %1480 = vmatpush1.bf16.msra.mxu0 0
        %1481 = vmatprep.subr.bf16.mxu0 0
        %1482 = vmatpush1.bf16.msra.mxu0 0
        %1483 = vmatprep.subr.bf16.mxu0 0
        %1484 = vmatpush1.bf16.msra.mxu0 0
        %1485 = vmatprep.subr.bf16.mxu0 0
        %1486 = vmatpush1.bf16.msra.mxu0 0
        %1487 = vmatprep.subr.bf16.mxu0 0
        %1488 = vmatpush1.bf16.msra.mxu0 0
        %1489 = vmatprep.subr.bf16.mxu0 0
        %1490 = vmatpush1.bf16.msra.mxu0 0
        %1491 = vmatprep.mubr.bf16.mxu0 0
        %1492 = vmatmul.mubr.bf16.gmra.mrb[0].mxu0 %v1457
        %v1493 = vpop.f32.mrb[0].mxu0
        %v1494 = vadd.f32 0.0, %v1493
        %v1495 = vpop.f32.mrb[0].mxu0
        %v1496 = vpop.f32.mrb[0].mxu0
        %v1497 = vpop.f32.mrb[0].mxu0
        %1498 = vdwg.mxu0
        %v1499 = vld [vmem:[%s13] sm:$0xf]
        %v1500 = vld [vmem:[%s13 + $0x4] sm:$0xf]
        %v1501 = vld [vmem:[%s13 + $0x8] sm:$0xf]
        %v1502 = vld [vmem:[%s13 + $0xc] sm:$0xf]
        %v1504 = vrot.slane %v1440, 4
        %v1509 = vunpack.c.l.b16 %v1499
        %v1510 = vunpack.c.l.b16 %v1500
        %v1511 = vunpack.c.l.b16 %v1501
        %v1512 = vunpack.c.l.b16 %v1502
        %v1513 = vpack.c.b16 %v1510, %v1509
        %v1514 = vpack.c.b16 %v1512, %v1511
        %v1518 = vsel %vm656, %v1504, 0
        %1520 = vmatprep.subr.bf16.mxu0 0
        %1521 = vmatpush1.bf16.msra.mxu0 %v1513
        %1522 = vmatprep.subr.bf16.mxu0 0
        %1523 = vmatpush1.bf16.msra.mxu0 %v1514
        %1524 = vmatprep.subr.bf16.mxu0 0
        %1525 = vmatpush1.bf16.msra.mxu0 0
        %1526 = vmatprep.subr.bf16.mxu0 0
        %1527 = vmatpush1.bf16.msra.mxu0 0
        %1528 = vmatprep.subr.bf16.mxu0 0
        %1529 = vmatpush1.bf16.msra.mxu0 0
        %1530 = vmatprep.subr.bf16.mxu0 0
        %1531 = vmatpush1.bf16.msra.mxu0 0
        %1532 = vmatprep.subr.bf16.mxu0 0
        %1533 = vmatpush1.bf16.msra.mxu0 0
        %1534 = vmatprep.subr.bf16.mxu0 0
        %1535 = vmatpush1.bf16.msra.mxu0 0
        %1536 = vmatprep.subr.bf16.mxu0 0
        %1537 = vmatpush1.bf16.msra.mxu0 0
        %1538 = vmatprep.subr.bf16.mxu0 0
        %1539 = vmatpush1.bf16.msra.mxu0 0
        %1540 = vmatprep.subr.bf16.mxu0 0
        %1541 = vmatpush1.bf16.msra.mxu0 0
        %1542 = vmatprep.subr.bf16.mxu0 0
        %1543 = vmatpush1.bf16.msra.mxu0 0
        %1544 = vmatprep.subr.bf16.mxu0 0
        %1545 = vmatpush1.bf16.msra.mxu0 0
        %1546 = vmatprep.subr.bf16.mxu0 0
        %1547 = vmatpush1.bf16.msra.mxu0 0
        %1548 = vmatprep.subr.bf16.mxu0 0
        %1549 = vmatpush1.bf16.msra.mxu0 0
        %1550 = vmatprep.subr.bf16.mxu0 0
        %1551 = vmatpush1.bf16.msra.mxu0 0
        %1552 = vmatprep.mubr.bf16.mxu0 0
        %1553 = vmatmul.mubr.bf16.gmra.mrb[0].mxu0 %v1518
        %v1554 = vpop.f32.mrb[0].mxu0
        %v1555 = vadd.f32 0.0, %v1554
        %v1556 = vpop.f32.mrb[0].mxu0
        %v1557 = vpop.f32.mrb[0].mxu0
        %v1558 = vpop.f32.mrb[0].mxu0
        %1559 = vdwg.mxu0
        %1560 = vst [vmem:[%s629] sm:$0xff] %v1494
        %1561 = vst [vmem:[%s636] sm:$0xff] %v1555
        %s1562 = sand.u32 %s354, 1
        %s1563 = scalar_lea.sflag [#allocation4], %s1562
        %s1564 = sand.u32 %s354, 1
        %s1565 = smul.addr %s1564, 8
        %s1566 = scalar_lea.vmem [#allocation16], %s1565
        %s1567 = sand.u32 %s380, 1
        %s1568 = scalar_lea.sflag [#allocation18], %s1567
        %s1569 = sand.u32 %s380, 1
        %s1570 = smul.addr %s1569, 8
        %s1571 = scalar_lea.vmem [#allocation17], %s1570
        // Predicated region
        $region109: #{tpu_custom_call.1} parent=75 // pred_check
          %p1572 = pneg %p364
        $region110: #{tpu_custom_call.1} parent=75 // pred_check_branch
          %1574 = sbr.rel (%p1572) target = $region112
        $region111: #{tpu_custom_call.1} parent=75 // pred_region
          %s1576 = ssub.s32 128, 128
          %1577 = vsyncadd %s1563, %s1576
          %s1578 = smul.addr %s42, 128
          %s1579 = scalar_lea.hbm %s14, %s1578
          %s1581 = sshll.u32 %s1566, 4
          %s1582 = int_to_ptr.vmem [resolvable:$true] %s1581
          %1584 = dma.vmem_to_hbm [thread:$0]  %s1582, 128, %s1579, %s1563
        $region112: #{tpu_custom_call.1} parent=75 // pred_fallthru
          _
        // Predicated region
        $region113: #{tpu_custom_call.1} parent=75 // pred_check
          %p1585 = pneg %p390
        $region114: #{tpu_custom_call.1} parent=75 // pred_check_branch
          %1587 = sbr.rel (%p1585) target = $region116
        $region115: #{tpu_custom_call.1} parent=75 // pred_region
          %s1589 = ssub.s32 128, 128
          %1590 = vsyncadd %s1568, %s1589
          %s1591 = smul.addr %s42, 128
          %s1592 = scalar_lea.hbm %s15, %s1591
          %s1594 = sshll.u32 %s1571, 4
          %s1595 = int_to_ptr.vmem [resolvable:$true] %s1594
          %1597 = dma.vmem_to_hbm [thread:$0]  %s1595, 128, %s1592, %s1568
        $region116: #{tpu_custom_call.1} parent=75 // pred_fallthru
          _
      $region76: #{tpu_custom_call.1} parent=5 // pred_fallthru
        _
      %p1598 = scmp.le.s32.totalorder 2, %s37
      // Predicated region
      $region117: #{tpu_custom_call.1} parent=5 // pred_check
        %p1599 = pneg %p1598
      $region118: #{tpu_custom_call.1} parent=5 // pred_check_branch
        %1601 = sbr.rel (%p1599) target = $region120
      $region119: #{tpu_custom_call.1} parent=5 // pred_region
        %s1602 = ssub.s32 %s37, 2
        // Predicated region
        $region121: #{tpu_custom_call.1} parent=119 // pred_check
          %p1603 = pneg %p370
        $region122: #{tpu_custom_call.1} parent=119 // pred_check_branch
          %1605 = sbr.rel (%p1603) target = $region124
        $region123: #{tpu_custom_call.1} parent=119 // pred_region
          %s1606 = sand.u32 %s355, 1
          %s1607 = scalar_lea.sflag [#allocation4], %s1606
          %s1608 = sand.u32 %s355, 1
          %s1609 = smul.addr %s1608, 8
          %s1610 = scalar_lea.vmem [#allocation16], %s1609
          %1611 = dma.done %s1607, 128
        $region124: #{tpu_custom_call.1} parent=119 // pred_fallthru
          _
        // Predicated region
        $region125: #{tpu_custom_call.1} parent=119 // pred_check
          %p1612 = pneg %p396
        $region126: #{tpu_custom_call.1} parent=119 // pred_check_branch
          %1614 = sbr.rel (%p1612) target = $region128
        $region127: #{tpu_custom_call.1} parent=119 // pred_region
          %s1615 = sand.u32 %s381, 1
          %s1616 = scalar_lea.sflag [#allocation18], %s1615
          %s1617 = sand.u32 %s381, 1
          %s1618 = smul.addr %s1617, 8
          %s1619 = scalar_lea.vmem [#allocation17], %s1618
          %1620 = dma.done %s1616, 128
        $region128: #{tpu_custom_call.1} parent=119 // pred_fallthru
          _
      $region120: #{tpu_custom_call.1} parent=5 // pred_fallthru
        _
    $region6: #{tpu_custom_call.1} parent=1 // loop_footer
      %s41 = sadd.s32 1, %s37
    $region7: #{tpu_custom_call.1} parent=1 // loop_footer_branch
      %36 = sbr.rel target = $region3
    $region8: #{tpu_custom_call.1} parent=1 // loop_exit
      _
    %1621 = vsyncpa [#allocation3], 1
    %s1622 = scalar_lea.sflag [#allocation3], 1
    %1623 = vsyncpa %s1622, 1
    %1624 = vsyncpa [#allocation6], 1
    %s1625 = scalar_lea.sflag [#allocation6], 1
    %1626 = vsyncpa %s1625, 1
    %1627 = vsyncpa [#allocation9], 1
    %1628 = vsyncpa [#allocation12], 1
    %1629 = vsyncpa [#allocation15], 1
    %1630 = vsyncpa [#allocation4], 1
    %s1631 = scalar_lea.sflag [#allocation4], 1
    %1632 = vsyncpa %s1631, 1
    %1633 = vsyncpa [#allocation18], 1
    %s1634 = scalar_lea.sflag [#allocation18], 1
    %1635 = vsyncpa %s1634, 1

</llo_original>
